<compile_context>
chip_gen: v6e
topology: v6e:2x2x1
jax: 0.10.0
libtpu: 0.0.40
codegen_flags: <defaults>
</compile_context>

<pallas_src>
import functools

import jax
import jax.numpy as jnp
from jax.experimental import pallas as pl
from jax.experimental.pallas import tpu as pltpu


def _fused_convblock_pair_kernel(x_ref, w1_ref, s1_ref, w2_ref, s2_ref, o_ref,
                                 patches, mid, *, H, W, C1, O1, O2, NB):
    """Two chained ConvBlocks (replicate-pad 3x3 conv + BN(eval) + ReLU), fused.

    x_ref:   (NB, C1, H*W)  f32 input, channel-first, spatial flattened on lanes
    w1_ref:  (O1, 9*C1)     bf16 conv2 weights, BN1 scale folded, tap-major cols
    s1_ref:  (O1, 1)        f32 folded BN1 shift
    w2_ref:  (O2, 9*O1)     bf16 conv3 weights, BN2 scale folded, tap-major cols
    s2_ref:  (O2, 1)        f32 folded BN2 shift
    o_ref:   (NB, O2, H*W)  f32 output
    patches: VMEM (9*max(C1,O1), NB*H*W) bf16 scratch (im2col taps, streamed)
    mid:     VMEM (O1, NB*H*W) f32 scratch (intermediate activation, VMEM-only)
    """
    HW = H * W

    # Lane-position masks for in-kernel replicate padding. Built once and
    # reused for every batch element and both conv stages.
    lane = jax.lax.broadcasted_iota(jnp.int32, (1, HW), 1)
    col = lane % W
    first_row = lane < W
    last_row = lane >= (H - 1) * W
    first_col = col == 0
    last_col = col == (W - 1)

    def build_taps(img, lane_off):
        """Stream the 9 replicate-padded 3x3 taps of `img` (C, HW) into the
        bf16 `patches` scratch at column offset `lane_off` (tap-major rows)."""
        C = img.shape[0]
        # ky = 0,1,2  <->  source row h-1, h, h+1 (clamped at edges).
        for ky, (dy, rmask) in enumerate(((W, first_row), (0, None),
                                          (-W, last_row))):
            if rmask is None:
                xr = img
            else:
                xr = jnp.where(rmask, img, pltpu.roll(img, dy % HW, axis=1))
            # kx = 0,1,2  <->  source col w-1, w, w+1 (clamped at edges).
            for kx, (dx, cmask) in enumerate(((1, first_col), (0, None),
                                              (-1, last_col))):
                if cmask is None:
                    tap = xr
                else:
                    tap = jnp.where(cmask, xr, pltpu.roll(xr, dx % HW, axis=1))
                t = 3 * ky + kx
                patches[t * C:(t + 1) * C, lane_off:lane_off + HW] = (
                    tap.astype(jnp.bfloat16))

    # ---- stage 1: ConvBlock(C1 -> O1)  (LFFCNN conv2) ----------------------
    for b in range(NB):
        build_taps(x_ref[b], b * HW)
    acc1 = jnp.dot(w1_ref[...], patches[0:9 * C1, :],
                   preferred_element_type=jnp.float32)          # (O1, NB*HW)
    mid[...] = jnp.maximum(acc1 + s1_ref[...], 0.0)             # BN shift + ReLU

    # ---- stage 2: ConvBlock(O1 -> O2)  (LFFCNN conv3), reads VMEM mid ------
    for b in range(NB):
        build_taps(mid[:, b * HW:(b + 1) * HW], b * HW)
    acc2 = jnp.dot(w2_ref[...], patches[0:9 * O1, :],
                   preferred_element_type=jnp.float32)          # (O2, NB*HW)
    y2 = jnp.maximum(acc2 + s2_ref[...], 0.0)
    for b in range(NB):
        o_ref[b] = y2[:, b * HW:(b + 1) * HW].astype(o_ref.dtype)


def _fold_bn_into_conv(weight_oihw, gamma, beta, running_mean, running_var,
                       eps):
    """Fold eval-mode BN into the conv weights; return (bf16 matrix, f32 shift)."""
    O, C = weight_oihw.shape[0], weight_oihw.shape[1]
    scale = gamma / jnp.sqrt(running_var + eps)                        # (O,)
    shift = (beta - running_mean * scale).reshape(O, 1).astype(jnp.float32)
    w = weight_oihw.astype(jnp.float32) * scale[:, None, None, None]
    # (O, C, ky, kx) -> (O, ky, kx, C) -> (O, 9*C): column = (3*ky + kx)*C + c.
    w_mat = jnp.transpose(w, (0, 2, 3, 1)).reshape(O, 9 * C)
    return w_mat.astype(jnp.bfloat16), shift


def fused_conv_block_pair_forward(x_nchw, params1, params2, eps=1e-5, nb=None):
    """Fused forward of two chained ConvBlocks.

    x_nchw: (N, C1, H, W) f32.  params* = (weight_oihw, gamma, beta, mean, var).
    Returns (N, O2, H, W) f32.
    """
    N, C1, H, W = x_nchw.shape
    O1 = params1[0].shape[0]
    O2 = params2[0].shape[0]
    HW = H * W
    assert params1[0].shape[1] == C1 and params2[0].shape[1] == O1

    if nb is None:
        # Batch-block to amortize per-grid-step overhead (single-TC v5e/v6e)
        # while keeping >= 2 grid steps so v7x's two TensorCores stay busy.
        nb = N // 2 if (N % 2 == 0 and N >= 2) else 1
    assert N % nb == 0

    w1_mat, shift1 = _fold_bn_into_conv(params1[0], *params1[1:], eps)
    w2_mat, shift2 = _fold_bn_into_conv(params2[0], *params2[1:], eps)

    x_flat = x_nchw.reshape(N, C1, HW)     # free reshape, no transpose, no pad

    kernel = functools.partial(_fused_convblock_pair_kernel,
                               H=H, W=W, C1=C1, O1=O1, O2=O2, NB=nb)

    out_flat = pl.pallas_call(
        kernel,
        out_shape=jax.ShapeDtypeStruct((N, O2, HW), jnp.float32),
        grid=(N // nb,),
        in_specs=[
            pl.BlockSpec((nb, C1, HW), lambda n: (n, 0, 0)),
            pl.BlockSpec((O1, 9 * C1), lambda n: (0, 0)),
            pl.BlockSpec((O1, 1), lambda n: (0, 0)),
            pl.BlockSpec((O2, 9 * O1), lambda n: (0, 0)),
            pl.BlockSpec((O2, 1), lambda n: (0, 0)),
        ],
        out_specs=pl.BlockSpec((nb, O2, HW), lambda n: (n, 0, 0)),
        scratch_shapes=[
            pltpu.VMEM((9 * max(C1, O1), nb * HW), jnp.bfloat16),  # im2col taps
            pltpu.VMEM((O1, nb * HW), jnp.float32),                # intermediate
        ],
        compiler_params=pltpu.CompilerParams(
            dimension_semantics=("parallel",)),
    )(x_flat, w1_mat, shift1, w2_mat, shift2)

    return out_flat.reshape(N, O2, H, W)


def _reference_convblock(x_nchw, weight_oihw, gamma, beta, running_mean,
                         running_var, eps=1e-5):
    """Pure-JAX f32 reference for one ConvBlock (replicate pad, eval BN, ReLU)."""
    x_pad = jnp.pad(x_nchw, ((0, 0), (0, 0), (1, 1), (1, 1)), mode="edge")
    y = jax.lax.conv_general_dilated(
        x_pad, weight_oihw, window_strides=(1, 1), padding="VALID",
        dimension_numbers=("NCHW", "OIHW", "NCHW"),
        precision=jax.lax.Precision.HIGHEST)
    scale = (gamma / jnp.sqrt(running_var + eps)).reshape(1, -1, 1, 1)
    shift = (beta - running_mean * gamma / jnp.sqrt(running_var + eps)
             ).reshape(1, -1, 1, 1)
    return jnp.maximum(y * scale + shift, 0.0)


if __name__ == "__main__":
    key = jax.random.PRNGKey(0)
    ks = jax.random.split(key, 12)

    # Shapes implied by LFFCNN: conv2 = ConvBlock(64, 64), conv3 = ConvBlock(64, 32)
    N, C1, H, W = 2, 64, 16, 16
    O1, O2 = 64, 32

    x = jax.random.normal(ks[0], (N, C1, H, W), jnp.float32)

    def make_params(kset, cin, cout):
        # Matches LFFCNN init: weight ~ N(0, sqrt(2 / (k*k*out_channels)))
        n = 3 * 3 * cout
        w = jax.random.normal(kset[0], (cout, cin, 3, 3), jnp.float32) \
            * jnp.sqrt(2.0 / n)
        gamma = jax.random.uniform(kset[1], (cout,), jnp.float32, 0.5, 1.5)
        beta = jax.random.normal(kset[2], (cout,), jnp.float32) * 0.1
        mean = jax.random.normal(kset[3], (cout,), jnp.float32) * 0.1
        var = jax.random.uniform(kset[4], (cout,), jnp.float32, 0.5, 1.5)
        return w, gamma, beta, mean, var

    params1 = make_params(ks[1:6], C1, O1)    # ConvBlock(64, 64)
    params2 = make_params(ks[6:11], O1, O2)   # ConvBlock(64, 32)

    out = fused_conv_block_pair_forward(x, params1, params2)
    out = jax.block_until_ready(out)

    ref = _reference_convblock(_reference_convblock(x, *params1), *params2)

    assert out.shape == (N, O2, H, W)
    max_err = jnp.max(jnp.abs(out - ref))
    # bf16 MXU operands with f32 accumulation vs. f32 HIGHEST reference:
    # expected max abs error ~1e-2 on outputs of magnitude O(1-8).
    assert jnp.allclose(out, ref, atol=1e-1, rtol=5e-2), \
        f"fused conv2->conv3 max abs err {max_err}"

    print("KERNEL_OK")
</pallas_src>

<mosaic_0001>
module attributes {stable_mosaic.version = 11 : i64} {
  func.func @_fused_convblock_pair_kernel(%arg0: i32, %arg1: memref<1x64x256xf32, #tpu.memory_space<vmem>>, %arg2: memref<64x576xbf16, #tpu.memory_space<vmem>>, %arg3: memref<64x1xf32, #tpu.memory_space<vmem>>, %arg4: memref<32x576xbf16, #tpu.memory_space<vmem>>, %arg5: memref<32x1xf32, #tpu.memory_space<vmem>>, %arg6: memref<1x32x256xf32, #tpu.memory_space<vmem>>, %arg7: memref<576x256xbf16, #tpu.memory_space<vmem>>, %arg8: memref<64x256xf32, #tpu.memory_space<vmem>>) attributes {dimension_semantics = [#tpu.dimension_semantics<parallel>], iteration_bounds = array<i64: 2>, scalar_prefetch = 0 : i64, scratch_operands = 2 : i64, tpu.core_type = #tpu.core_type<tc>, window_params = [{transform_indices = @transform_0, window_bounds = array<i64: 1, 64, 256>}, {pipeline_mode = #tpu.pipeline_mode<synchronous>, transform_indices = @transform_1, window_bounds = array<i64: 64, 576>}, {pipeline_mode = #tpu.pipeline_mode<synchronous>, transform_indices = @transform_2, window_bounds = array<i64: 64, 1>}, {pipeline_mode = #tpu.pipeline_mode<synchronous>, transform_indices = @transform_3, window_bounds = array<i64: 32, 576>}, {pipeline_mode = #tpu.pipeline_mode<synchronous>, transform_indices = @transform_4, window_bounds = array<i64: 32, 1>}, {transform_indices = @transform_5, window_bounds = array<i64: 1, 32, 256>}]} {
    %0 = tpu.iota {dimensions = array<i32: 1>} : vector<1x256xi32>
    %c16_i32 = arith.constant 16 : i32
    %c0_i32 = arith.constant 0 : i32
    %1 = arith.cmpi eq, %c16_i32, %c0_i32 : i32
    %c1_i32 = arith.constant 1 : i32
    %2 = arith.select %1, %c1_i32, %c16_i32 : i32
    %3 = vector.broadcast %2 : i32 to vector<1x256xi32>
    %4 = arith.remsi %0, %3 : vector<1x256xi32>
    %c0_i32_0 = arith.constant 0 : i32
    %5 = vector.broadcast %c0_i32_0 : i32 to vector<1x256xi32>
    %6 = arith.cmpi ne, %4, %5 : vector<1x256xi32>
    %c0_i32_1 = arith.constant 0 : i32
    %7 = vector.broadcast %c0_i32_1 : i32 to vector<1x256xi32>
    %8 = arith.cmpi slt, %4, %7 : vector<1x256xi32>
    %c0_i32_2 = arith.constant 0 : i32
    %9 = arith.cmpi slt, %2, %c0_i32_2 : i32
    %10 = vector.broadcast %9 : i1 to vector<1x256xi1>
    %11 = vector.broadcast %10 : vector<1x256xi1> to vector<1x256xi1>
    %12 = arith.xori %8, %11 : vector<1x256xi1>
    %13 = arith.andi %12, %6 : vector<1x256xi1>
    %14 = vector.broadcast %2 : i32 to vector<1x256xi32>
    %15 = arith.addi %4, %14 : vector<1x256xi32>
    %16 = arith.select %13, %15, %4 : vector<1x256xi1>, vector<1x256xi32>
    %c16_i32_3 = arith.constant 16 : i32
    %17 = vector.broadcast %c16_i32_3 : i32 to vector<1x256xi32>
    %18 = arith.cmpi slt, %0, %17 : vector<1x256xi32>
    %c240_i32 = arith.constant 240 : i32
    %19 = vector.broadcast %c240_i32 : i32 to vector<1x256xi32>
    %20 = arith.cmpi sge, %0, %19 : vector<1x256xi32>
    %c0_i32_4 = arith.constant 0 : i32
    %21 = vector.broadcast %c0_i32_4 : i32 to vector<1x256xi32>
    %22 = arith.cmpi eq, %16, %21 : vector<1x256xi32>
    %c15_i32 = arith.constant 15 : i32
    %23 = vector.broadcast %c15_i32 : i32 to vector<1x256xi32>
    %24 = arith.cmpi eq, %16, %23 : vector<1x256xi32>
    %c0 = arith.constant 0 : index
    %c0_5 = arith.constant 0 : index
    %c0_6 = arith.constant 0 : index
    %25 = vector.load %arg1[%c0, %c0_5, %c0_6] : memref<1x64x256xf32, #tpu.memory_space<vmem>>, vector<1x64x256xf32>
    %26 = vector.shape_cast %25 : vector<1x64x256xf32> to vector<64x256xf32>
    %c16_i32_7 = arith.constant 16 : i32
    %27 = tpu.dynamic_rotate %26 by %c16_i32_7 dim 1 : vector<64x256xf32>, i32 -> vector<64x256xf32>
    %28 = vector.shape_cast %18 : vector<1x256xi1> to vector<1x256xi1>
    %29 = vector.broadcast %28 : vector<1x256xi1> to vector<64x256xi1>
    %30 = arith.select %29, %26, %27 : vector<64x256xi1>, vector<64x256xf32>
    %c1_i32_8 = arith.constant 1 : i32
    %31 = tpu.dynamic_rotate %30 by %c1_i32_8 dim 1 : vector<64x256xf32>, i32 -> vector<64x256xf32>
    %32 = vector.shape_cast %22 : vector<1x256xi1> to vector<1x256xi1>
    %33 = vector.broadcast %32 : vector<1x256xi1> to vector<64x256xi1>
    %34 = arith.select %33, %30, %31 : vector<64x256xi1>, vector<64x256xf32>
    %35 = arith.truncf %34 : vector<64x256xf32> to vector<64x256xbf16>
    %c0_9 = arith.constant 0 : index
    %c0_10 = arith.constant 0 : index
    %36 = vector.load %arg7[%c0_9, %c0_10] : memref<576x256xbf16, #tpu.memory_space<vmem>>, vector<64x256xbf16>
    tpu.vector_store %arg7[%c0_9, %c0_10], %35 {strides = array<i32>} : memref<576x256xbf16, #tpu.memory_space<vmem>>, vector<64x256xbf16>,
    %37 = arith.truncf %30 : vector<64x256xf32> to vector<64x256xbf16>
    %c64 = arith.constant 64 : index
    %c0_11 = arith.constant 0 : index
    %38 = vector.load %arg7[%c64, %c0_11] : memref<576x256xbf16, #tpu.memory_space<vmem>>, vector<64x256xbf16>
    tpu.vector_store %arg7[%c64, %c0_11], %37 {strides = array<i32>} : memref<576x256xbf16, #tpu.memory_space<vmem>>, vector<64x256xbf16>,
    %c255_i32 = arith.constant 255 : i32
    %39 = tpu.dynamic_rotate %30 by %c255_i32 dim 1 : vector<64x256xf32>, i32 -> vector<64x256xf32>
    %40 = vector.shape_cast %24 : vector<1x256xi1> to vector<1x256xi1>
    %41 = vector.broadcast %40 : vector<1x256xi1> to vector<64x256xi1>
    %42 = arith.select %41, %30, %39 : vector<64x256xi1>, vector<64x256xf32>
    %43 = arith.truncf %42 : vector<64x256xf32> to vector<64x256xbf16>
    %c128 = arith.constant 128 : index
    %c0_12 = arith.constant 0 : index
    %44 = vector.load %arg7[%c128, %c0_12] : memref<576x256xbf16, #tpu.memory_space<vmem>>, vector<64x256xbf16>
    tpu.vector_store %arg7[%c128, %c0_12], %43 {strides = array<i32>} : memref<576x256xbf16, #tpu.memory_space<vmem>>, vector<64x256xbf16>,
    %c1_i32_13 = arith.constant 1 : i32
    %45 = tpu.dynamic_rotate %26 by %c1_i32_13 dim 1 : vector<64x256xf32>, i32 -> vector<64x256xf32>
    %46 = vector.shape_cast %22 : vector<1x256xi1> to vector<1x256xi1>
    %47 = vector.broadcast %46 : vector<1x256xi1> to vector<64x256xi1>
    %48 = arith.select %47, %26, %45 : vector<64x256xi1>, vector<64x256xf32>
    %49 = arith.truncf %48 : vector<64x256xf32> to vector<64x256xbf16>
    %c192 = arith.constant 192 : index
    %c0_14 = arith.constant 0 : index
    %50 = vector.load %arg7[%c192, %c0_14] : memref<576x256xbf16, #tpu.memory_space<vmem>>, vector<64x256xbf16>
    tpu.vector_store %arg7[%c192, %c0_14], %49 {strides = array<i32>} : memref<576x256xbf16, #tpu.memory_space<vmem>>, vector<64x256xbf16>,
    %51 = arith.truncf %26 : vector<64x256xf32> to vector<64x256xbf16>
    %c256 = arith.constant 256 : index
    %c0_15 = arith.constant 0 : index
    %52 = vector.load %arg7[%c256, %c0_15] : memref<576x256xbf16, #tpu.memory_space<vmem>>, vector<64x256xbf16>
    tpu.vector_store %arg7[%c256, %c0_15], %51 {strides = array<i32>} : memref<576x256xbf16, #tpu.memory_space<vmem>>, vector<64x256xbf16>,
    %c255_i32_16 = arith.constant 255 : i32
    %53 = tpu.dynamic_rotate %26 by %c255_i32_16 dim 1 : vector<64x256xf32>, i32 -> vector<64x256xf32>
    %54 = vector.shape_cast %24 : vector<1x256xi1> to vector<1x256xi1>
    %55 = vector.broadcast %54 : vector<1x256xi1> to vector<64x256xi1>
    %56 = arith.select %55, %26, %53 : vector<64x256xi1>, vector<64x256xf32>
    %57 = arith.truncf %56 : vector<64x256xf32> to vector<64x256xbf16>
    %c320 = arith.constant 320 : index
    %c0_17 = arith.constant 0 : index
    %58 = vector.load %arg7[%c320, %c0_17] : memref<576x256xbf16, #tpu.memory_space<vmem>>, vector<64x256xbf16>
    tpu.vector_store %arg7[%c320, %c0_17], %57 {strides = array<i32>} : memref<576x256xbf16, #tpu.memory_space<vmem>>, vector<64x256xbf16>,
    %c240_i32_18 = arith.constant 240 : i32
    %59 = tpu.dynamic_rotate %26 by %c240_i32_18 dim 1 : vector<64x256xf32>, i32 -> vector<64x256xf32>
    %60 = vector.shape_cast %20 : vector<1x256xi1> to vector<1x256xi1>
    %61 = vector.broadcast %60 : vector<1x256xi1> to vector<64x256xi1>
    %62 = arith.select %61, %26, %59 : vector<64x256xi1>, vector<64x256xf32>
    %c1_i32_19 = arith.constant 1 : i32
    %63 = tpu.dynamic_rotate %62 by %c1_i32_19 dim 1 : vector<64x256xf32>, i32 -> vector<64x256xf32>
    %64 = vector.shape_cast %22 : vector<1x256xi1> to vector<1x256xi1>
    %65 = vector.broadcast %64 : vector<1x256xi1> to vector<64x256xi1>
    %66 = arith.select %65, %62, %63 : vector<64x256xi1>, vector<64x256xf32>
    %67 = arith.truncf %66 : vector<64x256xf32> to vector<64x256xbf16>
    %c384 = arith.constant 384 : index
    %c0_20 = arith.constant 0 : index
    %68 = vector.load %arg7[%c384, %c0_20] : memref<576x256xbf16, #tpu.memory_space<vmem>>, vector<64x256xbf16>
    tpu.vector_store %arg7[%c384, %c0_20], %67 {strides = array<i32>} : memref<576x256xbf16, #tpu.memory_space<vmem>>, vector<64x256xbf16>,
    %69 = arith.truncf %62 : vector<64x256xf32> to vector<64x256xbf16>
    %c448 = arith.constant 448 : index
    %c0_21 = arith.constant 0 : index
    %70 = vector.load %arg7[%c448, %c0_21] : memref<576x256xbf16, #tpu.memory_space<vmem>>, vector<64x256xbf16>
    tpu.vector_store %arg7[%c448, %c0_21], %69 {strides = array<i32>} : memref<576x256xbf16, #tpu.memory_space<vmem>>, vector<64x256xbf16>,
    %c255_i32_22 = arith.constant 255 : i32
    %71 = tpu.dynamic_rotate %62 by %c255_i32_22 dim 1 : vector<64x256xf32>, i32 -> vector<64x256xf32>
    %72 = vector.shape_cast %24 : vector<1x256xi1> to vector<1x256xi1>
    %73 = vector.broadcast %72 : vector<1x256xi1> to vector<64x256xi1>
    %74 = arith.select %73, %62, %71 : vector<64x256xi1>, vector<64x256xf32>
    %75 = arith.truncf %74 : vector<64x256xf32> to vector<64x256xbf16>
    %c512 = arith.constant 512 : index
    %c0_23 = arith.constant 0 : index
    %76 = vector.load %arg7[%c512, %c0_23] : memref<576x256xbf16, #tpu.memory_space<vmem>>, vector<64x256xbf16>
    tpu.vector_store %arg7[%c512, %c0_23], %75 {strides = array<i32>} : memref<576x256xbf16, #tpu.memory_space<vmem>>, vector<64x256xbf16>,
    %c0_24 = arith.constant 0 : index
    %c0_25 = arith.constant 0 : index
    %77 = vector.load %arg2[%c0_24, %c0_25] : memref<64x576xbf16, #tpu.memory_space<vmem>>, vector<64x576xbf16>
    %c0_26 = arith.constant 0 : index
    %c0_27 = arith.constant 0 : index
    %78 = vector.load %arg7[%c0_26, %c0_27] : memref<576x256xbf16, #tpu.memory_space<vmem>>, vector<576x256xbf16>
    %cst = arith.constant dense<0.000000e+00> : vector<64x256xf32>
    %79 = tpu.matmul %77, %78, %cst {dimension_numbers = #tpu.dot_dimension_numbers<[1], [0], [0], [1], [0, 0, 1, 1], [], []>} : vector<64x576xbf16>, vector<576x256xbf16>, vector<64x256xf32> -> vector<64x256xf32>
    %c0_28 = arith.constant 0 : index
    %c0_29 = arith.constant 0 : index
    %80 = vector.load %arg3[%c0_28, %c0_29] : memref<64x1xf32, #tpu.memory_space<vmem>>, vector<64x1xf32>
    %81 = vector.broadcast %80 : vector<64x1xf32> to vector<64x256xf32>
    %82 = arith.addf %79, %81 : vector<64x256xf32>
    %cst_30 = arith.constant 0.000000e+00 : f32
    %83 = vector.broadcast %cst_30 : f32 to vector<64x256xf32>
    %84 = arith.maximumf %82, %83 : vector<64x256xf32>
    %c0_31 = arith.constant 0 : index
    %c0_32 = arith.constant 0 : index
    %85 = vector.load %arg8[%c0_31, %c0_32] : memref<64x256xf32, #tpu.memory_space<vmem>>, vector<64x256xf32>
    tpu.vector_store %arg8[%c0_31, %c0_32], %84 {strides = array<i32>} : memref<64x256xf32, #tpu.memory_space<vmem>>, vector<64x256xf32>,
    %c0_33 = arith.constant 0 : index
    %c0_34 = arith.constant 0 : index
    %86 = vector.load %arg8[%c0_33, %c0_34] : memref<64x256xf32, #tpu.memory_space<vmem>>, vector<64x256xf32>
    %c16_i32_35 = arith.constant 16 : i32
    %87 = tpu.dynamic_rotate %86 by %c16_i32_35 dim 1 : vector<64x256xf32>, i32 -> vector<64x256xf32>
    %88 = vector.shape_cast %18 : vector<1x256xi1> to vector<1x256xi1>
    %89 = vector.broadcast %88 : vector<1x256xi1> to vector<64x256xi1>
    %90 = arith.select %89, %86, %87 : vector<64x256xi1>, vector<64x256xf32>
    %c1_i32_36 = arith.constant 1 : i32
    %91 = tpu.dynamic_rotate %90 by %c1_i32_36 dim 1 : vector<64x256xf32>, i32 -> vector<64x256xf32>
    %92 = vector.shape_cast %22 : vector<1x256xi1> to vector<1x256xi1>
    %93 = vector.broadcast %92 : vector<1x256xi1> to vector<64x256xi1>
    %94 = arith.select %93, %90, %91 : vector<64x256xi1>, vector<64x256xf32>
    %95 = arith.truncf %94 : vector<64x256xf32> to vector<64x256xbf16>
    %c0_37 = arith.constant 0 : index
    %c0_38 = arith.constant 0 : index
    %96 = vector.load %arg7[%c0_37, %c0_38] : memref<576x256xbf16, #tpu.memory_space<vmem>>, vector<64x256xbf16>
    tpu.vector_store %arg7[%c0_37, %c0_38], %95 {strides = array<i32>} : memref<576x256xbf16, #tpu.memory_space<vmem>>, vector<64x256xbf16>,
    %97 = arith.truncf %90 : vector<64x256xf32> to vector<64x256xbf16>
    %c64_39 = arith.constant 64 : index
    %c0_40 = arith.constant 0 : index
    %98 = vector.load %arg7[%c64_39, %c0_40] : memref<576x256xbf16, #tpu.memory_space<vmem>>, vector<64x256xbf16>
    tpu.vector_store %arg7[%c64_39, %c0_40], %97 {strides = array<i32>} : memref<576x256xbf16, #tpu.memory_space<vmem>>, vector<64x256xbf16>,
    %c255_i32_41 = arith.constant 255 : i32
    %99 = tpu.dynamic_rotate %90 by %c255_i32_41 dim 1 : vector<64x256xf32>, i32 -> vector<64x256xf32>
    %100 = vector.shape_cast %24 : vector<1x256xi1> to vector<1x256xi1>
    %101 = vector.broadcast %100 : vector<1x256xi1> to vector<64x256xi1>
    %102 = arith.select %101, %90, %99 : vector<64x256xi1>, vector<64x256xf32>
    %103 = arith.truncf %102 : vector<64x256xf32> to vector<64x256xbf16>
    %c128_42 = arith.constant 128 : index
    %c0_43 = arith.constant 0 : index
    %104 = vector.load %arg7[%c128_42, %c0_43] : memref<576x256xbf16, #tpu.memory_space<vmem>>, vector<64x256xbf16>
    tpu.vector_store %arg7[%c128_42, %c0_43], %103 {strides = array<i32>} : memref<576x256xbf16, #tpu.memory_space<vmem>>, vector<64x256xbf16>,
    %c1_i32_44 = arith.constant 1 : i32
    %105 = tpu.dynamic_rotate %86 by %c1_i32_44 dim 1 : vector<64x256xf32>, i32 -> vector<64x256xf32>
    %106 = vector.shape_cast %22 : vector<1x256xi1> to vector<1x256xi1>
    %107 = vector.broadcast %106 : vector<1x256xi1> to vector<64x256xi1>
    %108 = arith.select %107, %86, %105 : vector<64x256xi1>, vector<64x256xf32>
    %109 = arith.truncf %108 : vector<64x256xf32> to vector<64x256xbf16>
    %c192_45 = arith.constant 192 : index
    %c0_46 = arith.constant 0 : index
    %110 = vector.load %arg7[%c192_45, %c0_46] : memref<576x256xbf16, #tpu.memory_space<vmem>>, vector<64x256xbf16>
    tpu.vector_store %arg7[%c192_45, %c0_46], %109 {strides = array<i32>} : memref<576x256xbf16, #tpu.memory_space<vmem>>, vector<64x256xbf16>,
    %111 = arith.truncf %86 : vector<64x256xf32> to vector<64x256xbf16>
    %c256_47 = arith.constant 256 : index
    %c0_48 = arith.constant 0 : index
    %112 = vector.load %arg7[%c256_47, %c0_48] : memref<576x256xbf16, #tpu.memory_space<vmem>>, vector<64x256xbf16>
    tpu.vector_store %arg7[%c256_47, %c0_48], %111 {strides = array<i32>} : memref<576x256xbf16, #tpu.memory_space<vmem>>, vector<64x256xbf16>,
    %c255_i32_49 = arith.constant 255 : i32
    %113 = tpu.dynamic_rotate %86 by %c255_i32_49 dim 1 : vector<64x256xf32>, i32 -> vector<64x256xf32>
    %114 = vector.shape_cast %24 : vector<1x256xi1> to vector<1x256xi1>
    %115 = vector.broadcast %114 : vector<1x256xi1> to vector<64x256xi1>
    %116 = arith.select %115, %86, %113 : vector<64x256xi1>, vector<64x256xf32>
    %117 = arith.truncf %116 : vector<64x256xf32> to vector<64x256xbf16>
    %c320_50 = arith.constant 320 : index
    %c0_51 = arith.constant 0 : index
    %118 = vector.load %arg7[%c320_50, %c0_51] : memref<576x256xbf16, #tpu.memory_space<vmem>>, vector<64x256xbf16>
    tpu.vector_store %arg7[%c320_50, %c0_51], %117 {strides = array<i32>} : memref<576x256xbf16, #tpu.memory_space<vmem>>, vector<64x256xbf16>,
    %c240_i32_52 = arith.constant 240 : i32
    %119 = tpu.dynamic_rotate %86 by %c240_i32_52 dim 1 : vector<64x256xf32>, i32 -> vector<64x256xf32>
    %120 = vector.shape_cast %20 : vector<1x256xi1> to vector<1x256xi1>
    %121 = vector.broadcast %120 : vector<1x256xi1> to vector<64x256xi1>
    %122 = arith.select %121, %86, %119 : vector<64x256xi1>, vector<64x256xf32>
    %c1_i32_53 = arith.constant 1 : i32
    %123 = tpu.dynamic_rotate %122 by %c1_i32_53 dim 1 : vector<64x256xf32>, i32 -> vector<64x256xf32>
    %124 = vector.shape_cast %22 : vector<1x256xi1> to vector<1x256xi1>
    %125 = vector.broadcast %124 : vector<1x256xi1> to vector<64x256xi1>
    %126 = arith.select %125, %122, %123 : vector<64x256xi1>, vector<64x256xf32>
    %127 = arith.truncf %126 : vector<64x256xf32> to vector<64x256xbf16>
    %c384_54 = arith.constant 384 : index
    %c0_55 = arith.constant 0 : index
    %128 = vector.load %arg7[%c384_54, %c0_55] : memref<576x256xbf16, #tpu.memory_space<vmem>>, vector<64x256xbf16>
    tpu.vector_store %arg7[%c384_54, %c0_55], %127 {strides = array<i32>} : memref<576x256xbf16, #tpu.memory_space<vmem>>, vector<64x256xbf16>,
    %129 = arith.truncf %122 : vector<64x256xf32> to vector<64x256xbf16>
    %c448_56 = arith.constant 448 : index
    %c0_57 = arith.constant 0 : index
    %130 = vector.load %arg7[%c448_56, %c0_57] : memref<576x256xbf16, #tpu.memory_space<vmem>>, vector<64x256xbf16>
    tpu.vector_store %arg7[%c448_56, %c0_57], %129 {strides = array<i32>} : memref<576x256xbf16, #tpu.memory_space<vmem>>, vector<64x256xbf16>,
    %c255_i32_58 = arith.constant 255 : i32
    %131 = tpu.dynamic_rotate %122 by %c255_i32_58 dim 1 : vector<64x256xf32>, i32 -> vector<64x256xf32>
    %132 = vector.shape_cast %24 : vector<1x256xi1> to vector<1x256xi1>
    %133 = vector.broadcast %132 : vector<1x256xi1> to vector<64x256xi1>
    %134 = arith.select %133, %122, %131 : vector<64x256xi1>, vector<64x256xf32>
    %135 = arith.truncf %134 : vector<64x256xf32> to vector<64x256xbf16>
    %c512_59 = arith.constant 512 : index
    %c0_60 = arith.constant 0 : index
    %136 = vector.load %arg7[%c512_59, %c0_60] : memref<576x256xbf16, #tpu.memory_space<vmem>>, vector<64x256xbf16>
    tpu.vector_store %arg7[%c512_59, %c0_60], %135 {strides = array<i32>} : memref<576x256xbf16, #tpu.memory_space<vmem>>, vector<64x256xbf16>,
    %c0_61 = arith.constant 0 : index
    %c0_62 = arith.constant 0 : index
    %137 = vector.load %arg4[%c0_61, %c0_62] : memref<32x576xbf16, #tpu.memory_space<vmem>>, vector<32x576xbf16>
    %c0_63 = arith.constant 0 : index
    %c0_64 = arith.constant 0 : index
    %138 = vector.load %arg7[%c0_63, %c0_64] : memref<576x256xbf16, #tpu.memory_space<vmem>>, vector<576x256xbf16>
    %cst_65 = arith.constant dense<0.000000e+00> : vector<32x256xf32>
    %139 = tpu.matmul %137, %138, %cst_65 {dimension_numbers = #tpu.dot_dimension_numbers<[1], [0], [0], [1], [0, 0, 1, 1], [], []>} : vector<32x576xbf16>, vector<576x256xbf16>, vector<32x256xf32> -> vector<32x256xf32>
    %c0_66 = arith.constant 0 : index
    %c0_67 = arith.constant 0 : index
    %140 = vector.load %arg5[%c0_66, %c0_67] : memref<32x1xf32, #tpu.memory_space<vmem>>, vector<32x1xf32>
    %141 = vector.broadcast %140 : vector<32x1xf32> to vector<32x256xf32>
    %142 = arith.addf %139, %141 : vector<32x256xf32>
    %cst_68 = arith.constant 0.000000e+00 : f32
    %143 = vector.broadcast %cst_68 : f32 to vector<32x256xf32>
    %144 = arith.maximumf %142, %143 : vector<32x256xf32>
    %c0_69 = arith.constant 0 : index
    %c0_70 = arith.constant 0 : index
    %c0_71 = arith.constant 0 : index
    %145 = vector.load %arg6[%c0_69, %c0_70, %c0_71] : memref<1x32x256xf32, #tpu.memory_space<vmem>>, vector<1x32x256xf32>
    %146 = vector.shape_cast %145 : vector<1x32x256xf32> to vector<32x256xf32>
    %147 = vector.shape_cast %144 : vector<32x256xf32> to vector<1x32x256xf32>
    tpu.vector_store %arg6[%c0_69, %c0_70, %c0_71], %147 {strides = array<i32>} : memref<1x32x256xf32, #tpu.memory_space<vmem>>, vector<1x32x256xf32>,
    return
  }
  func.func @transform_0(%arg0: i32) -> (i32, i32, i32) {
    %c0_i32 = arith.constant 0 : i32
    %c0_i32_0 = arith.constant 0 : i32
    %c0_i32_1 = arith.constant 0 : i32
    return %arg0, %c0_i32, %c0_i32_0 : i32, i32, i32
  }
  func.func @transform_1(%arg0: i32) -> (i32, i32) {
    %c0_i32 = arith.constant 0 : i32
    %c0_i32_0 = arith.constant 0 : i32
    %c0_i32_1 = arith.constant 0 : i32
    return %c0_i32, %c0_i32_0 : i32, i32
  }
  func.func @transform_2(%arg0: i32) -> (i32, i32) {
    %c0_i32 = arith.constant 0 : i32
    %c0_i32_0 = arith.constant 0 : i32
    %c0_i32_1 = arith.constant 0 : i32
    return %c0_i32, %c0_i32_0 : i32, i32
  }
  func.func @transform_3(%arg0: i32) -> (i32, i32) {
    %c0_i32 = arith.constant 0 : i32
    %c0_i32_0 = arith.constant 0 : i32
    %c0_i32_1 = arith.constant 0 : i32
    return %c0_i32, %c0_i32_0 : i32, i32
  }
  func.func @transform_4(%arg0: i32) -> (i32, i32) {
    %c0_i32 = arith.constant 0 : i32
    %c0_i32_0 = arith.constant 0 : i32
    %c0_i32_1 = arith.constant 0 : i32
    return %c0_i32, %c0_i32_0 : i32, i32
  }
  func.func @transform_5(%arg0: i32) -> (i32, i32, i32) {
    %c0_i32 = arith.constant 0 : i32
    %c0_i32_0 = arith.constant 0 : i32
    %c0_i32_1 = arith.constant 0 : i32
    return %arg0, %c0_i32, %c0_i32_0 : i32, i32, i32
  }
}

</mosaic_0001>

<llo_original>
// kernel: tpu_custom_call.1
$region0: #{tpu_custom_call.1}
  #allocation0 [shape = 'u32[]', space=smem, size = 0x4, offset = 0x4, fixed_abs, tag = 'smem constant byte address 0x4 - core index']
  #allocation1 [shape = 'u32[144,128]{1,0:T(1,128)}', space=vmem, size = 0x12000, scoped, tag = 'internal scratch']
  #allocation2 [shape = 'bf16[576,256]{1,0:T(8,128)(2,1)}', space=vmem, size = 0x48000, scoped, tag = 'scratch operand']
  #allocation3 [shape = 'f32[64,256]{1,0:T(8,128)}', space=vmem, size = 0x10000, scoped, tag = 'scratch operand']
  %s0 = inlined_call_operand.hbm [shape: f32[2,64,256], index: 0, kind: input, shape index: {}]
  %s1 = inlined_call_operand.hbm [shape: bf16[64,576], index: 1, kind: input, shape index: {}]
  %s2 = inlined_call_operand.vmem [shape: f32[64,1], index: 2, kind: input, shape index: {}]
  %s3 = inlined_call_operand.vmem [shape: bf16[32,576], index: 3, kind: input, shape index: {}]
  %s4 = inlined_call_operand.vmem [shape: f32[32,1], index: 4, kind: input, shape index: {}]
  %s5 = inlined_call_operand.hbm [shape: f32[2,32,256], index: 5, kind: output, shape index: {}]
  %s6 = sld [smem:[#allocation0]]
  $region61: #{tpu_custom_call.1} parent=0
    _
  %s8 = ssub.s32 1, %s6
  %s9 = scalar_select 0, %s8, %s6
  $region1: #{tpu_custom_call.1} parent=0
    #allocation4 [shape = 'u8[131072]{0}', space=vmem, size = 0x20000, scoped, tag = 'input window, operand 0']
    #allocation5 [shape = 's32[2]{0}', space=sflag, size = 0x8, scoped, tag = 'scoped memory for tpu_custom_call.1']
    #allocation6 [shape = 's32[2]{0}', space=sflag, size = 0x8, scoped, tag = 'scoped memory for tpu_custom_call.1']
    #allocation7 [shape = 'u8[81920]{0}', space=vmem, size = 0x14000, scoped, tag = 'input window, operand 1, single buffered']
    #allocation8 [shape = 's32[1]{0}', space=sflag, size = 0x4, scoped, tag = 'scoped memory for tpu_custom_call.1']
    #allocation9 [shape = 'u8[65536]{0}', space=vmem, size = 0x10000, scoped, tag = 'output window, operand 0']
    %10 = vsyncpa [#allocation5], 0
    %s11 = scalar_lea.sflag [#allocation5], 1
    %12 = vsyncpa %s11, 0
    %13 = vsyncpa [#allocation8], 0
    %14 = vsyncpa [#allocation6], 0
    %s15 = scalar_lea.sflag [#allocation6], 1
    %16 = vsyncpa %s15, 0
    loop: start=0, step=1, limit=4
    $region2: #{tpu_custom_call.1} parent=1 // loop_pre_header
      _
    $region3: #{tpu_custom_call.1} parent=1 // loop_header
      %s18 = sphi 0, %s22
      %p19 = scmp.ge.s32.totalorder %s18, 4
      %s28 = sphi 0, %s30
      %s31 = sphi 0, %s28
      %s32 = sphi 0, %s31
      %s48 = sphi 0, %s32
      %s52 = sphi 0, %s52
      %s54 = sphi 0, %s52
      %s55 = sphi 0, %s54
      %s69 = sphi 0, %s55
      %s73 = sphi 0, %s73
      %s75 = sphi 0, %s73
      %s76 = sphi 0, %s75
      %s90 = sphi 0, %s76
      %s94 = sphi 0, %s94
      %s96 = sphi 0, %s94
      %s97 = sphi 0, %s96
      %s111 = sphi 0, %s97
      %s115 = sphi 0, %s115
      %s117 = sphi 0, %s115
      %s118 = sphi 0, %s117
      %s132 = sphi 0, %s118
      %s138 = sphi 0, %s140
      %s141 = sphi 0, %s138
      %s142 = sphi 0, %s141
      %s158 = sphi 0, %s142
    $region4: #{tpu_custom_call.1} parent=1 // loop_header_branch
      %21 = sbr.rel (%p19) target = $region8
    $region5: #{tpu_custom_call.1} parent=1 // loop_body
      %s23 = ssub.s32 %s18, 1
      %s24 = ssub.s32 %s18, 2
      %s25 = sadd.s32 %s18, 1
      %s26 = ssub.s32 %s18, %s25
      %p27 = scmp.eq.s32.totalorder %s26, 0
      %s29 = sadd.s32 %s28, 1
      %s30 = scalar_select %p27, %s28, %s29
      %p33 = pneg %p27
      %p34 = scmp.eq.s32.totalorder %s18, 1
      %p35 = por %p33, %p34
      %p36 = scmp.ne.s32.totalorder %s28, %s31
      %p37 = scmp.eq.s32.totalorder %s18, 0
      %p38 = por %p36, %p37
      %p39 = scmp.ne.s32.totalorder %s28, %s31
      %p40 = scmp.eq.s32.totalorder %s23, 1
      %p41 = por %p39, %p40
      %p42 = scmp.ne.s32.totalorder %s31, %s32
      %p43 = scmp.eq.s32.totalorder %s23, 0
      %p44 = por %p42, %p43
      %p45 = scmp.ne.s32.totalorder %s31, %s32
      %p46 = scmp.eq.s32.totalorder %s24, 1
      %p47 = por %p45, %p46
      %p49 = scmp.ne.s32.totalorder %s32, %s48
      %p50 = scmp.eq.s32.totalorder %s24, 0
      %p51 = por %p49, %p50
      %s53 = sadd.s32 %s52, 1
      %p56 = scmp.eq.s32.totalorder %s18, 1
      %p57 = scmp.ne.s32.totalorder %s52, %s54
      %p58 = scmp.eq.s32.totalorder %s18, 0
      %p59 = por %p57, %p58
      %p60 = scmp.ne.s32.totalorder %s52, %s54
      %p61 = scmp.eq.s32.totalorder %s23, 1
      %p62 = por %p60, %p61
      %p63 = scmp.ne.s32.totalorder %s54, %s55
      %p64 = scmp.eq.s32.totalorder %s23, 0
      %p65 = por %p63, %p64
      %p66 = scmp.ne.s32.totalorder %s54, %s55
      %p67 = scmp.eq.s32.totalorder %s24, 1
      %p68 = por %p66, %p67
      %p70 = scmp.ne.s32.totalorder %s55, %s69
      %p71 = scmp.eq.s32.totalorder %s24, 0
      %p72 = por %p70, %p71
      %s74 = sadd.s32 %s73, 1
      %p77 = scmp.eq.s32.totalorder %s18, 1
      %p78 = scmp.ne.s32.totalorder %s73, %s75
      %p79 = scmp.eq.s32.totalorder %s18, 0
      %p80 = por %p78, %p79
      %p81 = scmp.ne.s32.totalorder %s73, %s75
      %p82 = scmp.eq.s32.totalorder %s23, 1
      %p83 = por %p81, %p82
      %p84 = scmp.ne.s32.totalorder %s75, %s76
      %p85 = scmp.eq.s32.totalorder %s23, 0
      %p86 = por %p84, %p85
      %p87 = scmp.ne.s32.totalorder %s75, %s76
      %p88 = scmp.eq.s32.totalorder %s24, 1
      %p89 = por %p87, %p88
      %p91 = scmp.ne.s32.totalorder %s76, %s90
      %p92 = scmp.eq.s32.totalorder %s24, 0
      %p93 = por %p91, %p92
      %s95 = sadd.s32 %s94, 1
      %p98 = scmp.eq.s32.totalorder %s18, 1
      %p99 = scmp.ne.s32.totalorder %s94, %s96
      %p100 = scmp.eq.s32.totalorder %s18, 0
      %p101 = por %p99, %p100
      %p102 = scmp.ne.s32.totalorder %s94, %s96
      %p103 = scmp.eq.s32.totalorder %s23, 1
      %p104 = por %p102, %p103
      %p105 = scmp.ne.s32.totalorder %s96, %s97
      %p106 = scmp.eq.s32.totalorder %s23, 0
      %p107 = por %p105, %p106
      %p108 = scmp.ne.s32.totalorder %s96, %s97
      %p109 = scmp.eq.s32.totalorder %s24, 1
      %p110 = por %p108, %p109
      %p112 = scmp.ne.s32.totalorder %s97, %s111
      %p113 = scmp.eq.s32.totalorder %s24, 0
      %p114 = por %p112, %p113
      %s116 = sadd.s32 %s115, 1
      %p119 = scmp.eq.s32.totalorder %s18, 1
      %p120 = scmp.ne.s32.totalorder %s115, %s117
      %p121 = scmp.eq.s32.totalorder %s18, 0
      %p122 = por %p120, %p121
      %p123 = scmp.ne.s32.totalorder %s115, %s117
      %p124 = scmp.eq.s32.totalorder %s23, 1
      %p125 = por %p123, %p124
      %p126 = scmp.ne.s32.totalorder %s117, %s118
      %p127 = scmp.eq.s32.totalorder %s23, 0
      %p128 = por %p126, %p127
      %p129 = scmp.ne.s32.totalorder %s117, %s118
      %p130 = scmp.eq.s32.totalorder %s24, 1
      %p131 = por %p129, %p130
      %p133 = scmp.ne.s32.totalorder %s118, %s132
      %p134 = scmp.eq.s32.totalorder %s24, 0
      %p135 = por %p133, %p134
      %s136 = ssub.s32 %s18, %s25
      %p137 = scmp.eq.s32.totalorder %s136, 0
      %s139 = sadd.s32 %s138, 1
      %s140 = scalar_select %p137, %s138, %s139
      %p143 = pneg %p137
      %p144 = scmp.eq.s32.totalorder %s18, 1
      %p145 = por %p143, %p144
      %p146 = scmp.ne.s32.totalorder %s138, %s141
      %p147 = scmp.eq.s32.totalorder %s18, 0
      %p148 = por %p146, %p147
      %p149 = scmp.ne.s32.totalorder %s138, %s141
      %p150 = scmp.eq.s32.totalorder %s23, 1
      %p151 = por %p149, %p150
      %p152 = scmp.ne.s32.totalorder %s141, %s142
      %p153 = scmp.eq.s32.totalorder %s23, 0
      %p154 = por %p152, %p153
      %p155 = scmp.ne.s32.totalorder %s141, %s142
      %p156 = scmp.eq.s32.totalorder %s24, 1
      %p157 = por %p155, %p156
      %p159 = scmp.ne.s32.totalorder %s142, %s158
      %p160 = scmp.eq.s32.totalorder %s24, 0
      %p161 = por %p159, %p160
      %p162 = scmp.le.s32.totalorder 1, %s18
      %p163 = scmp.lt.s32.totalorder %s18, 3
      %p164 = pnand %p162, %p163
      %p165 = pneg %p164
      // Predicated region
      $region9: #{tpu_custom_call.1} parent=5 // pred_check
        _
      $region10: #{tpu_custom_call.1} parent=5 // pred_check_branch
        %167 = sbr.rel (%p164) target = $region12
      $region11: #{tpu_custom_call.1} parent=5 // pred_region
        %s168 = ssub.s32 %s18, 1
        // Predicated region
        $region13: #{tpu_custom_call.1} parent=11 // pred_check
          %p169 = pneg %p65
        $region14: #{tpu_custom_call.1} parent=11 // pred_check_branch
          %171 = sbr.rel (%p169) target = $region16
        $region15: #{tpu_custom_call.1} parent=11 // pred_region
          %s173 = ssub.s32 2560, 2560
          %174 = vsyncadd [#allocation8], %s173
          %s175 = sshll.u32 [#allocation7], 4
          %s176 = int_to_ptr.vmem [resolvable:$true] %s175
          %181 = dma.hbm_to_vmem [thread:$0]  %s1, 2560, %s176, [#allocation8], 320, 320, 20
        $region16: #{tpu_custom_call.1} parent=11 // pred_fallthru
          _
        // Predicated region
        $region17: #{tpu_custom_call.1} parent=11 // pred_check
          %p182 = pneg %p86
        $region18: #{tpu_custom_call.1} parent=11 // pred_check_branch
          %184 = sbr.rel (%p182) target = $region20
        $region19: #{tpu_custom_call.1} parent=11 // pred_region
          _
        $region20: #{tpu_custom_call.1} parent=11 // pred_fallthru
          _
        // Predicated region
        $region21: #{tpu_custom_call.1} parent=11 // pred_check
          %p185 = pneg %p107
        $region22: #{tpu_custom_call.1} parent=11 // pred_check_branch
          %187 = sbr.rel (%p185) target = $region24
        $region23: #{tpu_custom_call.1} parent=11 // pred_region
          _
        $region24: #{tpu_custom_call.1} parent=11 // pred_fallthru
          _
        // Predicated region
        $region25: #{tpu_custom_call.1} parent=11 // pred_check
          %p188 = pneg %p128
        $region26: #{tpu_custom_call.1} parent=11 // pred_check_branch
          %190 = sbr.rel (%p188) target = $region28
        $region27: #{tpu_custom_call.1} parent=11 // pred_region
          _
        $region28: #{tpu_custom_call.1} parent=11 // pred_fallthru
          _
      $region12: #{tpu_custom_call.1} parent=5 // pred_fallthru
        _
      %p191 = scmp.lt.s32.totalorder %s18, 2
      // Predicated region
      $region29: #{tpu_custom_call.1} parent=5 // pred_check
        %p192 = pneg %p191
      $region30: #{tpu_custom_call.1} parent=5 // pred_check_branch
        %194 = sbr.rel (%p192) target = $region32
      $region31: #{tpu_custom_call.1} parent=5 // pred_region
        // Predicated region
        $region33: #{tpu_custom_call.1} parent=31 // pred_check
          %p195 = pneg %p38
        $region34: #{tpu_custom_call.1} parent=31 // pred_check_branch
          %197 = sbr.rel (%p195) target = $region36
        $region35: #{tpu_custom_call.1} parent=31 // pred_region
          %s198 = sand.u32 %s28, 1
          %s199 = scalar_lea.sflag [#allocation5], %s198
          %s200 = sand.u32 %s28, 1
          %s201 = smul.addr %s200, 128
          %s202 = scalar_lea.vmem [#allocation4], %s201
          %s204 = ssub.s32 2048, 2048
          %205 = vsyncadd %s199, %s204
          %s206 = smul.addr %s18, 16
          %s207 = smul.addr %s206, 128
          %s208 = scalar_lea.hbm %s0, %s207
          %s209 = sshll.u32 %s202, 4
          %s210 = int_to_ptr.vmem [resolvable:$true] %s209
          %215 = dma.hbm_to_vmem [thread:$0]  %s208, 2048, %s210, %s199, 256, 256, 16
        $region36: #{tpu_custom_call.1} parent=31 // pred_fallthru
          _
      $region32: #{tpu_custom_call.1} parent=5 // pred_fallthru
        _
      %p216 = scmp.le.s32.totalorder 1, %s18
      %p217 = scmp.lt.s32.totalorder %s18, 3
      %p218 = pnand %p216, %p217
      %p219 = pneg %p218
      // Predicated region
      $region37: #{tpu_custom_call.1} parent=5 // pred_check
        _
      $region38: #{tpu_custom_call.1} parent=5 // pred_check_branch
        %221 = sbr.rel (%p218) target = $region40
      $region39: #{tpu_custom_call.1} parent=5 // pred_region
        %s222 = ssub.s32 %s18, 1
        %s223 = sand.u32 %s31, 1
        %s224 = scalar_lea.sflag [#allocation5], %s223
        %s225 = sand.u32 %s31, 1
        %s226 = smul.addr %s225, 128
        %s227 = scalar_lea.vmem [#allocation4], %s226
        // Predicated region
        $region41: #{tpu_custom_call.1} parent=39 // pred_check
          %p228 = pneg %p44
        $region42: #{tpu_custom_call.1} parent=39 // pred_check_branch
          %230 = sbr.rel (%p228) target = $region44
        $region43: #{tpu_custom_call.1} parent=39 // pred_region
          %231 = dma.done %s224, 2048
        $region44: #{tpu_custom_call.1} parent=39 // pred_fallthru
          _
        // Predicated region
        $region45: #{tpu_custom_call.1} parent=39 // pred_check
          %p232 = pneg %p65
        $region46: #{tpu_custom_call.1} parent=39 // pred_check_branch
          %234 = sbr.rel (%p232) target = $region48
        $region47: #{tpu_custom_call.1} parent=39 // pred_region
          %235 = dma.done [#allocation8], 2560
        $region48: #{tpu_custom_call.1} parent=39 // pred_fallthru
          _
        %s236 = sand.u32 %s31, 1
        %s237 = scalar_lea.sflag [#allocation5], %s236
        %s238 = sand.u32 %s31, 1
        %s239 = smul.addr %s238, 128
        %s240 = scalar_lea.vmem [#allocation4], %s239
        %p241 = pneg %p44
        %p242 = pneg %p41
        %p243 = pneg %p65
        %p244 = pneg %p62
        %p245 = pneg %p86
        %p246 = pneg %p83
        %p247 = pneg %p107
        %p248 = pneg %p104
        %p249 = pneg %p128
        %p250 = pneg %p125
        %p251 = pneg %p154
        %p252 = pneg %p151
        %s253 = sand.u32 %s141, 1
        %s254 = scalar_lea.sflag [#allocation6], %s253
        %s255 = sand.u32 %s141, 1
        %s256 = smul.addr %s255, 64
        %s257 = scalar_lea.vmem [#allocation9], %s256
        %v259 = vlaneseq
        %v260 = vand.u32 %v259, 127
        %v261 = vadd.s32 %v260, 128
        %vm262 = vcmp.lt.s32.totalorder %v260, 0
        %v263 = vsub.s32 0, %v260
        %v264 = vsel %vm262, %v263, %v260
        %v265 = vshrl.u32 %v264, 4
        %v266 = vand.u32 %v264, 15
        %v267 = vsub.s32 0, %v266
        %v268 = vsel %vm262, %v267, %v266
        %vm269 = vcmp.lt.s32.totalorder %v261, 0
        %v270 = vsub.s32 0, %v261
        %v271 = vsel %vm269, %v270, %v261
        %v272 = vshrl.u32 %v271, 4
        %v273 = vand.u32 %v271, 15
        %v274 = vsub.s32 0, %v273
        %v275 = vsel %vm269, %v274, %v273
        %vm276 = vcmp.ne.s32.totalorder %v268, 0
        %vm277 = vcmp.ne.s32.totalorder %v275, 0
        %vm278 = vcmp.lt.s32.totalorder %v268, 0
        %vm279 = vcmp.lt.s32.totalorder %v275, 0
        %vm280 = vmand %vm278, %vm276
        %vm281 = vmand %vm279, %vm277
        %v282 = vadd.s32 %v268, 16
        %v283 = vadd.s32 %v275, 16
        %v284 = vsel %vm280, %v282, %v268
        %v285 = vsel %vm281, %v283, %v275
        %vm286 = vcmp.lt.s32.totalorder %v260, 16
        %vm287 = vcmp.lt.s32.totalorder %v261, 16
        %vm288 = vcmp.ge.s32.totalorder %v260, 240
        %vm289 = vcmp.ge.s32.totalorder %v261, 240
        %vm290 = vcmp.eq.s32.totalorder %v284, 0
        %vm291 = vcmp.eq.s32.totalorder %v285, 0
        %vm292 = vcmp.eq.s32.totalorder %v284, 15
        %vm293 = vcmp.eq.s32.totalorder %v285, 15
        %v294 = vld [vmem:[%s227] sm:$0xff]
        %v295 = vld [vmem:[%s227 + $0x8] sm:$0xff]
        %v296 = vld [vmem:[%s227 + $0x10] sm:$0xff]
        %v297 = vld [vmem:[%s227 + $0x18] sm:$0xff]
        %v298 = vld [vmem:[%s227 + $0x20] sm:$0xff]
        %v299 = vld [vmem:[%s227 + $0x28] sm:$0xff]
        %v300 = vld [vmem:[%s227 + $0x30] sm:$0xff]
        %v301 = vld [vmem:[%s227 + $0x38] sm:$0xff]
        %v302 = vld [vmem:[%s227 + $0x40] sm:$0xff]
        %v303 = vld [vmem:[%s227 + $0x48] sm:$0xff]
        %v304 = vld [vmem:[%s227 + $0x50] sm:$0xff]
        %v305 = vld [vmem:[%s227 + $0x58] sm:$0xff]
        %v306 = vld [vmem:[%s227 + $0x60] sm:$0xff]
        %v307 = vld [vmem:[%s227 + $0x68] sm:$0xff]
        %v308 = vld [vmem:[%s227 + $0x70] sm:$0xff]
        %v309 = vld [vmem:[%s227 + $0x78] sm:$0xff]
        %310 = vrot.lane.b32.xlu0 %v294, 16
        %v311 = vpop.permute.xlu0 %310
        %312 = vrot.lane.b32.xlu0 %v296, 16
        %v313 = vpop.permute.xlu0 %312
        %314 = vrot.lane.b32.xlu0 %v298, 16
        %v315 = vpop.permute.xlu0 %314
        %316 = vrot.lane.b32.xlu0 %v300, 16
        %v317 = vpop.permute.xlu0 %316
        %318 = vrot.lane.b32.xlu0 %v302, 16
        %v319 = vpop.permute.xlu0 %318
        %320 = vrot.lane.b32.xlu0 %v304, 16
        %v321 = vpop.permute.xlu0 %320
        %322 = vrot.lane.b32.xlu0 %v306, 16
        %v323 = vpop.permute.xlu0 %322
        %324 = vrot.lane.b32.xlu0 %v308, 16
        %v325 = vpop.permute.xlu0 %324
        %326 = vrot.lane.b32.xlu0 %v295, 16
        %v327 = vpop.permute.xlu0 %326
        %328 = vrot.lane.b32.xlu0 %v297, 16
        %v329 = vpop.permute.xlu0 %328
        %330 = vrot.lane.b32.xlu0 %v299, 16
        %v331 = vpop.permute.xlu0 %330
        %332 = vrot.lane.b32.xlu0 %v301, 16
        %v333 = vpop.permute.xlu0 %332
        %334 = vrot.lane.b32.xlu0 %v303, 16
        %v335 = vpop.permute.xlu0 %334
        %336 = vrot.lane.b32.xlu0 %v305, 16
        %v337 = vpop.permute.xlu0 %336
        %338 = vrot.lane.b32.xlu0 %v307, 16
        %v339 = vpop.permute.xlu0 %338
        %340 = vrot.lane.b32.xlu0 %v309, 16
        %v341 = vpop.permute.xlu0 %340
        %v342 = vsel %vm286, %v311, %v327
        %v343 = vsel %vm286, %v313, %v329
        %v344 = vsel %vm286, %v315, %v331
        %v345 = vsel %vm286, %v317, %v333
        %v346 = vsel %vm286, %v319, %v335
        %v347 = vsel %vm286, %v321, %v337
        %v348 = vsel %vm286, %v323, %v339
        %v349 = vsel %vm286, %v325, %v341
        %v350 = vsel %vm286, %v327, %v311
        %v351 = vsel %vm286, %v329, %v313
        %v352 = vsel %vm286, %v331, %v315
        %v353 = vsel %vm286, %v333, %v317
        %v354 = vsel %vm286, %v335, %v319
        %v355 = vsel %vm286, %v337, %v321
        %v356 = vsel %vm286, %v339, %v323
        %v357 = vsel %vm286, %v341, %v325
        %v358 = vsel %vm286, 1, 0
        %v359 = vsel %vm287, 1, 0
        %vm360 = vcmp.eq.s32.totalorder %v358, 1
        %vm361 = vcmp.eq.s32.totalorder %v359, 1
        %v362 = vsel %vm360, %v294, %v350
        %v363 = vsel %vm361, %v295, %v342
        %v364 = vsel %vm360, %v296, %v351
        %v365 = vsel %vm361, %v297, %v343
        %v366 = vsel %vm360, %v298, %v352
        %v367 = vsel %vm361, %v299, %v344
        %v368 = vsel %vm360, %v300, %v353
        %v369 = vsel %vm361, %v301, %v345
        %v370 = vsel %vm360, %v302, %v354
        %v371 = vsel %vm361, %v303, %v346
        %v372 = vsel %vm360, %v304, %v355
        %v373 = vsel %vm361, %v305, %v347
        %v374 = vsel %vm360, %v306, %v356
        %v375 = vsel %vm361, %v307, %v348
        %v376 = vsel %vm360, %v308, %v357
        %v377 = vsel %vm361, %v309, %v349
        %378 = vrot.lane.b32.xlu0 %v362, 1
        %v379 = vpop.permute.xlu0 %378
        %380 = vrot.lane.b32.xlu0 %v364, 1
        %v381 = vpop.permute.xlu0 %380
        %382 = vrot.lane.b32.xlu0 %v366, 1
        %v383 = vpop.permute.xlu0 %382
        %384 = vrot.lane.b32.xlu0 %v368, 1
        %v385 = vpop.permute.xlu0 %384
        %386 = vrot.lane.b32.xlu0 %v370, 1
        %v387 = vpop.permute.xlu0 %386
        %388 = vrot.lane.b32.xlu0 %v372, 1
        %v389 = vpop.permute.xlu0 %388
        %390 = vrot.lane.b32.xlu0 %v374, 1
        %v391 = vpop.permute.xlu0 %390
        %392 = vrot.lane.b32.xlu0 %v376, 1
        %v393 = vpop.permute.xlu0 %392
        %394 = vrot.lane.b32.xlu0 %v363, 1
        %v395 = vpop.permute.xlu0 %394
        %396 = vrot.lane.b32.xlu0 %v365, 1
        %v397 = vpop.permute.xlu0 %396
        %398 = vrot.lane.b32.xlu0 %v367, 1
        %v399 = vpop.permute.xlu0 %398
        %400 = vrot.lane.b32.xlu0 %v369, 1
        %v401 = vpop.permute.xlu0 %400
        %402 = vrot.lane.b32.xlu0 %v371, 1
        %v403 = vpop.permute.xlu0 %402
        %404 = vrot.lane.b32.xlu0 %v373, 1
        %v405 = vpop.permute.xlu0 %404
        %406 = vrot.lane.b32.xlu0 %v375, 1
        %v407 = vpop.permute.xlu0 %406
        %408 = vrot.lane.b32.xlu0 %v377, 1
        %v409 = vpop.permute.xlu0 %408
        %vm410 = vcmp.lt.s32.totalorder %v260, 1
        %v411 = vsel %vm410, %v379, %v395
        %v412 = vsel %vm410, %v381, %v397
        %v413 = vsel %vm410, %v383, %v399
        %v414 = vsel %vm410, %v385, %v401
        %v415 = vsel %vm410, %v387, %v403
        %v416 = vsel %vm410, %v389, %v405
        %v417 = vsel %vm410, %v391, %v407
        %v418 = vsel %vm410, %v393, %v409
        %v419 = vsel %vm410, %v395, %v379
        %v420 = vsel %vm410, %v397, %v381
        %v421 = vsel %vm410, %v399, %v383
        %v422 = vsel %vm410, %v401, %v385
        %v423 = vsel %vm410, %v403, %v387
        %v424 = vsel %vm410, %v405, %v389
        %v425 = vsel %vm410, %v407, %v391
        %v426 = vsel %vm410, %v409, %v393
        %v427 = vsel %vm290, 1, 0
        %v428 = vsel %vm291, 1, 0
        %vm429 = vcmp.eq.s32.totalorder %v427, 1
        %vm430 = vcmp.eq.s32.totalorder %v428, 1
        %v431 = vsel %vm429, %v362, %v419
        %v432 = vsel %vm430, %v363, %v411
        %v433 = vsel %vm429, %v364, %v420
        %v434 = vsel %vm430, %v365, %v412
        %v435 = vsel %vm429, %v366, %v421
        %v436 = vsel %vm430, %v367, %v413
        %v437 = vsel %vm429, %v368, %v422
        %v438 = vsel %vm430, %v369, %v414
        %v439 = vsel %vm429, %v370, %v423
        %v440 = vsel %vm430, %v371, %v415
        %v441 = vsel %vm429, %v372, %v424
        %v442 = vsel %vm430, %v373, %v416
        %v443 = vsel %vm429, %v374, %v425
        %v444 = vsel %vm430, %v375, %v417
        %v445 = vsel %vm429, %v376, %v426
        %v446 = vsel %vm430, %v377, %v418
        %v447 = vpack.c.bf16 %v433, %v431
        %v448 = vpack.c.bf16 %v434, %v432
        %v449 = vpack.c.bf16 %v437, %v435
        %v450 = vpack.c.bf16 %v438, %v436
        %v451 = vpack.c.bf16 %v441, %v439
        %v452 = vpack.c.bf16 %v442, %v440
        %v453 = vpack.c.bf16 %v445, %v443
        %v454 = vpack.c.bf16 %v446, %v444
        %v463 = vunpack.c.l.b16 %v447
        %v464 = vunpack.c.l.b16 %v448
        %v465 = vunpack.c.h.b16 %v447
        %v466 = vunpack.c.h.b16 %v448
        %v467 = vunpack.c.l.b16 %v449
        %v468 = vunpack.c.l.b16 %v450
        %v469 = vunpack.c.h.b16 %v449
        %v470 = vunpack.c.h.b16 %v450
        %v471 = vunpack.c.l.b16 %v451
        %v472 = vunpack.c.l.b16 %v452
        %v473 = vunpack.c.h.b16 %v451
        %v474 = vunpack.c.h.b16 %v452
        %v475 = vunpack.c.l.b16 %v453
        %v476 = vunpack.c.l.b16 %v454
        %v477 = vunpack.c.h.b16 %v453
        %v478 = vunpack.c.h.b16 %v454
        %v479 = vpack.c.b16 %v464, %v463
        %v480 = vpack.c.b16 %v466, %v465
        %v481 = vpack.c.b16 %v468, %v467
        %v482 = vpack.c.b16 %v470, %v469
        %v483 = vpack.c.b16 %v472, %v471
        %v484 = vpack.c.b16 %v474, %v473
        %v485 = vpack.c.b16 %v476, %v475
        %v486 = vpack.c.b16 %v478, %v477
        %495 = vst [vmem:[#allocation2] sm:$0xff] %v479
        %496 = vst [vmem:[#allocation2 + $0x8] sm:$0xff] %v480
        %497 = vst [vmem:[#allocation2 + $0x10] sm:$0xff] %v481
        %498 = vst [vmem:[#allocation2 + $0x18] sm:$0xff] %v482
        %499 = vst [vmem:[#allocation2 + $0x20] sm:$0xff] %v483
        %500 = vst [vmem:[#allocation2 + $0x28] sm:$0xff] %v484
        %501 = vst [vmem:[#allocation2 + $0x30] sm:$0xff] %v485
        %502 = vst [vmem:[#allocation2 + $0x38] sm:$0xff] %v486
        %v503 = vpack.c.bf16 %v364, %v362
        %v504 = vpack.c.bf16 %v365, %v363
        %v505 = vpack.c.bf16 %v368, %v366
        %v506 = vpack.c.bf16 %v369, %v367
        %v507 = vpack.c.bf16 %v372, %v370
        %v508 = vpack.c.bf16 %v373, %v371
        %v509 = vpack.c.bf16 %v376, %v374
        %v510 = vpack.c.bf16 %v377, %v375
        %v519 = vunpack.c.l.b16 %v503
        %v520 = vunpack.c.l.b16 %v504
        %v521 = vunpack.c.h.b16 %v503
        %v522 = vunpack.c.h.b16 %v504
        %v523 = vunpack.c.l.b16 %v505
        %v524 = vunpack.c.l.b16 %v506
        %v525 = vunpack.c.h.b16 %v505
        %v526 = vunpack.c.h.b16 %v506
        %v527 = vunpack.c.l.b16 %v507
        %v528 = vunpack.c.l.b16 %v508
        %v529 = vunpack.c.h.b16 %v507
        %v530 = vunpack.c.h.b16 %v508
        %v531 = vunpack.c.l.b16 %v509
        %v532 = vunpack.c.l.b16 %v510
        %v533 = vunpack.c.h.b16 %v509
        %v534 = vunpack.c.h.b16 %v510
        %v535 = vpack.c.b16 %v520, %v519
        %v536 = vpack.c.b16 %v522, %v521
        %v537 = vpack.c.b16 %v524, %v523
        %v538 = vpack.c.b16 %v526, %v525
        %v539 = vpack.c.b16 %v528, %v527
        %v540 = vpack.c.b16 %v530, %v529
        %v541 = vpack.c.b16 %v532, %v531
        %v542 = vpack.c.b16 %v534, %v533
        %551 = vst [vmem:[#allocation2 + $0x40] sm:$0xff] %v535
        %552 = vst [vmem:[#allocation2 + $0x48] sm:$0xff] %v536
        %553 = vst [vmem:[#allocation2 + $0x50] sm:$0xff] %v537
        %554 = vst [vmem:[#allocation2 + $0x58] sm:$0xff] %v538
        %555 = vst [vmem:[#allocation2 + $0x60] sm:$0xff] %v539
        %556 = vst [vmem:[#allocation2 + $0x68] sm:$0xff] %v540
        %557 = vst [vmem:[#allocation2 + $0x70] sm:$0xff] %v541
        %558 = vst [vmem:[#allocation2 + $0x78] sm:$0xff] %v542
        %559 = vrot.lane.b32.xlu0 %v362, 127
        %v560 = vpop.permute.xlu0 %559
        %561 = vrot.lane.b32.xlu0 %v364, 127
        %v562 = vpop.permute.xlu0 %561
        %563 = vrot.lane.b32.xlu0 %v366, 127
        %v564 = vpop.permute.xlu0 %563
        %565 = vrot.lane.b32.xlu0 %v368, 127
        %v566 = vpop.permute.xlu0 %565
        %567 = vrot.lane.b32.xlu0 %v370, 127
        %v568 = vpop.permute.xlu0 %567
        %569 = vrot.lane.b32.xlu0 %v372, 127
        %v570 = vpop.permute.xlu0 %569
        %571 = vrot.lane.b32.xlu0 %v374, 127
        %v572 = vpop.permute.xlu0 %571
        %573 = vrot.lane.b32.xlu0 %v376, 127
        %v574 = vpop.permute.xlu0 %573
        %575 = vrot.lane.b32.xlu0 %v363, 127
        %v576 = vpop.permute.xlu0 %575
        %577 = vrot.lane.b32.xlu0 %v365, 127
        %v578 = vpop.permute.xlu0 %577
        %579 = vrot.lane.b32.xlu0 %v367, 127
        %v580 = vpop.permute.xlu0 %579
        %581 = vrot.lane.b32.xlu0 %v369, 127
        %v582 = vpop.permute.xlu0 %581
        %583 = vrot.lane.b32.xlu0 %v371, 127
        %v584 = vpop.permute.xlu0 %583
        %585 = vrot.lane.b32.xlu0 %v373, 127
        %v586 = vpop.permute.xlu0 %585
        %587 = vrot.lane.b32.xlu0 %v375, 127
        %v588 = vpop.permute.xlu0 %587
        %589 = vrot.lane.b32.xlu0 %v377, 127
        %v590 = vpop.permute.xlu0 %589
        %vm591 = vcmp.lt.s32.totalorder %v260, 127
        %v592 = vsel %vm591, %v560, %v576
        %v593 = vsel %vm591, %v562, %v578
        %v594 = vsel %vm591, %v564, %v580
        %v595 = vsel %vm591, %v566, %v582
        %v596 = vsel %vm591, %v568, %v584
        %v597 = vsel %vm591, %v570, %v586
        %v598 = vsel %vm591, %v572, %v588
        %v599 = vsel %vm591, %v574, %v590
        %v600 = vsel %vm591, %v576, %v560
        %v601 = vsel %vm591, %v578, %v562
        %v602 = vsel %vm591, %v580, %v564
        %v603 = vsel %vm591, %v582, %v566
        %v604 = vsel %vm591, %v584, %v568
        %v605 = vsel %vm591, %v586, %v570
        %v606 = vsel %vm591, %v588, %v572
        %v607 = vsel %vm591, %v590, %v574
        %v608 = vsel %vm292, 1, 0
        %v609 = vsel %vm293, 1, 0
        %vm610 = vcmp.eq.s32.totalorder %v608, 1
        %vm611 = vcmp.eq.s32.totalorder %v609, 1
        %v612 = vsel %vm610, %v362, %v592
        %v613 = vsel %vm611, %v363, %v600
        %v614 = vsel %vm610, %v364, %v593
        %v615 = vsel %vm611, %v365, %v601
        %v616 = vsel %vm610, %v366, %v594
        %v617 = vsel %vm611, %v367, %v602
        %v618 = vsel %vm610, %v368, %v595
        %v619 = vsel %vm611, %v369, %v603
        %v620 = vsel %vm610, %v370, %v596
        %v621 = vsel %vm611, %v371, %v604
        %v622 = vsel %vm610, %v372, %v597
        %v623 = vsel %vm611, %v373, %v605
        %v624 = vsel %vm610, %v374, %v598
        %v625 = vsel %vm611, %v375, %v606
        %v626 = vsel %vm610, %v376, %v599
        %v627 = vsel %vm611, %v377, %v607
        %v628 = vpack.c.bf16 %v614, %v612
        %v629 = vpack.c.bf16 %v615, %v613
        %v630 = vpack.c.bf16 %v618, %v616
        %v631 = vpack.c.bf16 %v619, %v617
        %v632 = vpack.c.bf16 %v622, %v620
        %v633 = vpack.c.bf16 %v623, %v621
        %v634 = vpack.c.bf16 %v626, %v624
        %v635 = vpack.c.bf16 %v627, %v625
        %v644 = vunpack.c.l.b16 %v628
        %v645 = vunpack.c.l.b16 %v629
        %v646 = vunpack.c.h.b16 %v628
        %v647 = vunpack.c.h.b16 %v629
        %v648 = vunpack.c.l.b16 %v630
        %v649 = vunpack.c.l.b16 %v631
        %v650 = vunpack.c.h.b16 %v630
        %v651 = vunpack.c.h.b16 %v631
        %v652 = vunpack.c.l.b16 %v632
        %v653 = vunpack.c.l.b16 %v633
        %v654 = vunpack.c.h.b16 %v632
        %v655 = vunpack.c.h.b16 %v633
        %v656 = vunpack.c.l.b16 %v634
        %v657 = vunpack.c.l.b16 %v635
        %v658 = vunpack.c.h.b16 %v634
        %v659 = vunpack.c.h.b16 %v635
        %v660 = vpack.c.b16 %v645, %v644
        %v661 = vpack.c.b16 %v647, %v646
        %v662 = vpack.c.b16 %v649, %v648
        %v663 = vpack.c.b16 %v651, %v650
        %v664 = vpack.c.b16 %v653, %v652
        %v665 = vpack.c.b16 %v655, %v654
        %v666 = vpack.c.b16 %v657, %v656
        %v667 = vpack.c.b16 %v659, %v658
        %676 = vst [vmem:[#allocation2 + $0x80] sm:$0xff] %v660
        %677 = vst [vmem:[#allocation2 + $0x88] sm:$0xff] %v661
        %678 = vst [vmem:[#allocation2 + $0x90] sm:$0xff] %v662
        %679 = vst [vmem:[#allocation2 + $0x98] sm:$0xff] %v663
        %680 = vst [vmem:[#allocation2 + $0xa0] sm:$0xff] %v664
        %681 = vst [vmem:[#allocation2 + $0xa8] sm:$0xff] %v665
        %682 = vst [vmem:[#allocation2 + $0xb0] sm:$0xff] %v666
        %683 = vst [vmem:[#allocation2 + $0xb8] sm:$0xff] %v667
        %684 = vrot.lane.b32.xlu0 %v294, 1
        %v685 = vpop.permute.xlu0 %684
        %686 = vrot.lane.b32.xlu0 %v296, 1
        %v687 = vpop.permute.xlu0 %686
        %688 = vrot.lane.b32.xlu0 %v298, 1
        %v689 = vpop.permute.xlu0 %688
        %690 = vrot.lane.b32.xlu0 %v300, 1
        %v691 = vpop.permute.xlu0 %690
        %692 = vrot.lane.b32.xlu0 %v302, 1
        %v693 = vpop.permute.xlu0 %692
        %694 = vrot.lane.b32.xlu0 %v304, 1
        %v695 = vpop.permute.xlu0 %694
        %696 = vrot.lane.b32.xlu0 %v306, 1
        %v697 = vpop.permute.xlu0 %696
        %698 = vrot.lane.b32.xlu0 %v308, 1
        %v699 = vpop.permute.xlu0 %698
        %700 = vrot.lane.b32.xlu0 %v295, 1
        %v701 = vpop.permute.xlu0 %700
        %702 = vrot.lane.b32.xlu0 %v297, 1
        %v703 = vpop.permute.xlu0 %702
        %704 = vrot.lane.b32.xlu0 %v299, 1
        %v705 = vpop.permute.xlu0 %704
        %706 = vrot.lane.b32.xlu0 %v301, 1
        %v707 = vpop.permute.xlu0 %706
        %708 = vrot.lane.b32.xlu0 %v303, 1
        %v709 = vpop.permute.xlu0 %708
        %710 = vrot.lane.b32.xlu0 %v305, 1
        %v711 = vpop.permute.xlu0 %710
        %712 = vrot.lane.b32.xlu0 %v307, 1
        %v713 = vpop.permute.xlu0 %712
        %714 = vrot.lane.b32.xlu0 %v309, 1
        %v715 = vpop.permute.xlu0 %714
        %v716 = vsel %vm410, %v685, %v701
        %v717 = vsel %vm410, %v687, %v703
        %v718 = vsel %vm410, %v689, %v705
        %v719 = vsel %vm410, %v691, %v707
        %v720 = vsel %vm410, %v693, %v709
        %v721 = vsel %vm410, %v695, %v711
        %v722 = vsel %vm410, %v697, %v713
        %v723 = vsel %vm410, %v699, %v715
        %v724 = vsel %vm410, %v701, %v685
        %v725 = vsel %vm410, %v703, %v687
        %v726 = vsel %vm410, %v705, %v689
        %v727 = vsel %vm410, %v707, %v691
        %v728 = vsel %vm410, %v709, %v693
        %v729 = vsel %vm410, %v711, %v695
        %v730 = vsel %vm410, %v713, %v697
        %v731 = vsel %vm410, %v715, %v699
        %v732 = vsel %vm429, %v294, %v724
        %v733 = vsel %vm430, %v295, %v716
        %v734 = vsel %vm429, %v296, %v725
        %v735 = vsel %vm430, %v297, %v717
        %v736 = vsel %vm429, %v298, %v726
        %v737 = vsel %vm430, %v299, %v718
        %v738 = vsel %vm429, %v300, %v727
        %v739 = vsel %vm430, %v301, %v719
        %v740 = vsel %vm429, %v302, %v728
        %v741 = vsel %vm430, %v303, %v720
        %v742 = vsel %vm429, %v304, %v729
        %v743 = vsel %vm430, %v305, %v721
        %v744 = vsel %vm429, %v306, %v730
        %v745 = vsel %vm430, %v307, %v722
        %v746 = vsel %vm429, %v308, %v731
        %v747 = vsel %vm430, %v309, %v723
        %v748 = vpack.c.bf16 %v734, %v732
        %v749 = vpack.c.bf16 %v735, %v733
        %v750 = vpack.c.bf16 %v738, %v736
        %v751 = vpack.c.bf16 %v739, %v737
        %v752 = vpack.c.bf16 %v742, %v740
        %v753 = vpack.c.bf16 %v743, %v741
        %v754 = vpack.c.bf16 %v746, %v744
        %v755 = vpack.c.bf16 %v747, %v745
        %v764 = vunpack.c.l.b16 %v748
        %v765 = vunpack.c.l.b16 %v749
        %v766 = vunpack.c.h.b16 %v748
        %v767 = vunpack.c.h.b16 %v749
        %v768 = vunpack.c.l.b16 %v750
        %v769 = vunpack.c.l.b16 %v751
        %v770 = vunpack.c.h.b16 %v750
        %v771 = vunpack.c.h.b16 %v751
        %v772 = vunpack.c.l.b16 %v752
        %v773 = vunpack.c.l.b16 %v753
        %v774 = vunpack.c.h.b16 %v752
        %v775 = vunpack.c.h.b16 %v753
        %v776 = vunpack.c.l.b16 %v754
        %v777 = vunpack.c.l.b16 %v755
        %v778 = vunpack.c.h.b16 %v754
        %v779 = vunpack.c.h.b16 %v755
        %v780 = vpack.c.b16 %v765, %v764
        %v781 = vpack.c.b16 %v767, %v766
        %v782 = vpack.c.b16 %v769, %v768
        %v783 = vpack.c.b16 %v771, %v770
        %v784 = vpack.c.b16 %v773, %v772
        %v785 = vpack.c.b16 %v775, %v774
        %v786 = vpack.c.b16 %v777, %v776
        %v787 = vpack.c.b16 %v779, %v778
        %796 = vst [vmem:[#allocation2 + $0xc0] sm:$0xff] %v780
        %797 = vst [vmem:[#allocation2 + $0xc8] sm:$0xff] %v781
        %798 = vst [vmem:[#allocation2 + $0xd0] sm:$0xff] %v782
        %799 = vst [vmem:[#allocation2 + $0xd8] sm:$0xff] %v783
        %800 = vst [vmem:[#allocation2 + $0xe0] sm:$0xff] %v784
        %801 = vst [vmem:[#allocation2 + $0xe8] sm:$0xff] %v785
        %802 = vst [vmem:[#allocation2 + $0xf0] sm:$0xff] %v786
        %803 = vst [vmem:[#allocation2 + $0xf8] sm:$0xff] %v787
        %v804 = vpack.c.bf16 %v296, %v294
        %v805 = vpack.c.bf16 %v297, %v295
        %v806 = vpack.c.bf16 %v300, %v298
        %v807 = vpack.c.bf16 %v301, %v299
        %v808 = vpack.c.bf16 %v304, %v302
        %v809 = vpack.c.bf16 %v305, %v303
        %v810 = vpack.c.bf16 %v308, %v306
        %v811 = vpack.c.bf16 %v309, %v307
        %v820 = vunpack.c.l.b16 %v804
        %v821 = vunpack.c.l.b16 %v805
        %v822 = vunpack.c.h.b16 %v804
        %v823 = vunpack.c.h.b16 %v805
        %v824 = vunpack.c.l.b16 %v806
        %v825 = vunpack.c.l.b16 %v807
        %v826 = vunpack.c.h.b16 %v806
        %v827 = vunpack.c.h.b16 %v807
        %v828 = vunpack.c.l.b16 %v808
        %v829 = vunpack.c.l.b16 %v809
        %v830 = vunpack.c.h.b16 %v808
        %v831 = vunpack.c.h.b16 %v809
        %v832 = vunpack.c.l.b16 %v810
        %v833 = vunpack.c.l.b16 %v811
        %v834 = vunpack.c.h.b16 %v810
        %v835 = vunpack.c.h.b16 %v811
        %v836 = vpack.c.b16 %v821, %v820
        %v837 = vpack.c.b16 %v823, %v822
        %v838 = vpack.c.b16 %v825, %v824
        %v839 = vpack.c.b16 %v827, %v826
        %v840 = vpack.c.b16 %v829, %v828
        %v841 = vpack.c.b16 %v831, %v830
        %v842 = vpack.c.b16 %v833, %v832
        %v843 = vpack.c.b16 %v835, %v834
        %852 = vst [vmem:[#allocation2 + $0x100] sm:$0xff] %v836
        %853 = vst [vmem:[#allocation2 + $0x108] sm:$0xff] %v837
        %854 = vst [vmem:[#allocation2 + $0x110] sm:$0xff] %v838
        %855 = vst [vmem:[#allocation2 + $0x118] sm:$0xff] %v839
        %856 = vst [vmem:[#allocation2 + $0x120] sm:$0xff] %v840
        %857 = vst [vmem:[#allocation2 + $0x128] sm:$0xff] %v841
        %858 = vst [vmem:[#allocation2 + $0x130] sm:$0xff] %v842
        %859 = vst [vmem:[#allocation2 + $0x138] sm:$0xff] %v843
        %860 = vrot.lane.b32.xlu0 %v294, 127
        %v861 = vpop.permute.xlu0 %860
        %862 = vrot.lane.b32.xlu0 %v296, 127
        %v863 = vpop.permute.xlu0 %862
        %864 = vrot.lane.b32.xlu0 %v298, 127
        %v865 = vpop.permute.xlu0 %864
        %866 = vrot.lane.b32.xlu0 %v300, 127
        %v867 = vpop.permute.xlu0 %866
        %868 = vrot.lane.b32.xlu0 %v302, 127
        %v869 = vpop.permute.xlu0 %868
        %870 = vrot.lane.b32.xlu0 %v304, 127
        %v871 = vpop.permute.xlu0 %870
        %872 = vrot.lane.b32.xlu0 %v306, 127
        %v873 = vpop.permute.xlu0 %872
        %874 = vrot.lane.b32.xlu0 %v308, 127
        %v875 = vpop.permute.xlu0 %874
        %876 = vrot.lane.b32.xlu0 %v295, 127
        %v877 = vpop.permute.xlu0 %876
        %878 = vrot.lane.b32.xlu0 %v297, 127
        %v879 = vpop.permute.xlu0 %878
        %880 = vrot.lane.b32.xlu0 %v299, 127
        %v881 = vpop.permute.xlu0 %880
        %882 = vrot.lane.b32.xlu0 %v301, 127
        %v883 = vpop.permute.xlu0 %882
        %884 = vrot.lane.b32.xlu0 %v303, 127
        %v885 = vpop.permute.xlu0 %884
        %886 = vrot.lane.b32.xlu0 %v305, 127
        %v887 = vpop.permute.xlu0 %886
        %888 = vrot.lane.b32.xlu0 %v307, 127
        %v889 = vpop.permute.xlu0 %888
        %890 = vrot.lane.b32.xlu0 %v309, 127
        %v891 = vpop.permute.xlu0 %890
        %v892 = vsel %vm591, %v861, %v877
        %v893 = vsel %vm591, %v863, %v879
        %v894 = vsel %vm591, %v865, %v881
        %v895 = vsel %vm591, %v867, %v883
        %v896 = vsel %vm591, %v869, %v885
        %v897 = vsel %vm591, %v871, %v887
        %v898 = vsel %vm591, %v873, %v889
        %v899 = vsel %vm591, %v875, %v891
        %v900 = vsel %vm591, %v877, %v861
        %v901 = vsel %vm591, %v879, %v863
        %v902 = vsel %vm591, %v881, %v865
        %v903 = vsel %vm591, %v883, %v867
        %v904 = vsel %vm591, %v885, %v869
        %v905 = vsel %vm591, %v887, %v871
        %v906 = vsel %vm591, %v889, %v873
        %v907 = vsel %vm591, %v891, %v875
        %v908 = vsel %vm610, %v294, %v892
        %v909 = vsel %vm611, %v295, %v900
        %v910 = vsel %vm610, %v296, %v893
        %v911 = vsel %vm611, %v297, %v901
        %v912 = vsel %vm610, %v298, %v894
        %v913 = vsel %vm611, %v299, %v902
        %v914 = vsel %vm610, %v300, %v895
        %v915 = vsel %vm611, %v301, %v903
        %v916 = vsel %vm610, %v302, %v896
        %v917 = vsel %vm611, %v303, %v904
        %v918 = vsel %vm610, %v304, %v897
        %v919 = vsel %vm611, %v305, %v905
        %v920 = vsel %vm610, %v306, %v898
        %v921 = vsel %vm611, %v307, %v906
        %v922 = vsel %vm610, %v308, %v899
        %v923 = vsel %vm611, %v309, %v907
        %v924 = vpack.c.bf16 %v910, %v908
        %v925 = vpack.c.bf16 %v911, %v909
        %v926 = vpack.c.bf16 %v914, %v912
        %v927 = vpack.c.bf16 %v915, %v913
        %v928 = vpack.c.bf16 %v918, %v916
        %v929 = vpack.c.bf16 %v919, %v917
        %v930 = vpack.c.bf16 %v922, %v920
        %v931 = vpack.c.bf16 %v923, %v921
        %v940 = vunpack.c.l.b16 %v924
        %v941 = vunpack.c.l.b16 %v925
        %v942 = vunpack.c.h.b16 %v924
        %v943 = vunpack.c.h.b16 %v925
        %v944 = vunpack.c.l.b16 %v926
        %v945 = vunpack.c.l.b16 %v927
        %v946 = vunpack.c.h.b16 %v926
        %v947 = vunpack.c.h.b16 %v927
        %v948 = vunpack.c.l.b16 %v928
        %v949 = vunpack.c.l.b16 %v929
        %v950 = vunpack.c.h.b16 %v928
        %v951 = vunpack.c.h.b16 %v929
        %v952 = vunpack.c.l.b16 %v930
        %v953 = vunpack.c.l.b16 %v931
        %v954 = vunpack.c.h.b16 %v930
        %v955 = vunpack.c.h.b16 %v931
        %v956 = vpack.c.b16 %v941, %v940
        %v957 = vpack.c.b16 %v943, %v942
        %v958 = vpack.c.b16 %v945, %v944
        %v959 = vpack.c.b16 %v947, %v946
        %v960 = vpack.c.b16 %v949, %v948
        %v961 = vpack.c.b16 %v951, %v950
        %v962 = vpack.c.b16 %v953, %v952
        %v963 = vpack.c.b16 %v955, %v954
        %972 = vst [vmem:[#allocation2 + $0x140] sm:$0xff] %v956
        %973 = vst [vmem:[#allocation2 + $0x148] sm:$0xff] %v957
        %974 = vst [vmem:[#allocation2 + $0x150] sm:$0xff] %v958
        %975 = vst [vmem:[#allocation2 + $0x158] sm:$0xff] %v959
        %976 = vst [vmem:[#allocation2 + $0x160] sm:$0xff] %v960
        %977 = vst [vmem:[#allocation2 + $0x168] sm:$0xff] %v961
        %978 = vst [vmem:[#allocation2 + $0x170] sm:$0xff] %v962
        %979 = vst [vmem:[#allocation2 + $0x178] sm:$0xff] %v963
        %980 = vrot.lane.b32.xlu0 %v294, 112
        %v981 = vpop.permute.xlu0 %980
        %982 = vrot.lane.b32.xlu0 %v296, 112
        %v983 = vpop.permute.xlu0 %982
        %984 = vrot.lane.b32.xlu0 %v298, 112
        %v985 = vpop.permute.xlu0 %984
        %986 = vrot.lane.b32.xlu0 %v300, 112
        %v987 = vpop.permute.xlu0 %986
        %988 = vrot.lane.b32.xlu0 %v302, 112
        %v989 = vpop.permute.xlu0 %988
        %990 = vrot.lane.b32.xlu0 %v304, 112
        %v991 = vpop.permute.xlu0 %990
        %992 = vrot.lane.b32.xlu0 %v306, 112
        %v993 = vpop.permute.xlu0 %992
        %994 = vrot.lane.b32.xlu0 %v308, 112
        %v995 = vpop.permute.xlu0 %994
        %996 = vrot.lane.b32.xlu0 %v295, 112
        %v997 = vpop.permute.xlu0 %996
        %998 = vrot.lane.b32.xlu0 %v297, 112
        %v999 = vpop.permute.xlu0 %998
        %1000 = vrot.lane.b32.xlu0 %v299, 112
        %v1001 = vpop.permute.xlu0 %1000
        %1002 = vrot.lane.b32.xlu0 %v301, 112
        %v1003 = vpop.permute.xlu0 %1002
        %1004 = vrot.lane.b32.xlu0 %v303, 112
        %v1005 = vpop.permute.xlu0 %1004
        %1006 = vrot.lane.b32.xlu0 %v305, 112
        %v1007 = vpop.permute.xlu0 %1006
        %1008 = vrot.lane.b32.xlu0 %v307, 112
        %v1009 = vpop.permute.xlu0 %1008
        %1010 = vrot.lane.b32.xlu0 %v309, 112
        %v1011 = vpop.permute.xlu0 %1010
        %vm1012 = vcmp.lt.s32.totalorder %v260, 112
        %v1013 = vsel %vm1012, %v981, %v997
        %v1014 = vsel %vm1012, %v983, %v999
        %v1015 = vsel %vm1012, %v985, %v1001
        %v1016 = vsel %vm1012, %v987, %v1003
        %v1017 = vsel %vm1012, %v989, %v1005
        %v1018 = vsel %vm1012, %v991, %v1007
        %v1019 = vsel %vm1012, %v993, %v1009
        %v1020 = vsel %vm1012, %v995, %v1011
        %v1021 = vsel %vm1012, %v997, %v981
        %v1022 = vsel %vm1012, %v999, %v983
        %v1023 = vsel %vm1012, %v1001, %v985
        %v1024 = vsel %vm1012, %v1003, %v987
        %v1025 = vsel %vm1012, %v1005, %v989
        %v1026 = vsel %vm1012, %v1007, %v991
        %v1027 = vsel %vm1012, %v1009, %v993
        %v1028 = vsel %vm1012, %v1011, %v995
        %v1029 = vsel %vm288, 1, 0
        %v1030 = vsel %vm289, 1, 0
        %vm1031 = vcmp.eq.s32.totalorder %v1029, 1
        %vm1032 = vcmp.eq.s32.totalorder %v1030, 1
        %v1033 = vsel %vm1031, %v294, %v1013
        %v1034 = vsel %vm1032, %v295, %v1021
        %v1035 = vsel %vm1031, %v296, %v1014
        %v1036 = vsel %vm1032, %v297, %v1022
        %v1037 = vsel %vm1031, %v298, %v1015
        %v1038 = vsel %vm1032, %v299, %v1023
        %v1039 = vsel %vm1031, %v300, %v1016
        %v1040 = vsel %vm1032, %v301, %v1024
        %v1041 = vsel %vm1031, %v302, %v1017
        %v1042 = vsel %vm1032, %v303, %v1025
        %v1043 = vsel %vm1031, %v304, %v1018
        %v1044 = vsel %vm1032, %v305, %v1026
        %v1045 = vsel %vm1031, %v306, %v1019
        %v1046 = vsel %vm1032, %v307, %v1027
        %v1047 = vsel %vm1031, %v308, %v1020
        %v1048 = vsel %vm1032, %v309, %v1028
        %1049 = vrot.lane.b32.xlu0 %v1033, 1
        %v1050 = vpop.permute.xlu0 %1049
        %1051 = vrot.lane.b32.xlu0 %v1035, 1
        %v1052 = vpop.permute.xlu0 %1051
        %1053 = vrot.lane.b32.xlu0 %v1037, 1
        %v1054 = vpop.permute.xlu0 %1053
        %1055 = vrot.lane.b32.xlu0 %v1039, 1
        %v1056 = vpop.permute.xlu0 %1055
        %1057 = vrot.lane.b32.xlu0 %v1041, 1
        %v1058 = vpop.permute.xlu0 %1057
        %1059 = vrot.lane.b32.xlu0 %v1043, 1
        %v1060 = vpop.permute.xlu0 %1059
        %1061 = vrot.lane.b32.xlu0 %v1045, 1
        %v1062 = vpop.permute.xlu0 %1061
        %1063 = vrot.lane.b32.xlu0 %v1047, 1
        %v1064 = vpop.permute.xlu0 %1063
        %1065 = vrot.lane.b32.xlu0 %v1034, 1
        %v1066 = vpop.permute.xlu0 %1065
        %1067 = vrot.lane.b32.xlu0 %v1036, 1
        %v1068 = vpop.permute.xlu0 %1067
        %1069 = vrot.lane.b32.xlu0 %v1038, 1
        %v1070 = vpop.permute.xlu0 %1069
        %1071 = vrot.lane.b32.xlu0 %v1040, 1
        %v1072 = vpop.permute.xlu0 %1071
        %1073 = vrot.lane.b32.xlu0 %v1042, 1
        %v1074 = vpop.permute.xlu0 %1073
        %1075 = vrot.lane.b32.xlu0 %v1044, 1
        %v1076 = vpop.permute.xlu0 %1075
        %1077 = vrot.lane.b32.xlu0 %v1046, 1
        %v1078 = vpop.permute.xlu0 %1077
        %1079 = vrot.lane.b32.xlu0 %v1048, 1
        %v1080 = vpop.permute.xlu0 %1079
        %v1081 = vsel %vm410, %v1050, %v1066
        %v1082 = vsel %vm410, %v1052, %v1068
        %v1083 = vsel %vm410, %v1054, %v1070
        %v1084 = vsel %vm410, %v1056, %v1072
        %v1085 = vsel %vm410, %v1058, %v1074
        %v1086 = vsel %vm410, %v1060, %v1076
        %v1087 = vsel %vm410, %v1062, %v1078
        %v1088 = vsel %vm410, %v1064, %v1080
        %v1089 = vsel %vm410, %v1066, %v1050
        %v1090 = vsel %vm410, %v1068, %v1052
        %v1091 = vsel %vm410, %v1070, %v1054
        %v1092 = vsel %vm410, %v1072, %v1056
        %v1093 = vsel %vm410, %v1074, %v1058
        %v1094 = vsel %vm410, %v1076, %v1060
        %v1095 = vsel %vm410, %v1078, %v1062
        %v1096 = vsel %vm410, %v1080, %v1064
        %v1097 = vsel %vm429, %v1033, %v1089
        %v1098 = vsel %vm430, %v1034, %v1081
        %v1099 = vsel %vm429, %v1035, %v1090
        %v1100 = vsel %vm430, %v1036, %v1082
        %v1101 = vsel %vm429, %v1037, %v1091
        %v1102 = vsel %vm430, %v1038, %v1083
        %v1103 = vsel %vm429, %v1039, %v1092
        %v1104 = vsel %vm430, %v1040, %v1084
        %v1105 = vsel %vm429, %v1041, %v1093
        %v1106 = vsel %vm430, %v1042, %v1085
        %v1107 = vsel %vm429, %v1043, %v1094
        %v1108 = vsel %vm430, %v1044, %v1086
        %v1109 = vsel %vm429, %v1045, %v1095
        %v1110 = vsel %vm430, %v1046, %v1087
        %v1111 = vsel %vm429, %v1047, %v1096
        %v1112 = vsel %vm430, %v1048, %v1088
        %v1113 = vpack.c.bf16 %v1099, %v1097
        %v1114 = vpack.c.bf16 %v1100, %v1098
        %v1115 = vpack.c.bf16 %v1103, %v1101
        %v1116 = vpack.c.bf16 %v1104, %v1102
        %v1117 = vpack.c.bf16 %v1107, %v1105
        %v1118 = vpack.c.bf16 %v1108, %v1106
        %v1119 = vpack.c.bf16 %v1111, %v1109
        %v1120 = vpack.c.bf16 %v1112, %v1110
        %v1129 = vunpack.c.l.b16 %v1113
        %v1130 = vunpack.c.l.b16 %v1114
        %v1131 = vunpack.c.h.b16 %v1113
        %v1132 = vunpack.c.h.b16 %v1114
        %v1133 = vunpack.c.l.b16 %v1115
        %v1134 = vunpack.c.l.b16 %v1116
        %v1135 = vunpack.c.h.b16 %v1115
        %v1136 = vunpack.c.h.b16 %v1116
        %v1137 = vunpack.c.l.b16 %v1117
        %v1138 = vunpack.c.l.b16 %v1118
        %v1139 = vunpack.c.h.b16 %v1117
        %v1140 = vunpack.c.h.b16 %v1118
        %v1141 = vunpack.c.l.b16 %v1119
        %v1142 = vunpack.c.l.b16 %v1120
        %v1143 = vunpack.c.h.b16 %v1119
        %v1144 = vunpack.c.h.b16 %v1120
        %v1145 = vpack.c.b16 %v1130, %v1129
        %v1146 = vpack.c.b16 %v1132, %v1131
        %v1147 = vpack.c.b16 %v1134, %v1133
        %v1148 = vpack.c.b16 %v1136, %v1135
        %v1149 = vpack.c.b16 %v1138, %v1137
        %v1150 = vpack.c.b16 %v1140, %v1139
        %v1151 = vpack.c.b16 %v1142, %v1141
        %v1152 = vpack.c.b16 %v1144, %v1143
        %1161 = vst [vmem:[#allocation2 + $0x180] sm:$0xff] %v1145
        %1162 = vst [vmem:[#allocation2 + $0x188] sm:$0xff] %v1146
        %1163 = vst [vmem:[#allocation2 + $0x190] sm:$0xff] %v1147
        %1164 = vst [vmem:[#allocation2 + $0x198] sm:$0xff] %v1148
        %1165 = vst [vmem:[#allocation2 + $0x1a0] sm:$0xff] %v1149
        %1166 = vst [vmem:[#allocation2 + $0x1a8] sm:$0xff] %v1150
        %1167 = vst [vmem:[#allocation2 + $0x1b0] sm:$0xff] %v1151
        %1168 = vst [vmem:[#allocation2 + $0x1b8] sm:$0xff] %v1152
        %v1169 = vpack.c.bf16 %v1035, %v1033
        %v1170 = vpack.c.bf16 %v1036, %v1034
        %v1171 = vpack.c.bf16 %v1039, %v1037
        %v1172 = vpack.c.bf16 %v1040, %v1038
        %v1173 = vpack.c.bf16 %v1043, %v1041
        %v1174 = vpack.c.bf16 %v1044, %v1042
        %v1175 = vpack.c.bf16 %v1047, %v1045
        %v1176 = vpack.c.bf16 %v1048, %v1046
        %v1185 = vunpack.c.l.b16 %v1169
        %v1186 = vunpack.c.l.b16 %v1170
        %v1187 = vunpack.c.h.b16 %v1169
        %v1188 = vunpack.c.h.b16 %v1170
        %v1189 = vunpack.c.l.b16 %v1171
        %v1190 = vunpack.c.l.b16 %v1172
        %v1191 = vunpack.c.h.b16 %v1171
        %v1192 = vunpack.c.h.b16 %v1172
        %v1193 = vunpack.c.l.b16 %v1173
        %v1194 = vunpack.c.l.b16 %v1174
        %v1195 = vunpack.c.h.b16 %v1173
        %v1196 = vunpack.c.h.b16 %v1174
        %v1197 = vunpack.c.l.b16 %v1175
        %v1198 = vunpack.c.l.b16 %v1176
        %v1199 = vunpack.c.h.b16 %v1175
        %v1200 = vunpack.c.h.b16 %v1176
        %v1201 = vpack.c.b16 %v1186, %v1185
        %v1202 = vpack.c.b16 %v1188, %v1187
        %v1203 = vpack.c.b16 %v1190, %v1189
        %v1204 = vpack.c.b16 %v1192, %v1191
        %v1205 = vpack.c.b16 %v1194, %v1193
        %v1206 = vpack.c.b16 %v1196, %v1195
        %v1207 = vpack.c.b16 %v1198, %v1197
        %v1208 = vpack.c.b16 %v1200, %v1199
        %1217 = vst [vmem:[#allocation2 + $0x1c0] sm:$0xff] %v1201
        %1218 = vst [vmem:[#allocation2 + $0x1c8] sm:$0xff] %v1202
        %1219 = vst [vmem:[#allocation2 + $0x1d0] sm:$0xff] %v1203
        %1220 = vst [vmem:[#allocation2 + $0x1d8] sm:$0xff] %v1204
        %1221 = vst [vmem:[#allocation2 + $0x1e0] sm:$0xff] %v1205
        %1222 = vst [vmem:[#allocation2 + $0x1e8] sm:$0xff] %v1206
        %1223 = vst [vmem:[#allocation2 + $0x1f0] sm:$0xff] %v1207
        %1224 = vst [vmem:[#allocation2 + $0x1f8] sm:$0xff] %v1208
        %1225 = vrot.lane.b32.xlu0 %v1033, 127
        %v1226 = vpop.permute.xlu0 %1225
        %1227 = vrot.lane.b32.xlu0 %v1035, 127
        %v1228 = vpop.permute.xlu0 %1227
        %1229 = vrot.lane.b32.xlu0 %v1037, 127
        %v1230 = vpop.permute.xlu0 %1229
        %1231 = vrot.lane.b32.xlu0 %v1039, 127
        %v1232 = vpop.permute.xlu0 %1231
        %1233 = vrot.lane.b32.xlu0 %v1041, 127
        %v1234 = vpop.permute.xlu0 %1233
        %1235 = vrot.lane.b32.xlu0 %v1043, 127
        %v1236 = vpop.permute.xlu0 %1235
        %1237 = vrot.lane.b32.xlu0 %v1045, 127
        %v1238 = vpop.permute.xlu0 %1237
        %1239 = vrot.lane.b32.xlu0 %v1047, 127
        %v1240 = vpop.permute.xlu0 %1239
        %1241 = vrot.lane.b32.xlu0 %v1034, 127
        %v1242 = vpop.permute.xlu0 %1241
        %1243 = vrot.lane.b32.xlu0 %v1036, 127
        %v1244 = vpop.permute.xlu0 %1243
        %1245 = vrot.lane.b32.xlu0 %v1038, 127
        %v1246 = vpop.permute.xlu0 %1245
        %1247 = vrot.lane.b32.xlu0 %v1040, 127
        %v1248 = vpop.permute.xlu0 %1247
        %1249 = vrot.lane.b32.xlu0 %v1042, 127
        %v1250 = vpop.permute.xlu0 %1249
        %1251 = vrot.lane.b32.xlu0 %v1044, 127
        %v1252 = vpop.permute.xlu0 %1251
        %1253 = vrot.lane.b32.xlu0 %v1046, 127
        %v1254 = vpop.permute.xlu0 %1253
        %1255 = vrot.lane.b32.xlu0 %v1048, 127
        %v1256 = vpop.permute.xlu0 %1255
        %v1257 = vsel %vm591, %v1226, %v1242
        %v1258 = vsel %vm591, %v1228, %v1244
        %v1259 = vsel %vm591, %v1230, %v1246
        %v1260 = vsel %vm591, %v1232, %v1248
        %v1261 = vsel %vm591, %v1234, %v1250
        %v1262 = vsel %vm591, %v1236, %v1252
        %v1263 = vsel %vm591, %v1238, %v1254
        %v1264 = vsel %vm591, %v1240, %v1256
        %v1265 = vsel %vm591, %v1242, %v1226
        %v1266 = vsel %vm591, %v1244, %v1228
        %v1267 = vsel %vm591, %v1246, %v1230
        %v1268 = vsel %vm591, %v1248, %v1232
        %v1269 = vsel %vm591, %v1250, %v1234
        %v1270 = vsel %vm591, %v1252, %v1236
        %v1271 = vsel %vm591, %v1254, %v1238
        %v1272 = vsel %vm591, %v1256, %v1240
        %v1273 = vsel %vm610, %v1033, %v1257
        %v1274 = vsel %vm611, %v1034, %v1265
        %v1275 = vsel %vm610, %v1035, %v1258
        %v1276 = vsel %vm611, %v1036, %v1266
        %v1277 = vsel %vm610, %v1037, %v1259
        %v1278 = vsel %vm611, %v1038, %v1267
        %v1279 = vsel %vm610, %v1039, %v1260
        %v1280 = vsel %vm611, %v1040, %v1268
        %v1281 = vsel %vm610, %v1041, %v1261
        %v1282 = vsel %vm611, %v1042, %v1269
        %v1283 = vsel %vm610, %v1043, %v1262
        %v1284 = vsel %vm611, %v1044, %v1270
        %v1285 = vsel %vm610, %v1045, %v1263
        %v1286 = vsel %vm611, %v1046, %v1271
        %v1287 = vsel %vm610, %v1047, %v1264
        %v1288 = vsel %vm611, %v1048, %v1272
        %v1289 = vpack.c.bf16 %v1275, %v1273
        %v1290 = vpack.c.bf16 %v1276, %v1274
        %v1291 = vpack.c.bf16 %v1279, %v1277
        %v1292 = vpack.c.bf16 %v1280, %v1278
        %v1293 = vpack.c.bf16 %v1283, %v1281
        %v1294 = vpack.c.bf16 %v1284, %v1282
        %v1295 = vpack.c.bf16 %v1287, %v1285
        %v1296 = vpack.c.bf16 %v1288, %v1286
        %v1305 = vunpack.c.l.b16 %v1289
        %v1306 = vunpack.c.l.b16 %v1290
        %v1307 = vunpack.c.h.b16 %v1289
        %v1308 = vunpack.c.h.b16 %v1290
        %v1309 = vunpack.c.l.b16 %v1291
        %v1310 = vunpack.c.l.b16 %v1292
        %v1311 = vunpack.c.h.b16 %v1291
        %v1312 = vunpack.c.h.b16 %v1292
        %v1313 = vunpack.c.l.b16 %v1293
        %v1314 = vunpack.c.l.b16 %v1294
        %v1315 = vunpack.c.h.b16 %v1293
        %v1316 = vunpack.c.h.b16 %v1294
        %v1317 = vunpack.c.l.b16 %v1295
        %v1318 = vunpack.c.l.b16 %v1296
        %v1319 = vunpack.c.h.b16 %v1295
        %v1320 = vunpack.c.h.b16 %v1296
        %v1321 = vpack.c.b16 %v1306, %v1305
        %v1322 = vpack.c.b16 %v1308, %v1307
        %v1323 = vpack.c.b16 %v1310, %v1309
        %v1324 = vpack.c.b16 %v1312, %v1311
        %v1325 = vpack.c.b16 %v1314, %v1313
        %v1326 = vpack.c.b16 %v1316, %v1315
        %v1327 = vpack.c.b16 %v1318, %v1317
        %v1328 = vpack.c.b16 %v1320, %v1319
        %1337 = vst [vmem:[#allocation2 + $0x200] sm:$0xff] %v1321
        %1338 = vst [vmem:[#allocation2 + $0x208] sm:$0xff] %v1322
        %1339 = vst [vmem:[#allocation2 + $0x210] sm:$0xff] %v1323
        %1340 = vst [vmem:[#allocation2 + $0x218] sm:$0xff] %v1324
        %1341 = vst [vmem:[#allocation2 + $0x220] sm:$0xff] %v1325
        %1342 = vst [vmem:[#allocation2 + $0x228] sm:$0xff] %v1326
        %1343 = vst [vmem:[#allocation2 + $0x230] sm:$0xff] %v1327
        %1344 = vst [vmem:[#allocation2 + $0x238] sm:$0xff] %v1328
        %v1345 = vld [vmem:[#allocation7] sm:$0xff]
        %v1346 = vld [vmem:[#allocation7 + $0x8] sm:$0xff]
        %v1347 = vld [vmem:[#allocation7 + $0x10] sm:$0xf]
        %v1348 = vld [vmem:[#allocation7 + $0x14] sm:$0xff]
        %v1349 = vld [vmem:[#allocation7 + $0x1c] sm:$0xff]
        %v1350 = vld [vmem:[#allocation7 + $0x24] sm:$0xf]
        %v1351 = vld [vmem:[#allocation7 + $0x28] sm:$0xff]
        %v1352 = vld [vmem:[#allocation7 + $0x30] sm:$0xff]
        %v1353 = vld [vmem:[#allocation7 + $0x38] sm:$0xf]
        %v1354 = vld [vmem:[#allocation7 + $0x3c] sm:$0xff]
        %v1355 = vld [vmem:[#allocation7 + $0x44] sm:$0xff]
        %v1356 = vld [vmem:[#allocation7 + $0x4c] sm:$0xf]
        %v1357 = vld [vmem:[#allocation7 + $0x50] sm:$0xff]
        %v1358 = vld [vmem:[#allocation7 + $0x58] sm:$0xff]
        %v1359 = vld [vmem:[#allocation7 + $0x60] sm:$0xf]
        %v1360 = vld [vmem:[#allocation7 + $0x64] sm:$0xff]
        %v1361 = vld [vmem:[#allocation7 + $0x6c] sm:$0xff]
        %v1362 = vld [vmem:[#allocation7 + $0x74] sm:$0xf]
        %v1363 = vld [vmem:[#allocation7 + $0x78] sm:$0xff]
        %v1364 = vld [vmem:[#allocation7 + $0x80] sm:$0xff]
        %v1365 = vld [vmem:[#allocation7 + $0x88] sm:$0xf]
        %v1366 = vld [vmem:[#allocation7 + $0x8c] sm:$0xff]
        %v1367 = vld [vmem:[#allocation7 + $0x94] sm:$0xff]
        %v1368 = vld [vmem:[#allocation7 + $0x9c] sm:$0xf]
        %v1369 = vld [vmem:[#allocation2] sm:$0xff]
        %v1370 = vld [vmem:[#allocation2 + $0x8] sm:$0xff]
        %v1371 = vld [vmem:[#allocation2 + $0x10] sm:$0xff]
        %v1372 = vld [vmem:[#allocation2 + $0x18] sm:$0xff]
        %v1373 = vld [vmem:[#allocation2 + $0x20] sm:$0xff]
        %v1374 = vld [vmem:[#allocation2 + $0x28] sm:$0xff]
        %v1375 = vld [vmem:[#allocation2 + $0x30] sm:$0xff]
        %v1376 = vld [vmem:[#allocation2 + $0x38] sm:$0xff]
        %v1377 = vld [vmem:[#allocation2 + $0x40] sm:$0xff]
        %v1378 = vld [vmem:[#allocation2 + $0x48] sm:$0xff]
        %v1379 = vld [vmem:[#allocation2 + $0x50] sm:$0xff]
        %v1380 = vld [vmem:[#allocation2 + $0x58] sm:$0xff]
        %v1381 = vld [vmem:[#allocation2 + $0x60] sm:$0xff]
        %v1382 = vld [vmem:[#allocation2 + $0x68] sm:$0xff]
        %v1383 = vld [vmem:[#allocation2 + $0x70] sm:$0xff]
        %v1384 = vld [vmem:[#allocation2 + $0x78] sm:$0xff]
        %v1385 = vld [vmem:[#allocation2 + $0x80] sm:$0xff]
        %v1386 = vld [vmem:[#allocation2 + $0x88] sm:$0xff]
        %v1387 = vld [vmem:[#allocation2 + $0x90] sm:$0xff]
        %v1388 = vld [vmem:[#allocation2 + $0x98] sm:$0xff]
        %v1389 = vld [vmem:[#allocation2 + $0xa0] sm:$0xff]
        %v1390 = vld [vmem:[#allocation2 + $0xa8] sm:$0xff]
        %v1391 = vld [vmem:[#allocation2 + $0xb0] sm:$0xff]
        %v1392 = vld [vmem:[#allocation2 + $0xb8] sm:$0xff]
        %v1393 = vld [vmem:[#allocation2 + $0xc0] sm:$0xff]
        %v1394 = vld [vmem:[#allocation2 + $0xc8] sm:$0xff]
        %v1395 = vld [vmem:[#allocation2 + $0xd0] sm:$0xff]
        %v1396 = vld [vmem:[#allocation2 + $0xd8] sm:$0xff]
        %v1397 = vld [vmem:[#allocation2 + $0xe0] sm:$0xff]
        %v1398 = vld [vmem:[#allocation2 + $0xe8] sm:$0xff]
        %v1399 = vld [vmem:[#allocation2 + $0xf0] sm:$0xff]
        %v1400 = vld [vmem:[#allocation2 + $0xf8] sm:$0xff]
        %v1401 = vld [vmem:[#allocation2 + $0x100] sm:$0xff]
        %v1402 = vld [vmem:[#allocation2 + $0x108] sm:$0xff]
        %v1403 = vld [vmem:[#allocation2 + $0x110] sm:$0xff]
        %v1404 = vld [vmem:[#allocation2 + $0x118] sm:$0xff]
        %v1405 = vld [vmem:[#allocation2 + $0x120] sm:$0xff]
        %v1406 = vld [vmem:[#allocation2 + $0x128] sm:$0xff]
        %v1407 = vld [vmem:[#allocation2 + $0x130] sm:$0xff]
        %v1408 = vld [vmem:[#allocation2 + $0x138] sm:$0xff]
        %v1409 = vld [vmem:[#allocation2 + $0x140] sm:$0xff]
        %v1410 = vld [vmem:[#allocation2 + $0x148] sm:$0xff]
        %v1411 = vld [vmem:[#allocation2 + $0x150] sm:$0xff]
        %v1412 = vld [vmem:[#allocation2 + $0x158] sm:$0xff]
        %v1413 = vld [vmem:[#allocation2 + $0x160] sm:$0xff]
        %v1414 = vld [vmem:[#allocation2 + $0x168] sm:$0xff]
        %v1415 = vld [vmem:[#allocation2 + $0x170] sm:$0xff]
        %v1416 = vld [vmem:[#allocation2 + $0x178] sm:$0xff]
        %v1417 = vld [vmem:[#allocation2 + $0x180] sm:$0xff]
        %v1418 = vld [vmem:[#allocation2 + $0x188] sm:$0xff]
        %v1419 = vld [vmem:[#allocation2 + $0x190] sm:$0xff]
        %v1420 = vld [vmem:[#allocation2 + $0x198] sm:$0xff]
        %v1421 = vld [vmem:[#allocation2 + $0x1a0] sm:$0xff]
        %v1422 = vld [vmem:[#allocation2 + $0x1a8] sm:$0xff]
        %v1423 = vld [vmem:[#allocation2 + $0x1b0] sm:$0xff]
        %v1424 = vld [vmem:[#allocation2 + $0x1b8] sm:$0xff]
        %v1425 = vld [vmem:[#allocation2 + $0x1c0] sm:$0xff]
        %v1426 = vld [vmem:[#allocation2 + $0x1c8] sm:$0xff]
        %v1427 = vld [vmem:[#allocation2 + $0x1d0] sm:$0xff]
        %v1428 = vld [vmem:[#allocation2 + $0x1d8] sm:$0xff]
        %v1429 = vld [vmem:[#allocation2 + $0x1e0] sm:$0xff]
        %v1430 = vld [vmem:[#allocation2 + $0x1e8] sm:$0xff]
        %v1431 = vld [vmem:[#allocation2 + $0x1f0] sm:$0xff]
        %v1432 = vld [vmem:[#allocation2 + $0x1f8] sm:$0xff]
        %v1433 = vld [vmem:[#allocation2 + $0x200] sm:$0xff]
        %v1434 = vld [vmem:[#allocation2 + $0x208] sm:$0xff]
        %v1435 = vld [vmem:[#allocation2 + $0x210] sm:$0xff]
        %v1436 = vld [vmem:[#allocation2 + $0x218] sm:$0xff]
        %v1437 = vld [vmem:[#allocation2 + $0x220] sm:$0xff]
        %v1438 = vld [vmem:[#allocation2 + $0x228] sm:$0xff]
        %v1439 = vld [vmem:[#allocation2 + $0x230] sm:$0xff]
        %v1440 = vld [vmem:[#allocation2 + $0x238] sm:$0xff]
        %v1441 = vld [vmem:[%s2] sm:$0xff]
        %v1442 = vld [vmem:[%s2 + $0x8] sm:$0xff]
        %v1443 = vld [vmem:[%s2 + $0x10] sm:$0xff]
        %v1444 = vld [vmem:[%s2 + $0x18] sm:$0xff]
        %v1445 = vld [vmem:[%s2 + $0x20] sm:$0xff]
        %v1446 = vld [vmem:[%s2 + $0x28] sm:$0xff]
        %v1447 = vld [vmem:[%s2 + $0x30] sm:$0xff]
        %v1448 = vld [vmem:[%s2 + $0x38] sm:$0xff]
        %1450 = vset.pattern.permute.xlu0 0
        %1451 = vperm.xlu0 %1450, %v1441
        %v1452 = vpop.permute.xlu0 %1451
        %1455 = vset.pattern.permute.xlu0 0
        %1456 = vperm.xlu0 %1455, %v1442
        %v1457 = vpop.permute.xlu0 %1456
        %1460 = vset.pattern.permute.xlu0 0
        %1461 = vperm.xlu0 %1460, %v1443
        %v1462 = vpop.permute.xlu0 %1461
        %1465 = vset.pattern.permute.xlu0 0
        %1466 = vperm.xlu0 %1465, %v1444
        %v1467 = vpop.permute.xlu0 %1466
        %1470 = vset.pattern.permute.xlu0 0
        %1471 = vperm.xlu0 %1470, %v1445
        %v1472 = vpop.permute.xlu0 %1471
        %1475 = vset.pattern.permute.xlu0 0
        %1476 = vperm.xlu0 %1475, %v1446
        %v1477 = vpop.permute.xlu0 %1476
        %1480 = vset.pattern.permute.xlu0 0
        %1481 = vperm.xlu0 %1480, %v1447
        %v1482 = vpop.permute.xlu0 %1481
        %1485 = vset.pattern.permute.xlu0 0
        %1486 = vperm.xlu0 %1485, %v1448
        %v1487 = vpop.permute.xlu0 %1486
        %v1513 = vunpack.c.l.b16 %v1345
        %v1514 = vunpack.c.h.b16 %v1345
        %v1515 = vunpack.c.l.b16 %v1346
        %v1516 = vunpack.c.h.b16 %v1346
        %v1517 = vunpack.c.l.b16 %v1347
        %v1518 = vunpack.c.l.b16 %v1348
        %v1519 = vunpack.c.h.b16 %v1348
        %v1520 = vunpack.c.l.b16 %v1349
        %v1521 = vunpack.c.h.b16 %v1349
        %v1522 = vunpack.c.l.b16 %v1350
        %v1523 = vunpack.c.l.b16 %v1351
        %v1524 = vunpack.c.h.b16 %v1351
        %v1525 = vunpack.c.l.b16 %v1352
        %v1526 = vunpack.c.h.b16 %v1352
        %v1527 = vunpack.c.l.b16 %v1353
        %v1528 = vunpack.c.l.b16 %v1354
        %v1529 = vunpack.c.h.b16 %v1354
        %v1530 = vunpack.c.l.b16 %v1355
        %v1531 = vunpack.c.h.b16 %v1355
        %v1532 = vunpack.c.l.b16 %v1356
        %v1533 = vunpack.c.l.b16 %v1357
        %v1534 = vunpack.c.h.b16 %v1357
        %v1535 = vunpack.c.l.b16 %v1358
        %v1536 = vunpack.c.h.b16 %v1358
        %v1537 = vunpack.c.l.b16 %v1359
        %v1538 = vunpack.c.l.b16 %v1360
        %v1539 = vunpack.c.h.b16 %v1360
        %v1540 = vunpack.c.l.b16 %v1361
        %v1541 = vunpack.c.h.b16 %v1361
        %v1542 = vunpack.c.l.b16 %v1362
        %v1543 = vunpack.c.l.b16 %v1363
        %v1544 = vunpack.c.h.b16 %v1363
        %v1545 = vunpack.c.l.b16 %v1364
        %v1546 = vunpack.c.h.b16 %v1364
        %v1547 = vunpack.c.l.b16 %v1365
        %v1548 = vunpack.c.l.b16 %v1366
        %v1549 = vunpack.c.h.b16 %v1366
        %v1550 = vunpack.c.l.b16 %v1367
        %v1551 = vunpack.c.h.b16 %v1367
        %v1552 = vunpack.c.l.b16 %v1368
        %v1553 = vpack.c.b16 %v1518, %v1513
        %v1554 = vpack.c.b16 %v1519, %v1514
        %v1555 = vpack.c.b16 %v1520, %v1515
        %v1556 = vpack.c.b16 %v1521, %v1516
        %v1557 = vpack.c.b16 %v1522, %v1517
        %v1558 = vpack.c.b16 %v1528, %v1523
        %v1559 = vpack.c.b16 %v1529, %v1524
        %v1560 = vpack.c.b16 %v1530, %v1525
        %v1561 = vpack.c.b16 %v1531, %v1526
        %v1562 = vpack.c.b16 %v1532, %v1527
        %v1563 = vpack.c.b16 %v1538, %v1533
        %v1564 = vpack.c.b16 %v1539, %v1534
        %v1565 = vpack.c.b16 %v1540, %v1535
        %v1566 = vpack.c.b16 %v1541, %v1536
        %v1567 = vpack.c.b16 %v1542, %v1537
        %v1568 = vpack.c.b16 %v1548, %v1543
        %v1569 = vpack.c.b16 %v1549, %v1544
        %v1570 = vpack.c.b16 %v1550, %v1545
        %v1571 = vpack.c.b16 %v1551, %v1546
        %v1572 = vpack.c.b16 %v1552, %v1547
        %v1661 = vunpack.c.l.b16 %v1369
        %v1662 = vunpack.c.h.b16 %v1369
        %v1663 = vunpack.c.l.b16 %v1370
        %v1664 = vunpack.c.h.b16 %v1370
        %v1665 = vunpack.c.l.b16 %v1371
        %v1666 = vunpack.c.h.b16 %v1371
        %v1667 = vunpack.c.l.b16 %v1372
        %v1668 = vunpack.c.h.b16 %v1372
        %v1669 = vunpack.c.l.b16 %v1373
        %v1670 = vunpack.c.h.b16 %v1373
        %v1671 = vunpack.c.l.b16 %v1374
        %v1672 = vunpack.c.h.b16 %v1374
        %v1673 = vunpack.c.l.b16 %v1375
        %v1674 = vunpack.c.h.b16 %v1375
        %v1675 = vunpack.c.l.b16 %v1376
        %v1676 = vunpack.c.h.b16 %v1376
        %v1677 = vunpack.c.l.b16 %v1377
        %v1678 = vunpack.c.h.b16 %v1377
        %v1679 = vunpack.c.l.b16 %v1378
        %v1680 = vunpack.c.h.b16 %v1378
        %v1681 = vunpack.c.l.b16 %v1379
        %v1682 = vunpack.c.h.b16 %v1379
        %v1683 = vunpack.c.l.b16 %v1380
        %v1684 = vunpack.c.h.b16 %v1380
        %v1685 = vunpack.c.l.b16 %v1381
        %v1686 = vunpack.c.h.b16 %v1381
        %v1687 = vunpack.c.l.b16 %v1382
        %v1688 = vunpack.c.h.b16 %v1382
        %v1689 = vunpack.c.l.b16 %v1383
        %v1690 = vunpack.c.h.b16 %v1383
        %v1691 = vunpack.c.l.b16 %v1384
        %v1692 = vunpack.c.h.b16 %v1384
        %v1693 = vunpack.c.l.b16 %v1385
        %v1694 = vunpack.c.h.b16 %v1385
        %v1695 = vunpack.c.l.b16 %v1386
        %v1696 = vunpack.c.h.b16 %v1386
        %v1697 = vunpack.c.l.b16 %v1387
        %v1698 = vunpack.c.h.b16 %v1387
        %v1699 = vunpack.c.l.b16 %v1388
        %v1700 = vunpack.c.h.b16 %v1388
        %v1701 = vunpack.c.l.b16 %v1389
        %v1702 = vunpack.c.h.b16 %v1389
        %v1703 = vunpack.c.l.b16 %v1390
        %v1704 = vunpack.c.h.b16 %v1390
        %v1705 = vunpack.c.l.b16 %v1391
        %v1706 = vunpack.c.h.b16 %v1391
        %v1707 = vunpack.c.l.b16 %v1392
        %v1708 = vunpack.c.h.b16 %v1392
        %v1709 = vunpack.c.l.b16 %v1393
        %v1710 = vunpack.c.h.b16 %v1393
        %v1711 = vunpack.c.l.b16 %v1394
        %v1712 = vunpack.c.h.b16 %v1394
        %v1713 = vunpack.c.l.b16 %v1395
        %v1714 = vunpack.c.h.b16 %v1395
        %v1715 = vunpack.c.l.b16 %v1396
        %v1716 = vunpack.c.h.b16 %v1396
        %v1717 = vunpack.c.l.b16 %v1397
        %v1718 = vunpack.c.h.b16 %v1397
        %v1719 = vunpack.c.l.b16 %v1398
        %v1720 = vunpack.c.h.b16 %v1398
        %v1721 = vunpack.c.l.b16 %v1399
        %v1722 = vunpack.c.h.b16 %v1399
        %v1723 = vunpack.c.l.b16 %v1400
        %v1724 = vunpack.c.h.b16 %v1400
        %v1725 = vunpack.c.l.b16 %v1401
        %v1726 = vunpack.c.h.b16 %v1401
        %v1727 = vunpack.c.l.b16 %v1402
        %v1728 = vunpack.c.h.b16 %v1402
        %v1729 = vunpack.c.l.b16 %v1403
        %v1730 = vunpack.c.h.b16 %v1403
        %v1731 = vunpack.c.l.b16 %v1404
        %v1732 = vunpack.c.h.b16 %v1404
        %v1733 = vunpack.c.l.b16 %v1405
        %v1734 = vunpack.c.h.b16 %v1405
        %v1735 = vunpack.c.l.b16 %v1406
        %v1736 = vunpack.c.h.b16 %v1406
        %v1737 = vunpack.c.l.b16 %v1407
        %v1738 = vunpack.c.h.b16 %v1407
        %v1739 = vunpack.c.l.b16 %v1408
        %v1740 = vunpack.c.h.b16 %v1408
        %v1741 = vunpack.c.l.b16 %v1409
        %v1742 = vunpack.c.h.b16 %v1409
        %v1743 = vunpack.c.l.b16 %v1410
        %v1744 = vunpack.c.h.b16 %v1410
        %v1745 = vunpack.c.l.b16 %v1411
        %v1746 = vunpack.c.h.b16 %v1411
        %v1747 = vunpack.c.l.b16 %v1412
        %v1748 = vunpack.c.h.b16 %v1412
        %v1749 = vunpack.c.l.b16 %v1413
        %v1750 = vunpack.c.h.b16 %v1413
        %v1751 = vunpack.c.l.b16 %v1414
        %v1752 = vunpack.c.h.b16 %v1414
        %v1753 = vunpack.c.l.b16 %v1415
        %v1754 = vunpack.c.h.b16 %v1415
        %v1755 = vunpack.c.l.b16 %v1416
        %v1756 = vunpack.c.h.b16 %v1416
        %v1757 = vunpack.c.l.b16 %v1417
        %v1758 = vunpack.c.h.b16 %v1417
        %v1759 = vunpack.c.l.b16 %v1418
        %v1760 = vunpack.c.h.b16 %v1418
        %v1761 = vunpack.c.l.b16 %v1419
        %v1762 = vunpack.c.h.b16 %v1419
        %v1763 = vunpack.c.l.b16 %v1420
        %v1764 = vunpack.c.h.b16 %v1420
        %v1765 = vunpack.c.l.b16 %v1421
        %v1766 = vunpack.c.h.b16 %v1421
        %v1767 = vunpack.c.l.b16 %v1422
        %v1768 = vunpack.c.h.b16 %v1422
        %v1769 = vunpack.c.l.b16 %v1423
        %v1770 = vunpack.c.h.b16 %v1423
        %v1771 = vunpack.c.l.b16 %v1424
        %v1772 = vunpack.c.h.b16 %v1424
        %v1773 = vunpack.c.l.b16 %v1425
        %v1774 = vunpack.c.h.b16 %v1425
        %v1775 = vunpack.c.l.b16 %v1426
        %v1776 = vunpack.c.h.b16 %v1426
        %v1777 = vunpack.c.l.b16 %v1427
        %v1778 = vunpack.c.h.b16 %v1427
        %v1779 = vunpack.c.l.b16 %v1428
        %v1780 = vunpack.c.h.b16 %v1428
        %v1781 = vunpack.c.l.b16 %v1429
        %v1782 = vunpack.c.h.b16 %v1429
        %v1783 = vunpack.c.l.b16 %v1430
        %v1784 = vunpack.c.h.b16 %v1430
        %v1785 = vunpack.c.l.b16 %v1431
        %v1786 = vunpack.c.h.b16 %v1431
        %v1787 = vunpack.c.l.b16 %v1432
        %v1788 = vunpack.c.h.b16 %v1432
        %v1789 = vunpack.c.l.b16 %v1433
        %v1790 = vunpack.c.h.b16 %v1433
        %v1791 = vunpack.c.l.b16 %v1434
        %v1792 = vunpack.c.h.b16 %v1434
        %v1793 = vunpack.c.l.b16 %v1435
        %v1794 = vunpack.c.h.b16 %v1435
        %v1795 = vunpack.c.l.b16 %v1436
        %v1796 = vunpack.c.h.b16 %v1436
        %v1797 = vunpack.c.l.b16 %v1437
        %v1798 = vunpack.c.h.b16 %v1437
        %v1799 = vunpack.c.l.b16 %v1438
        %v1800 = vunpack.c.h.b16 %v1438
        %v1801 = vunpack.c.l.b16 %v1439
        %v1802 = vunpack.c.h.b16 %v1439
        %v1803 = vunpack.c.l.b16 %v1440
        %v1804 = vunpack.c.h.b16 %v1440
        %v1805 = vpack.c.b16 %v1663, %v1661
        %v1806 = vpack.c.b16 %v1664, %v1662
        %v1807 = vpack.c.b16 %v1667, %v1665
        %v1808 = vpack.c.b16 %v1668, %v1666
        %v1809 = vpack.c.b16 %v1671, %v1669
        %v1810 = vpack.c.b16 %v1672, %v1670
        %v1811 = vpack.c.b16 %v1675, %v1673
        %v1812 = vpack.c.b16 %v1676, %v1674
        %v1813 = vpack.c.b16 %v1679, %v1677
        %v1814 = vpack.c.b16 %v1680, %v1678
        %v1815 = vpack.c.b16 %v1683, %v1681
        %v1816 = vpack.c.b16 %v1684, %v1682
        %v1817 = vpack.c.b16 %v1687, %v1685
        %v1818 = vpack.c.b16 %v1688, %v1686
        %v1819 = vpack.c.b16 %v1691, %v1689
        %v1820 = vpack.c.b16 %v1692, %v1690
        %v1821 = vpack.c.b16 %v1695, %v1693
        %v1822 = vpack.c.b16 %v1696, %v1694
        %v1823 = vpack.c.b16 %v1699, %v1697
        %v1824 = vpack.c.b16 %v1700, %v1698
        %v1825 = vpack.c.b16 %v1703, %v1701
        %v1826 = vpack.c.b16 %v1704, %v1702
        %v1827 = vpack.c.b16 %v1707, %v1705
        %v1828 = vpack.c.b16 %v1708, %v1706
        %v1829 = vpack.c.b16 %v1711, %v1709
        %v1830 = vpack.c.b16 %v1712, %v1710
        %v1831 = vpack.c.b16 %v1715, %v1713
        %v1832 = vpack.c.b16 %v1716, %v1714
        %v1833 = vpack.c.b16 %v1719, %v1717
        %v1834 = vpack.c.b16 %v1720, %v1718
        %v1835 = vpack.c.b16 %v1723, %v1721
        %v1836 = vpack.c.b16 %v1724, %v1722
        %v1837 = vpack.c.b16 %v1727, %v1725
        %v1838 = vpack.c.b16 %v1728, %v1726
        %v1839 = vpack.c.b16 %v1731, %v1729
        %v1840 = vpack.c.b16 %v1732, %v1730
        %v1841 = vpack.c.b16 %v1735, %v1733
        %v1842 = vpack.c.b16 %v1736, %v1734
        %v1843 = vpack.c.b16 %v1739, %v1737
        %v1844 = vpack.c.b16 %v1740, %v1738
        %v1845 = vpack.c.b16 %v1743, %v1741
        %v1846 = vpack.c.b16 %v1744, %v1742
        %v1847 = vpack.c.b16 %v1747, %v1745
        %v1848 = vpack.c.b16 %v1748, %v1746
        %v1849 = vpack.c.b16 %v1751, %v1749
        %v1850 = vpack.c.b16 %v1752, %v1750
        %v1851 = vpack.c.b16 %v1755, %v1753
        %v1852 = vpack.c.b16 %v1756, %v1754
        %v1853 = vpack.c.b16 %v1759, %v1757
        %v1854 = vpack.c.b16 %v1760, %v1758
        %v1855 = vpack.c.b16 %v1763, %v1761
        %v1856 = vpack.c.b16 %v1764, %v1762
        %v1857 = vpack.c.b16 %v1767, %v1765
        %v1858 = vpack.c.b16 %v1768, %v1766
        %v1859 = vpack.c.b16 %v1771, %v1769
        %v1860 = vpack.c.b16 %v1772, %v1770
        %v1861 = vpack.c.b16 %v1775, %v1773
        %v1862 = vpack.c.b16 %v1776, %v1774
        %v1863 = vpack.c.b16 %v1779, %v1777
        %v1864 = vpack.c.b16 %v1780, %v1778
        %v1865 = vpack.c.b16 %v1783, %v1781
        %v1866 = vpack.c.b16 %v1784, %v1782
        %v1867 = vpack.c.b16 %v1787, %v1785
        %v1868 = vpack.c.b16 %v1788, %v1786
        %v1869 = vpack.c.b16 %v1791, %v1789
        %v1870 = vpack.c.b16 %v1792, %v1790
        %v1871 = vpack.c.b16 %v1795, %v1793
        %v1872 = vpack.c.b16 %v1796, %v1794
        %v1873 = vpack.c.b16 %v1799, %v1797
        %v1874 = vpack.c.b16 %v1800, %v1798
        %v1875 = vpack.c.b16 %v1803, %v1801
        %v1876 = vpack.c.b16 %v1804, %v1802
        %vm1949 = vcmask 523264
        %v1951 = vsel %vm1949, %v1557, 0
        %v1954 = vsel %vm1949, %v1562, 0
        %v1957 = vsel %vm1949, %v1567, 0
        %v1960 = vsel %vm1949, %v1572, 0
        %1962 = vmatprep.subr.bf16.mxu0 %v1820
        %1963 = vmatpush1.bf16.msra.mxu0 %v1819
        %1964 = vmatprep.subr.bf16.mxu0 %v1818
        %1965 = vmatpush1.bf16.msra.mxu0 %v1817
        %1966 = vmatprep.subr.bf16.mxu0 %v1816
        %1967 = vmatpush1.bf16.msra.mxu0 %v1815
        %1968 = vmatprep.subr.bf16.mxu0 %v1814
        %1969 = vmatpush1.bf16.msra.mxu0 %v1813
        %1970 = vmatprep.subr.bf16.mxu0 %v1812
        %1971 = vmatpush1.bf16.msra.mxu0 %v1811
        %1972 = vmatprep.subr.bf16.mxu0 %v1810
        %1973 = vmatpush1.bf16.msra.mxu0 %v1809
        %1974 = vmatprep.subr.bf16.mxu0 %v1808
        %1975 = vmatpush1.bf16.msra.mxu0 %v1807
        %1976 = vmatprep.subr.bf16.mxu0 %v1806
        %1977 = vmatpush1.bf16.msra.mxu0 %v1805
        %1978 = vmatprep.subr.bf16.mxu0 %v1836
        %1979 = vmatpush2.bf16.msra.mxu0 %v1835
        %1980 = vmatprep.subr.bf16.mxu0 %v1834
        %1981 = vmatpush2.bf16.msra.mxu0 %v1833
        %1982 = vmatprep.subr.bf16.mxu0 %v1832
        %1983 = vmatpush2.bf16.msra.mxu0 %v1831
        %1984 = vmatprep.subr.bf16.mxu0 %v1830
        %1985 = vmatpush2.bf16.msra.mxu0 %v1829
        %1986 = vmatprep.subr.bf16.mxu0 %v1828
        %1987 = vmatpush2.bf16.msra.mxu0 %v1827
        %1988 = vmatprep.subr.bf16.mxu0 %v1826
        %1989 = vmatpush2.bf16.msra.mxu0 %v1825
        %1990 = vmatprep.subr.bf16.mxu0 %v1824
        %1991 = vmatpush2.bf16.msra.mxu0 %v1823
        %1992 = vmatprep.subr.bf16.mxu0 %v1822
        %1993 = vmatpush2.bf16.msra.mxu0 %v1821
        %1994 = vmatprep.mubr.bf16.mxu0 %v1554
        %1995 = vmatmul.mubr.bf16.gmra.mxu0 %v1553
        %v1996 = vpop.f32.mrf.mxu0
        %v1997 = vadd.f32 %v1452, %v1996
        %v1998 = vpop.f32.mrf.mxu0
        %v1999 = vadd.f32 %v1452, %v1998
        %v2000 = vpop.f32.mrf.mxu0
        %v2001 = vadd.f32 %v1457, %v2000
        %v2002 = vpop.f32.mrf.mxu0
        %v2003 = vadd.f32 %v1457, %v2002
        %2004 = vmatprep.mubr.bf16.mxu0 %v1559
        %2005 = vmatmul.mubr.bf16.gmra.mxu0 %v1558
        %v2006 = vpop.f32.mrf.mxu0
        %v2007 = vadd.f32 %v1462, %v2006
        %v2008 = vpop.f32.mrf.mxu0
        %v2009 = vadd.f32 %v1462, %v2008
        %v2010 = vpop.f32.mrf.mxu0
        %v2011 = vadd.f32 %v1467, %v2010
        %v2012 = vpop.f32.mrf.mxu0
        %v2013 = vadd.f32 %v1467, %v2012
        %2014 = vmatprep.mubr.bf16.mxu0 %v1564
        %2015 = vmatmul.mubr.bf16.gmra.mxu0 %v1563
        %v2016 = vpop.f32.mrf.mxu0
        %v2017 = vadd.f32 %v1472, %v2016
        %v2018 = vpop.f32.mrf.mxu0
        %v2019 = vadd.f32 %v1472, %v2018
        %v2020 = vpop.f32.mrf.mxu0
        %v2021 = vadd.f32 %v1477, %v2020
        %v2022 = vpop.f32.mrf.mxu0
        %v2023 = vadd.f32 %v1477, %v2022
        %2024 = vmatprep.mubr.bf16.mxu0 %v1569
        %2025 = vmatmul.mubr.bf16.gmra.mxu0 %v1568
        %v2026 = vpop.f32.mrf.mxu0
        %v2027 = vadd.f32 %v1482, %v2026
        %v2028 = vpop.f32.mrf.mxu0
        %v2029 = vadd.f32 %v1482, %v2028
        %v2030 = vpop.f32.mrf.mxu0
        %v2031 = vadd.f32 %v1487, %v2030
        %v2032 = vpop.f32.mrf.mxu0
        %v2033 = vadd.f32 %v1487, %v2032
        %2034 = vdwg.mxu0
        %2035 = vmatprep.subr.bf16.mxu0 %v1852
        %2036 = vmatpush1.bf16.msra.mxu0 %v1851
        %2037 = vmatprep.subr.bf16.mxu0 %v1850
        %2038 = vmatpush1.bf16.msra.mxu0 %v1849
        %2039 = vmatprep.subr.bf16.mxu0 %v1848
        %2040 = vmatpush1.bf16.msra.mxu0 %v1847
        %2041 = vmatprep.subr.bf16.mxu0 %v1846
        %2042 = vmatpush1.bf16.msra.mxu0 %v1845
        %2043 = vmatprep.subr.bf16.mxu0 %v1844
        %2044 = vmatpush1.bf16.msra.mxu0 %v1843
        %2045 = vmatprep.subr.bf16.mxu0 %v1842
        %2046 = vmatpush1.bf16.msra.mxu0 %v1841
        %2047 = vmatprep.subr.bf16.mxu0 %v1840
        %2048 = vmatpush1.bf16.msra.mxu0 %v1839
        %2049 = vmatprep.subr.bf16.mxu0 %v1838
        %2050 = vmatpush1.bf16.msra.mxu0 %v1837
        %2051 = vmatprep.subr.bf16.mxu0 %v1868
        %2052 = vmatpush2.bf16.msra.mxu0 %v1867
        %2053 = vmatprep.subr.bf16.mxu0 %v1866
        %2054 = vmatpush2.bf16.msra.mxu0 %v1865
        %2055 = vmatprep.subr.bf16.mxu0 %v1864
        %2056 = vmatpush2.bf16.msra.mxu0 %v1863
        %2057 = vmatprep.subr.bf16.mxu0 %v1862
        %2058 = vmatpush2.bf16.msra.mxu0 %v1861
        %2059 = vmatprep.subr.bf16.mxu0 %v1860
        %2060 = vmatpush2.bf16.msra.mxu0 %v1859
        %2061 = vmatprep.subr.bf16.mxu0 %v1858
        %2062 = vmatpush2.bf16.msra.mxu0 %v1857
        %2063 = vmatprep.subr.bf16.mxu0 %v1856
        %2064 = vmatpush2.bf16.msra.mxu0 %v1855
        %2065 = vmatprep.subr.bf16.mxu0 %v1854
        %2066 = vmatpush2.bf16.msra.mxu0 %v1853
        %2067 = vmatprep.mubr.bf16.mxu0 %v1556
        %2068 = vmatmul.mubr.bf16.gmra.mxu0 %v1555
        %v2069 = vpop.f32.mrf.mxu0
        %v2070 = vadd.f32 %v1997, %v2069
        %v2071 = vpop.f32.mrf.mxu0
        %v2072 = vadd.f32 %v1999, %v2071
        %v2073 = vpop.f32.mrf.mxu0
        %v2074 = vadd.f32 %v2001, %v2073
        %v2075 = vpop.f32.mrf.mxu0
        %v2076 = vadd.f32 %v2003, %v2075
        %2077 = vmatprep.mubr.bf16.mxu0 %v1561
        %2078 = vmatmul.mubr.bf16.gmra.mxu0 %v1560
        %v2079 = vpop.f32.mrf.mxu0
        %v2080 = vadd.f32 %v2007, %v2079
        %v2081 = vpop.f32.mrf.mxu0
        %v2082 = vadd.f32 %v2009, %v2081
        %v2083 = vpop.f32.mrf.mxu0
        %v2084 = vadd.f32 %v2011, %v2083
        %v2085 = vpop.f32.mrf.mxu0
        %v2086 = vadd.f32 %v2013, %v2085
        %2087 = vmatprep.mubr.bf16.mxu0 %v1566
        %2088 = vmatmul.mubr.bf16.gmra.mxu0 %v1565
        %v2089 = vpop.f32.mrf.mxu0
        %v2090 = vadd.f32 %v2017, %v2089
        %v2091 = vpop.f32.mrf.mxu0
        %v2092 = vadd.f32 %v2019, %v2091
        %v2093 = vpop.f32.mrf.mxu0
        %v2094 = vadd.f32 %v2021, %v2093
        %v2095 = vpop.f32.mrf.mxu0
        %v2096 = vadd.f32 %v2023, %v2095
        %2097 = vmatprep.mubr.bf16.mxu0 %v1571
        %2098 = vmatmul.mubr.bf16.gmra.mxu0 %v1570
        %v2099 = vpop.f32.mrf.mxu0
        %v2100 = vadd.f32 %v2027, %v2099
        %v2101 = vpop.f32.mrf.mxu0
        %v2102 = vadd.f32 %v2029, %v2101
        %v2103 = vpop.f32.mrf.mxu0
        %v2104 = vadd.f32 %v2031, %v2103
        %v2105 = vpop.f32.mrf.mxu0
        %v2106 = vadd.f32 %v2033, %v2105
        %2107 = vdwg.mxu0
        %2108 = vmatprep.subr.bf16.mxu0 0
        %2109 = vmatpush1.bf16.msra.mxu0 0
        %2110 = vmatprep.subr.bf16.mxu0 0
        %2111 = vmatpush1.bf16.msra.mxu0 0
        %2112 = vmatprep.subr.bf16.mxu0 0
        %2113 = vmatpush1.bf16.msra.mxu0 0
        %2114 = vmatprep.subr.bf16.mxu0 0
        %2115 = vmatpush1.bf16.msra.mxu0 0
        %2116 = vmatprep.subr.bf16.mxu0 %v1876
        %2117 = vmatpush1.bf16.msra.mxu0 %v1875
        %2118 = vmatprep.subr.bf16.mxu0 %v1874
        %2119 = vmatpush1.bf16.msra.mxu0 %v1873
        %2120 = vmatprep.subr.bf16.mxu0 %v1872
        %2121 = vmatpush1.bf16.msra.mxu0 %v1871
        %2122 = vmatprep.subr.bf16.mxu0 %v1870
        %2123 = vmatpush1.bf16.msra.mxu0 %v1869
        %2124 = vmatprep.subr.bf16.mxu0 0
        %2125 = vmatpush2.bf16.msra.mxu0 0
        %2126 = vmatprep.subr.bf16.mxu0 0
        %2127 = vmatpush2.bf16.msra.mxu0 0
        %2128 = vmatprep.subr.bf16.mxu0 0
        %2129 = vmatpush2.bf16.msra.mxu0 0
        %2130 = vmatprep.subr.bf16.mxu0 0
        %2131 = vmatpush2.bf16.msra.mxu0 0
        %2132 = vmatprep.subr.bf16.mxu0 0
        %2133 = vmatpush2.bf16.msra.mxu0 0
        %2134 = vmatprep.subr.bf16.mxu0 0
        %2135 = vmatpush2.bf16.msra.mxu0 0
        %2136 = vmatprep.subr.bf16.mxu0 0
        %2137 = vmatpush2.bf16.msra.mxu0 0
        %2138 = vmatprep.subr.bf16.mxu0 0
        %2139 = vmatpush2.bf16.msra.mxu0 0
        %2140 = vmatprep.mubr.bf16.mxu0 0
        %2141 = vmatmul.mubr.bf16.gmra.mxu0 %v1951
        %v2142 = vpop.f32.mrf.mxu0
        %v2143 = vadd.f32 %v2070, %v2142
        %v2144 = vpop.f32.mrf.mxu0
        %v2145 = vadd.f32 %v2072, %v2144
        %v2146 = vpop.f32.mrf.mxu0
        %v2147 = vadd.f32 %v2074, %v2146
        %v2148 = vpop.f32.mrf.mxu0
        %v2149 = vadd.f32 %v2076, %v2148
        %2150 = vmatprep.mubr.bf16.mxu0 0
        %2151 = vmatmul.mubr.bf16.gmra.mxu0 %v1954
        %v2152 = vpop.f32.mrf.mxu0
        %v2153 = vadd.f32 %v2080, %v2152
        %v2154 = vpop.f32.mrf.mxu0
        %v2155 = vadd.f32 %v2082, %v2154
        %v2156 = vpop.f32.mrf.mxu0
        %v2157 = vadd.f32 %v2084, %v2156
        %v2158 = vpop.f32.mrf.mxu0
        %v2159 = vadd.f32 %v2086, %v2158
        %2160 = vmatprep.mubr.bf16.mxu0 0
        %2161 = vmatmul.mubr.bf16.gmra.mxu0 %v1957
        %v2162 = vpop.f32.mrf.mxu0
        %v2163 = vadd.f32 %v2090, %v2162
        %v2164 = vpop.f32.mrf.mxu0
        %v2165 = vadd.f32 %v2092, %v2164
        %v2166 = vpop.f32.mrf.mxu0
        %v2167 = vadd.f32 %v2094, %v2166
        %v2168 = vpop.f32.mrf.mxu0
        %v2169 = vadd.f32 %v2096, %v2168
        %2170 = vmatprep.mubr.bf16.mxu0 0
        %2171 = vmatmul.mubr.bf16.gmra.mxu0 %v1960
        %v2172 = vpop.f32.mrf.mxu0
        %v2173 = vadd.f32 %v2100, %v2172
        %v2174 = vpop.f32.mrf.mxu0
        %v2175 = vadd.f32 %v2102, %v2174
        %v2176 = vpop.f32.mrf.mxu0
        %v2177 = vadd.f32 %v2104, %v2176
        %v2178 = vpop.f32.mrf.mxu0
        %v2179 = vadd.f32 %v2106, %v2178
        %2180 = vdwg.mxu0
        %v2181 = vmax.f32 %v2143, 0.0
        %v2182 = vmax.f32 %v2145, 0.0
        %v2183 = vmax.f32 %v2147, 0.0
        %v2184 = vmax.f32 %v2149, 0.0
        %v2185 = vmax.f32 %v2153, 0.0
        %v2186 = vmax.f32 %v2155, 0.0
        %v2187 = vmax.f32 %v2157, 0.0
        %v2188 = vmax.f32 %v2159, 0.0
        %v2189 = vmax.f32 %v2163, 0.0
        %v2190 = vmax.f32 %v2165, 0.0
        %v2191 = vmax.f32 %v2167, 0.0
        %v2192 = vmax.f32 %v2169, 0.0
        %v2193 = vmax.f32 %v2173, 0.0
        %v2194 = vmax.f32 %v2175, 0.0
        %v2195 = vmax.f32 %v2177, 0.0
        %v2196 = vmax.f32 %v2179, 0.0
        %2197 = vst [vmem:[#allocation3] sm:$0xff] %v2181
        %2198 = vst [vmem:[#allocation3 + $0x8] sm:$0xff] %v2182
        %2199 = vst [vmem:[#allocation3 + $0x10] sm:$0xff] %v2183
        %2200 = vst [vmem:[#allocation3 + $0x18] sm:$0xff] %v2184
        %2201 = vst [vmem:[#allocation3 + $0x20] sm:$0xff] %v2185
        %2202 = vst [vmem:[#allocation3 + $0x28] sm:$0xff] %v2186
        %2203 = vst [vmem:[#allocation3 + $0x30] sm:$0xff] %v2187
        %2204 = vst [vmem:[#allocation3 + $0x38] sm:$0xff] %v2188
        %2205 = vst [vmem:[#allocation3 + $0x40] sm:$0xff] %v2189
        %2206 = vst [vmem:[#allocation3 + $0x48] sm:$0xff] %v2190
        %2207 = vst [vmem:[#allocation3 + $0x50] sm:$0xff] %v2191
        %2208 = vst [vmem:[#allocation3 + $0x58] sm:$0xff] %v2192
        %2209 = vst [vmem:[#allocation3 + $0x60] sm:$0xff] %v2193
        %2210 = vst [vmem:[#allocation3 + $0x68] sm:$0xff] %v2194
        %2211 = vst [vmem:[#allocation3 + $0x70] sm:$0xff] %v2195
        %2212 = vst [vmem:[#allocation3 + $0x78] sm:$0xff] %v2196
        %v2213 = vld [vmem:[#allocation3] sm:$0xff]
        %v2214 = vld [vmem:[#allocation3 + $0x8] sm:$0xff]
        %v2215 = vld [vmem:[#allocation3 + $0x10] sm:$0xff]
        %v2216 = vld [vmem:[#allocation3 + $0x18] sm:$0xff]
        %v2217 = vld [vmem:[#allocation3 + $0x20] sm:$0xff]
        %v2218 = vld [vmem:[#allocation3 + $0x28] sm:$0xff]
        %v2219 = vld [vmem:[#allocation3 + $0x30] sm:$0xff]
        %v2220 = vld [vmem:[#allocation3 + $0x38] sm:$0xff]
        %v2221 = vld [vmem:[#allocation3 + $0x40] sm:$0xff]
        %v2222 = vld [vmem:[#allocation3 + $0x48] sm:$0xff]
        %v2223 = vld [vmem:[#allocation3 + $0x50] sm:$0xff]
        %v2224 = vld [vmem:[#allocation3 + $0x58] sm:$0xff]
        %v2225 = vld [vmem:[#allocation3 + $0x60] sm:$0xff]
        %v2226 = vld [vmem:[#allocation3 + $0x68] sm:$0xff]
        %v2227 = vld [vmem:[#allocation3 + $0x70] sm:$0xff]
        %v2228 = vld [vmem:[#allocation3 + $0x78] sm:$0xff]
        %2229 = vrot.lane.b32.xlu0 %v2213, 16
        %v2230 = vpop.permute.xlu0 %2229
        %2231 = vrot.lane.b32.xlu0 %v2215, 16
        %v2232 = vpop.permute.xlu0 %2231
        %2233 = vrot.lane.b32.xlu0 %v2217, 16
        %v2234 = vpop.permute.xlu0 %2233
        %2235 = vrot.lane.b32.xlu0 %v2219, 16
        %v2236 = vpop.permute.xlu0 %2235
        %2237 = vrot.lane.b32.xlu0 %v2221, 16
        %v2238 = vpop.permute.xlu0 %2237
        %2239 = vrot.lane.b32.xlu0 %v2223, 16
        %v2240 = vpop.permute.xlu0 %2239
        %2241 = vrot.lane.b32.xlu0 %v2225, 16
        %v2242 = vpop.permute.xlu0 %2241
        %2243 = vrot.lane.b32.xlu0 %v2227, 16
        %v2244 = vpop.permute.xlu0 %2243
        %2245 = vrot.lane.b32.xlu0 %v2214, 16
        %v2246 = vpop.permute.xlu0 %2245
        %2247 = vrot.lane.b32.xlu0 %v2216, 16
        %v2248 = vpop.permute.xlu0 %2247
        %2249 = vrot.lane.b32.xlu0 %v2218, 16
        %v2250 = vpop.permute.xlu0 %2249
        %2251 = vrot.lane.b32.xlu0 %v2220, 16
        %v2252 = vpop.permute.xlu0 %2251
        %2253 = vrot.lane.b32.xlu0 %v2222, 16
        %v2254 = vpop.permute.xlu0 %2253
        %2255 = vrot.lane.b32.xlu0 %v2224, 16
        %v2256 = vpop.permute.xlu0 %2255
        %2257 = vrot.lane.b32.xlu0 %v2226, 16
        %v2258 = vpop.permute.xlu0 %2257
        %2259 = vrot.lane.b32.xlu0 %v2228, 16
        %v2260 = vpop.permute.xlu0 %2259
        %v2261 = vsel %vm286, %v2230, %v2246
        %v2262 = vsel %vm286, %v2232, %v2248
        %v2263 = vsel %vm286, %v2234, %v2250
        %v2264 = vsel %vm286, %v2236, %v2252
        %v2265 = vsel %vm286, %v2238, %v2254
        %v2266 = vsel %vm286, %v2240, %v2256
        %v2267 = vsel %vm286, %v2242, %v2258
        %v2268 = vsel %vm286, %v2244, %v2260
        %v2269 = vsel %vm286, %v2246, %v2230
        %v2270 = vsel %vm286, %v2248, %v2232
        %v2271 = vsel %vm286, %v2250, %v2234
        %v2272 = vsel %vm286, %v2252, %v2236
        %v2273 = vsel %vm286, %v2254, %v2238
        %v2274 = vsel %vm286, %v2256, %v2240
        %v2275 = vsel %vm286, %v2258, %v2242
        %v2276 = vsel %vm286, %v2260, %v2244
        %v2277 = vsel %vm360, %v2213, %v2269
        %v2278 = vsel %vm361, %v2214, %v2261
        %v2279 = vsel %vm360, %v2215, %v2270
        %v2280 = vsel %vm361, %v2216, %v2262
        %v2281 = vsel %vm360, %v2217, %v2271
        %v2282 = vsel %vm361, %v2218, %v2263
        %v2283 = vsel %vm360, %v2219, %v2272
        %v2284 = vsel %vm361, %v2220, %v2264
        %v2285 = vsel %vm360, %v2221, %v2273
        %v2286 = vsel %vm361, %v2222, %v2265
        %v2287 = vsel %vm360, %v2223, %v2274
        %v2288 = vsel %vm361, %v2224, %v2266
        %v2289 = vsel %vm360, %v2225, %v2275
        %v2290 = vsel %vm361, %v2226, %v2267
        %v2291 = vsel %vm360, %v2227, %v2276
        %v2292 = vsel %vm361, %v2228, %v2268
        %2293 = vrot.lane.b32.xlu0 %v2277, 1
        %v2294 = vpop.permute.xlu0 %2293
        %2295 = vrot.lane.b32.xlu0 %v2279, 1
        %v2296 = vpop.permute.xlu0 %2295
        %2297 = vrot.lane.b32.xlu0 %v2281, 1
        %v2298 = vpop.permute.xlu0 %2297
        %2299 = vrot.lane.b32.xlu0 %v2283, 1
        %v2300 = vpop.permute.xlu0 %2299
        %2301 = vrot.lane.b32.xlu0 %v2285, 1
        %v2302 = vpop.permute.xlu0 %2301
        %2303 = vrot.lane.b32.xlu0 %v2287, 1
        %v2304 = vpop.permute.xlu0 %2303
        %2305 = vrot.lane.b32.xlu0 %v2289, 1
        %v2306 = vpop.permute.xlu0 %2305
        %2307 = vrot.lane.b32.xlu0 %v2291, 1
        %v2308 = vpop.permute.xlu0 %2307
        %2309 = vrot.lane.b32.xlu0 %v2278, 1
        %v2310 = vpop.permute.xlu0 %2309
        %2311 = vrot.lane.b32.xlu0 %v2280, 1
        %v2312 = vpop.permute.xlu0 %2311
        %2313 = vrot.lane.b32.xlu0 %v2282, 1
        %v2314 = vpop.permute.xlu0 %2313
        %2315 = vrot.lane.b32.xlu0 %v2284, 1
        %v2316 = vpop.permute.xlu0 %2315
        %2317 = vrot.lane.b32.xlu0 %v2286, 1
        %v2318 = vpop.permute.xlu0 %2317
        %2319 = vrot.lane.b32.xlu0 %v2288, 1
        %v2320 = vpop.permute.xlu0 %2319
        %2321 = vrot.lane.b32.xlu0 %v2290, 1
        %v2322 = vpop.permute.xlu0 %2321
        %2323 = vrot.lane.b32.xlu0 %v2292, 1
        %v2324 = vpop.permute.xlu0 %2323
        %v2325 = vsel %vm410, %v2294, %v2310
        %v2326 = vsel %vm410, %v2296, %v2312
        %v2327 = vsel %vm410, %v2298, %v2314
        %v2328 = vsel %vm410, %v2300, %v2316
        %v2329 = vsel %vm410, %v2302, %v2318
        %v2330 = vsel %vm410, %v2304, %v2320
        %v2331 = vsel %vm410, %v2306, %v2322
        %v2332 = vsel %vm410, %v2308, %v2324
        %v2333 = vsel %vm410, %v2310, %v2294
        %v2334 = vsel %vm410, %v2312, %v2296
        %v2335 = vsel %vm410, %v2314, %v2298
        %v2336 = vsel %vm410, %v2316, %v2300
        %v2337 = vsel %vm410, %v2318, %v2302
        %v2338 = vsel %vm410, %v2320, %v2304
        %v2339 = vsel %vm410, %v2322, %v2306
        %v2340 = vsel %vm410, %v2324, %v2308
        %v2341 = vsel %vm429, %v2277, %v2333
        %v2342 = vsel %vm430, %v2278, %v2325
        %v2343 = vsel %vm429, %v2279, %v2334
        %v2344 = vsel %vm430, %v2280, %v2326
        %v2345 = vsel %vm429, %v2281, %v2335
        %v2346 = vsel %vm430, %v2282, %v2327
        %v2347 = vsel %vm429, %v2283, %v2336
        %v2348 = vsel %vm430, %v2284, %v2328
        %v2349 = vsel %vm429, %v2285, %v2337
        %v2350 = vsel %vm430, %v2286, %v2329
        %v2351 = vsel %vm429, %v2287, %v2338
        %v2352 = vsel %vm430, %v2288, %v2330
        %v2353 = vsel %vm429, %v2289, %v2339
        %v2354 = vsel %vm430, %v2290, %v2331
        %v2355 = vsel %vm429, %v2291, %v2340
        %v2356 = vsel %vm430, %v2292, %v2332
        %v2357 = vpack.c.bf16 %v2343, %v2341
        %v2358 = vpack.c.bf16 %v2344, %v2342
        %v2359 = vpack.c.bf16 %v2347, %v2345
        %v2360 = vpack.c.bf16 %v2348, %v2346
        %v2361 = vpack.c.bf16 %v2351, %v2349
        %v2362 = vpack.c.bf16 %v2352, %v2350
        %v2363 = vpack.c.bf16 %v2355, %v2353
        %v2364 = vpack.c.bf16 %v2356, %v2354
        %v2373 = vunpack.c.l.b16 %v2357
        %v2374 = vunpack.c.l.b16 %v2358
        %v2375 = vunpack.c.h.b16 %v2357
        %v2376 = vunpack.c.h.b16 %v2358
        %v2377 = vunpack.c.l.b16 %v2359
        %v2378 = vunpack.c.l.b16 %v2360
        %v2379 = vunpack.c.h.b16 %v2359
        %v2380 = vunpack.c.h.b16 %v2360
        %v2381 = vunpack.c.l.b16 %v2361
        %v2382 = vunpack.c.l.b16 %v2362
        %v2383 = vunpack.c.h.b16 %v2361
        %v2384 = vunpack.c.h.b16 %v2362
        %v2385 = vunpack.c.l.b16 %v2363
        %v2386 = vunpack.c.l.b16 %v2364
        %v2387 = vunpack.c.h.b16 %v2363
        %v2388 = vunpack.c.h.b16 %v2364
        %v2389 = vpack.c.b16 %v2374, %v2373
        %v2390 = vpack.c.b16 %v2376, %v2375
        %v2391 = vpack.c.b16 %v2378, %v2377
        %v2392 = vpack.c.b16 %v2380, %v2379
        %v2393 = vpack.c.b16 %v2382, %v2381
        %v2394 = vpack.c.b16 %v2384, %v2383
        %v2395 = vpack.c.b16 %v2386, %v2385
        %v2396 = vpack.c.b16 %v2388, %v2387
        %2405 = vst [vmem:[#allocation2] sm:$0xff] %v2389
        %2406 = vst [vmem:[#allocation2 + $0x8] sm:$0xff] %v2390
        %2407 = vst [vmem:[#allocation2 + $0x10] sm:$0xff] %v2391
        %2408 = vst [vmem:[#allocation2 + $0x18] sm:$0xff] %v2392
        %2409 = vst [vmem:[#allocation2 + $0x20] sm:$0xff] %v2393
        %2410 = vst [vmem:[#allocation2 + $0x28] sm:$0xff] %v2394
        %2411 = vst [vmem:[#allocation2 + $0x30] sm:$0xff] %v2395
        %2412 = vst [vmem:[#allocation2 + $0x38] sm:$0xff] %v2396
        %v2413 = vpack.c.bf16 %v2279, %v2277
        %v2414 = vpack.c.bf16 %v2280, %v2278
        %v2415 = vpack.c.bf16 %v2283, %v2281
        %v2416 = vpack.c.bf16 %v2284, %v2282
        %v2417 = vpack.c.bf16 %v2287, %v2285
        %v2418 = vpack.c.bf16 %v2288, %v2286
        %v2419 = vpack.c.bf16 %v2291, %v2289
        %v2420 = vpack.c.bf16 %v2292, %v2290
        %v2429 = vunpack.c.l.b16 %v2413
        %v2430 = vunpack.c.l.b16 %v2414
        %v2431 = vunpack.c.h.b16 %v2413
        %v2432 = vunpack.c.h.b16 %v2414
        %v2433 = vunpack.c.l.b16 %v2415
        %v2434 = vunpack.c.l.b16 %v2416
        %v2435 = vunpack.c.h.b16 %v2415
        %v2436 = vunpack.c.h.b16 %v2416
        %v2437 = vunpack.c.l.b16 %v2417
        %v2438 = vunpack.c.l.b16 %v2418
        %v2439 = vunpack.c.h.b16 %v2417
        %v2440 = vunpack.c.h.b16 %v2418
        %v2441 = vunpack.c.l.b16 %v2419
        %v2442 = vunpack.c.l.b16 %v2420
        %v2443 = vunpack.c.h.b16 %v2419
        %v2444 = vunpack.c.h.b16 %v2420
        %v2445 = vpack.c.b16 %v2430, %v2429
        %v2446 = vpack.c.b16 %v2432, %v2431
        %v2447 = vpack.c.b16 %v2434, %v2433
        %v2448 = vpack.c.b16 %v2436, %v2435
        %v2449 = vpack.c.b16 %v2438, %v2437
        %v2450 = vpack.c.b16 %v2440, %v2439
        %v2451 = vpack.c.b16 %v2442, %v2441
        %v2452 = vpack.c.b16 %v2444, %v2443
        %2461 = vst [vmem:[#allocation2 + $0x40] sm:$0xff] %v2445
        %2462 = vst [vmem:[#allocation2 + $0x48] sm:$0xff] %v2446
        %2463 = vst [vmem:[#allocation2 + $0x50] sm:$0xff] %v2447
        %2464 = vst [vmem:[#allocation2 + $0x58] sm:$0xff] %v2448
        %2465 = vst [vmem:[#allocation2 + $0x60] sm:$0xff] %v2449
        %2466 = vst [vmem:[#allocation2 + $0x68] sm:$0xff] %v2450
        %2467 = vst [vmem:[#allocation2 + $0x70] sm:$0xff] %v2451
        %2468 = vst [vmem:[#allocation2 + $0x78] sm:$0xff] %v2452
        %2469 = vrot.lane.b32.xlu0 %v2277, 127
        %v2470 = vpop.permute.xlu0 %2469
        %2471 = vrot.lane.b32.xlu0 %v2279, 127
        %v2472 = vpop.permute.xlu0 %2471
        %2473 = vrot.lane.b32.xlu0 %v2281, 127
        %v2474 = vpop.permute.xlu0 %2473
        %2475 = vrot.lane.b32.xlu0 %v2283, 127
        %v2476 = vpop.permute.xlu0 %2475
        %2477 = vrot.lane.b32.xlu0 %v2285, 127
        %v2478 = vpop.permute.xlu0 %2477
        %2479 = vrot.lane.b32.xlu0 %v2287, 127
        %v2480 = vpop.permute.xlu0 %2479
        %2481 = vrot.lane.b32.xlu0 %v2289, 127
        %v2482 = vpop.permute.xlu0 %2481
        %2483 = vrot.lane.b32.xlu0 %v2291, 127
        %v2484 = vpop.permute.xlu0 %2483
        %2485 = vrot.lane.b32.xlu0 %v2278, 127
        %v2486 = vpop.permute.xlu0 %2485
        %2487 = vrot.lane.b32.xlu0 %v2280, 127
        %v2488 = vpop.permute.xlu0 %2487
        %2489 = vrot.lane.b32.xlu0 %v2282, 127
        %v2490 = vpop.permute.xlu0 %2489
        %2491 = vrot.lane.b32.xlu0 %v2284, 127
        %v2492 = vpop.permute.xlu0 %2491
        %2493 = vrot.lane.b32.xlu0 %v2286, 127
        %v2494 = vpop.permute.xlu0 %2493
        %2495 = vrot.lane.b32.xlu0 %v2288, 127
        %v2496 = vpop.permute.xlu0 %2495
        %2497 = vrot.lane.b32.xlu0 %v2290, 127
        %v2498 = vpop.permute.xlu0 %2497
        %2499 = vrot.lane.b32.xlu0 %v2292, 127
        %v2500 = vpop.permute.xlu0 %2499
        %v2501 = vsel %vm591, %v2470, %v2486
        %v2502 = vsel %vm591, %v2472, %v2488
        %v2503 = vsel %vm591, %v2474, %v2490
        %v2504 = vsel %vm591, %v2476, %v2492
        %v2505 = vsel %vm591, %v2478, %v2494
        %v2506 = vsel %vm591, %v2480, %v2496
        %v2507 = vsel %vm591, %v2482, %v2498
        %v2508 = vsel %vm591, %v2484, %v2500
        %v2509 = vsel %vm591, %v2486, %v2470
        %v2510 = vsel %vm591, %v2488, %v2472
        %v2511 = vsel %vm591, %v2490, %v2474
        %v2512 = vsel %vm591, %v2492, %v2476
        %v2513 = vsel %vm591, %v2494, %v2478
        %v2514 = vsel %vm591, %v2496, %v2480
        %v2515 = vsel %vm591, %v2498, %v2482
        %v2516 = vsel %vm591, %v2500, %v2484
        %v2517 = vsel %vm610, %v2277, %v2501
        %v2518 = vsel %vm611, %v2278, %v2509
        %v2519 = vsel %vm610, %v2279, %v2502
        %v2520 = vsel %vm611, %v2280, %v2510
        %v2521 = vsel %vm610, %v2281, %v2503
        %v2522 = vsel %vm611, %v2282, %v2511
        %v2523 = vsel %vm610, %v2283, %v2504
        %v2524 = vsel %vm611, %v2284, %v2512
        %v2525 = vsel %vm610, %v2285, %v2505
        %v2526 = vsel %vm611, %v2286, %v2513
        %v2527 = vsel %vm610, %v2287, %v2506
        %v2528 = vsel %vm611, %v2288, %v2514
        %v2529 = vsel %vm610, %v2289, %v2507
        %v2530 = vsel %vm611, %v2290, %v2515
        %v2531 = vsel %vm610, %v2291, %v2508
        %v2532 = vsel %vm611, %v2292, %v2516
        %v2533 = vpack.c.bf16 %v2519, %v2517
        %v2534 = vpack.c.bf16 %v2520, %v2518
        %v2535 = vpack.c.bf16 %v2523, %v2521
        %v2536 = vpack.c.bf16 %v2524, %v2522
        %v2537 = vpack.c.bf16 %v2527, %v2525
        %v2538 = vpack.c.bf16 %v2528, %v2526
        %v2539 = vpack.c.bf16 %v2531, %v2529
        %v2540 = vpack.c.bf16 %v2532, %v2530
        %v2549 = vunpack.c.l.b16 %v2533
        %v2550 = vunpack.c.l.b16 %v2534
        %v2551 = vunpack.c.h.b16 %v2533
        %v2552 = vunpack.c.h.b16 %v2534
        %v2553 = vunpack.c.l.b16 %v2535
        %v2554 = vunpack.c.l.b16 %v2536
        %v2555 = vunpack.c.h.b16 %v2535
        %v2556 = vunpack.c.h.b16 %v2536
        %v2557 = vunpack.c.l.b16 %v2537
        %v2558 = vunpack.c.l.b16 %v2538
        %v2559 = vunpack.c.h.b16 %v2537
        %v2560 = vunpack.c.h.b16 %v2538
        %v2561 = vunpack.c.l.b16 %v2539
        %v2562 = vunpack.c.l.b16 %v2540
        %v2563 = vunpack.c.h.b16 %v2539
        %v2564 = vunpack.c.h.b16 %v2540
        %v2565 = vpack.c.b16 %v2550, %v2549
        %v2566 = vpack.c.b16 %v2552, %v2551
        %v2567 = vpack.c.b16 %v2554, %v2553
        %v2568 = vpack.c.b16 %v2556, %v2555
        %v2569 = vpack.c.b16 %v2558, %v2557
        %v2570 = vpack.c.b16 %v2560, %v2559
        %v2571 = vpack.c.b16 %v2562, %v2561
        %v2572 = vpack.c.b16 %v2564, %v2563
        %2581 = vst [vmem:[#allocation2 + $0x80] sm:$0xff] %v2565
        %2582 = vst [vmem:[#allocation2 + $0x88] sm:$0xff] %v2566
        %2583 = vst [vmem:[#allocation2 + $0x90] sm:$0xff] %v2567
        %2584 = vst [vmem:[#allocation2 + $0x98] sm:$0xff] %v2568
        %2585 = vst [vmem:[#allocation2 + $0xa0] sm:$0xff] %v2569
        %2586 = vst [vmem:[#allocation2 + $0xa8] sm:$0xff] %v2570
        %2587 = vst [vmem:[#allocation2 + $0xb0] sm:$0xff] %v2571
        %2588 = vst [vmem:[#allocation2 + $0xb8] sm:$0xff] %v2572
        %2589 = vrot.lane.b32.xlu0 %v2213, 1
        %v2590 = vpop.permute.xlu0 %2589
        %2591 = vrot.lane.b32.xlu0 %v2215, 1
        %v2592 = vpop.permute.xlu0 %2591
        %2593 = vrot.lane.b32.xlu0 %v2217, 1
        %v2594 = vpop.permute.xlu0 %2593
        %2595 = vrot.lane.b32.xlu0 %v2219, 1
        %v2596 = vpop.permute.xlu0 %2595
        %2597 = vrot.lane.b32.xlu0 %v2221, 1
        %v2598 = vpop.permute.xlu0 %2597
        %2599 = vrot.lane.b32.xlu0 %v2223, 1
        %v2600 = vpop.permute.xlu0 %2599
        %2601 = vrot.lane.b32.xlu0 %v2225, 1
        %v2602 = vpop.permute.xlu0 %2601
        %2603 = vrot.lane.b32.xlu0 %v2227, 1
        %v2604 = vpop.permute.xlu0 %2603
        %2605 = vrot.lane.b32.xlu0 %v2214, 1
        %v2606 = vpop.permute.xlu0 %2605
        %2607 = vrot.lane.b32.xlu0 %v2216, 1
        %v2608 = vpop.permute.xlu0 %2607
        %2609 = vrot.lane.b32.xlu0 %v2218, 1
        %v2610 = vpop.permute.xlu0 %2609
        %2611 = vrot.lane.b32.xlu0 %v2220, 1
        %v2612 = vpop.permute.xlu0 %2611
        %2613 = vrot.lane.b32.xlu0 %v2222, 1
        %v2614 = vpop.permute.xlu0 %2613
        %2615 = vrot.lane.b32.xlu0 %v2224, 1
        %v2616 = vpop.permute.xlu0 %2615
        %2617 = vrot.lane.b32.xlu0 %v2226, 1
        %v2618 = vpop.permute.xlu0 %2617
        %2619 = vrot.lane.b32.xlu0 %v2228, 1
        %v2620 = vpop.permute.xlu0 %2619
        %v2621 = vsel %vm410, %v2590, %v2606
        %v2622 = vsel %vm410, %v2592, %v2608
        %v2623 = vsel %vm410, %v2594, %v2610
        %v2624 = vsel %vm410, %v2596, %v2612
        %v2625 = vsel %vm410, %v2598, %v2614
        %v2626 = vsel %vm410, %v2600, %v2616
        %v2627 = vsel %vm410, %v2602, %v2618
        %v2628 = vsel %vm410, %v2604, %v2620
        %v2629 = vsel %vm410, %v2606, %v2590
        %v2630 = vsel %vm410, %v2608, %v2592
        %v2631 = vsel %vm410, %v2610, %v2594
        %v2632 = vsel %vm410, %v2612, %v2596
        %v2633 = vsel %vm410, %v2614, %v2598
        %v2634 = vsel %vm410, %v2616, %v2600
        %v2635 = vsel %vm410, %v2618, %v2602
        %v2636 = vsel %vm410, %v2620, %v2604
        %v2637 = vsel %vm429, %v2213, %v2629
        %v2638 = vsel %vm430, %v2214, %v2621
        %v2639 = vsel %vm429, %v2215, %v2630
        %v2640 = vsel %vm430, %v2216, %v2622
        %v2641 = vsel %vm429, %v2217, %v2631
        %v2642 = vsel %vm430, %v2218, %v2623
        %v2643 = vsel %vm429, %v2219, %v2632
        %v2644 = vsel %vm430, %v2220, %v2624
        %v2645 = vsel %vm429, %v2221, %v2633
        %v2646 = vsel %vm430, %v2222, %v2625
        %v2647 = vsel %vm429, %v2223, %v2634
        %v2648 = vsel %vm430, %v2224, %v2626
        %v2649 = vsel %vm429, %v2225, %v2635
        %v2650 = vsel %vm430, %v2226, %v2627
        %v2651 = vsel %vm429, %v2227, %v2636
        %v2652 = vsel %vm430, %v2228, %v2628
        %v2653 = vpack.c.bf16 %v2639, %v2637
        %v2654 = vpack.c.bf16 %v2640, %v2638
        %v2655 = vpack.c.bf16 %v2643, %v2641
        %v2656 = vpack.c.bf16 %v2644, %v2642
        %v2657 = vpack.c.bf16 %v2647, %v2645
        %v2658 = vpack.c.bf16 %v2648, %v2646
        %v2659 = vpack.c.bf16 %v2651, %v2649
        %v2660 = vpack.c.bf16 %v2652, %v2650
        %v2669 = vunpack.c.l.b16 %v2653
        %v2670 = vunpack.c.l.b16 %v2654
        %v2671 = vunpack.c.h.b16 %v2653
        %v2672 = vunpack.c.h.b16 %v2654
        %v2673 = vunpack.c.l.b16 %v2655
        %v2674 = vunpack.c.l.b16 %v2656
        %v2675 = vunpack.c.h.b16 %v2655
        %v2676 = vunpack.c.h.b16 %v2656
        %v2677 = vunpack.c.l.b16 %v2657
        %v2678 = vunpack.c.l.b16 %v2658
        %v2679 = vunpack.c.h.b16 %v2657
        %v2680 = vunpack.c.h.b16 %v2658
        %v2681 = vunpack.c.l.b16 %v2659
        %v2682 = vunpack.c.l.b16 %v2660
        %v2683 = vunpack.c.h.b16 %v2659
        %v2684 = vunpack.c.h.b16 %v2660
        %v2685 = vpack.c.b16 %v2670, %v2669
        %v2686 = vpack.c.b16 %v2672, %v2671
        %v2687 = vpack.c.b16 %v2674, %v2673
        %v2688 = vpack.c.b16 %v2676, %v2675
        %v2689 = vpack.c.b16 %v2678, %v2677
        %v2690 = vpack.c.b16 %v2680, %v2679
        %v2691 = vpack.c.b16 %v2682, %v2681
        %v2692 = vpack.c.b16 %v2684, %v2683
        %2701 = vst [vmem:[#allocation2 + $0xc0] sm:$0xff] %v2685
        %2702 = vst [vmem:[#allocation2 + $0xc8] sm:$0xff] %v2686
        %2703 = vst [vmem:[#allocation2 + $0xd0] sm:$0xff] %v2687
        %2704 = vst [vmem:[#allocation2 + $0xd8] sm:$0xff] %v2688
        %2705 = vst [vmem:[#allocation2 + $0xe0] sm:$0xff] %v2689
        %2706 = vst [vmem:[#allocation2 + $0xe8] sm:$0xff] %v2690
        %2707 = vst [vmem:[#allocation2 + $0xf0] sm:$0xff] %v2691
        %2708 = vst [vmem:[#allocation2 + $0xf8] sm:$0xff] %v2692
        %v2709 = vpack.c.bf16 %v2215, %v2213
        %v2710 = vpack.c.bf16 %v2216, %v2214
        %v2711 = vpack.c.bf16 %v2219, %v2217
        %v2712 = vpack.c.bf16 %v2220, %v2218
        %v2713 = vpack.c.bf16 %v2223, %v2221
        %v2714 = vpack.c.bf16 %v2224, %v2222
        %v2715 = vpack.c.bf16 %v2227, %v2225
        %v2716 = vpack.c.bf16 %v2228, %v2226
        %v2725 = vunpack.c.l.b16 %v2709
        %v2726 = vunpack.c.l.b16 %v2710
        %v2727 = vunpack.c.h.b16 %v2709
        %v2728 = vunpack.c.h.b16 %v2710
        %v2729 = vunpack.c.l.b16 %v2711
        %v2730 = vunpack.c.l.b16 %v2712
        %v2731 = vunpack.c.h.b16 %v2711
        %v2732 = vunpack.c.h.b16 %v2712
        %v2733 = vunpack.c.l.b16 %v2713
        %v2734 = vunpack.c.l.b16 %v2714
        %v2735 = vunpack.c.h.b16 %v2713
        %v2736 = vunpack.c.h.b16 %v2714
        %v2737 = vunpack.c.l.b16 %v2715
        %v2738 = vunpack.c.l.b16 %v2716
        %v2739 = vunpack.c.h.b16 %v2715
        %v2740 = vunpack.c.h.b16 %v2716
        %v2741 = vpack.c.b16 %v2726, %v2725
        %v2742 = vpack.c.b16 %v2728, %v2727
        %v2743 = vpack.c.b16 %v2730, %v2729
        %v2744 = vpack.c.b16 %v2732, %v2731
        %v2745 = vpack.c.b16 %v2734, %v2733
        %v2746 = vpack.c.b16 %v2736, %v2735
        %v2747 = vpack.c.b16 %v2738, %v2737
        %v2748 = vpack.c.b16 %v2740, %v2739
        %2757 = vst [vmem:[#allocation2 + $0x100] sm:$0xff] %v2741
        %2758 = vst [vmem:[#allocation2 + $0x108] sm:$0xff] %v2742
        %2759 = vst [vmem:[#allocation2 + $0x110] sm:$0xff] %v2743
        %2760 = vst [vmem:[#allocation2 + $0x118] sm:$0xff] %v2744
        %2761 = vst [vmem:[#allocation2 + $0x120] sm:$0xff] %v2745
        %2762 = vst [vmem:[#allocation2 + $0x128] sm:$0xff] %v2746
        %2763 = vst [vmem:[#allocation2 + $0x130] sm:$0xff] %v2747
        %2764 = vst [vmem:[#allocation2 + $0x138] sm:$0xff] %v2748
        %2765 = vrot.lane.b32.xlu0 %v2213, 127
        %v2766 = vpop.permute.xlu0 %2765
        %2767 = vrot.lane.b32.xlu0 %v2215, 127
        %v2768 = vpop.permute.xlu0 %2767
        %2769 = vrot.lane.b32.xlu0 %v2217, 127
        %v2770 = vpop.permute.xlu0 %2769
        %2771 = vrot.lane.b32.xlu0 %v2219, 127
        %v2772 = vpop.permute.xlu0 %2771
        %2773 = vrot.lane.b32.xlu0 %v2221, 127
        %v2774 = vpop.permute.xlu0 %2773
        %2775 = vrot.lane.b32.xlu0 %v2223, 127
        %v2776 = vpop.permute.xlu0 %2775
        %2777 = vrot.lane.b32.xlu0 %v2225, 127
        %v2778 = vpop.permute.xlu0 %2777
        %2779 = vrot.lane.b32.xlu0 %v2227, 127
        %v2780 = vpop.permute.xlu0 %2779
        %2781 = vrot.lane.b32.xlu0 %v2214, 127
        %v2782 = vpop.permute.xlu0 %2781
        %2783 = vrot.lane.b32.xlu0 %v2216, 127
        %v2784 = vpop.permute.xlu0 %2783
        %2785 = vrot.lane.b32.xlu0 %v2218, 127
        %v2786 = vpop.permute.xlu0 %2785
        %2787 = vrot.lane.b32.xlu0 %v2220, 127
        %v2788 = vpop.permute.xlu0 %2787
        %2789 = vrot.lane.b32.xlu0 %v2222, 127
        %v2790 = vpop.permute.xlu0 %2789
        %2791 = vrot.lane.b32.xlu0 %v2224, 127
        %v2792 = vpop.permute.xlu0 %2791
        %2793 = vrot.lane.b32.xlu0 %v2226, 127
        %v2794 = vpop.permute.xlu0 %2793
        %2795 = vrot.lane.b32.xlu0 %v2228, 127
        %v2796 = vpop.permute.xlu0 %2795
        %v2797 = vsel %vm591, %v2766, %v2782
        %v2798 = vsel %vm591, %v2768, %v2784
        %v2799 = vsel %vm591, %v2770, %v2786
        %v2800 = vsel %vm591, %v2772, %v2788
        %v2801 = vsel %vm591, %v2774, %v2790
        %v2802 = vsel %vm591, %v2776, %v2792
        %v2803 = vsel %vm591, %v2778, %v2794
        %v2804 = vsel %vm591, %v2780, %v2796
        %v2805 = vsel %vm591, %v2782, %v2766
        %v2806 = vsel %vm591, %v2784, %v2768
        %v2807 = vsel %vm591, %v2786, %v2770
        %v2808 = vsel %vm591, %v2788, %v2772
        %v2809 = vsel %vm591, %v2790, %v2774
        %v2810 = vsel %vm591, %v2792, %v2776
        %v2811 = vsel %vm591, %v2794, %v2778
        %v2812 = vsel %vm591, %v2796, %v2780
        %v2813 = vsel %vm610, %v2213, %v2797
        %v2814 = vsel %vm611, %v2214, %v2805
        %v2815 = vsel %vm610, %v2215, %v2798
        %v2816 = vsel %vm611, %v2216, %v2806
        %v2817 = vsel %vm610, %v2217, %v2799
        %v2818 = vsel %vm611, %v2218, %v2807
        %v2819 = vsel %vm610, %v2219, %v2800
        %v2820 = vsel %vm611, %v2220, %v2808
        %v2821 = vsel %vm610, %v2221, %v2801
        %v2822 = vsel %vm611, %v2222, %v2809
        %v2823 = vsel %vm610, %v2223, %v2802
        %v2824 = vsel %vm611, %v2224, %v2810
        %v2825 = vsel %vm610, %v2225, %v2803
        %v2826 = vsel %vm611, %v2226, %v2811
        %v2827 = vsel %vm610, %v2227, %v2804
        %v2828 = vsel %vm611, %v2228, %v2812
        %v2829 = vpack.c.bf16 %v2815, %v2813
        %v2830 = vpack.c.bf16 %v2816, %v2814
        %v2831 = vpack.c.bf16 %v2819, %v2817
        %v2832 = vpack.c.bf16 %v2820, %v2818
        %v2833 = vpack.c.bf16 %v2823, %v2821
        %v2834 = vpack.c.bf16 %v2824, %v2822
        %v2835 = vpack.c.bf16 %v2827, %v2825
        %v2836 = vpack.c.bf16 %v2828, %v2826
        %v2845 = vunpack.c.l.b16 %v2829
        %v2846 = vunpack.c.l.b16 %v2830
        %v2847 = vunpack.c.h.b16 %v2829
        %v2848 = vunpack.c.h.b16 %v2830
        %v2849 = vunpack.c.l.b16 %v2831
        %v2850 = vunpack.c.l.b16 %v2832
        %v2851 = vunpack.c.h.b16 %v2831
        %v2852 = vunpack.c.h.b16 %v2832
        %v2853 = vunpack.c.l.b16 %v2833
        %v2854 = vunpack.c.l.b16 %v2834
        %v2855 = vunpack.c.h.b16 %v2833
        %v2856 = vunpack.c.h.b16 %v2834
        %v2857 = vunpack.c.l.b16 %v2835
        %v2858 = vunpack.c.l.b16 %v2836
        %v2859 = vunpack.c.h.b16 %v2835
        %v2860 = vunpack.c.h.b16 %v2836
        %v2861 = vpack.c.b16 %v2846, %v2845
        %v2862 = vpack.c.b16 %v2848, %v2847
        %v2863 = vpack.c.b16 %v2850, %v2849
        %v2864 = vpack.c.b16 %v2852, %v2851
        %v2865 = vpack.c.b16 %v2854, %v2853
        %v2866 = vpack.c.b16 %v2856, %v2855
        %v2867 = vpack.c.b16 %v2858, %v2857
        %v2868 = vpack.c.b16 %v2860, %v2859
        %2877 = vst [vmem:[#allocation2 + $0x140] sm:$0xff] %v2861
        %2878 = vst [vmem:[#allocation2 + $0x148] sm:$0xff] %v2862
        %2879 = vst [vmem:[#allocation2 + $0x150] sm:$0xff] %v2863
        %2880 = vst [vmem:[#allocation2 + $0x158] sm:$0xff] %v2864
        %2881 = vst [vmem:[#allocation2 + $0x160] sm:$0xff] %v2865
        %2882 = vst [vmem:[#allocation2 + $0x168] sm:$0xff] %v2866
        %2883 = vst [vmem:[#allocation2 + $0x170] sm:$0xff] %v2867
        %2884 = vst [vmem:[#allocation2 + $0x178] sm:$0xff] %v2868
        %2885 = vrot.lane.b32.xlu0 %v2213, 112
        %v2886 = vpop.permute.xlu0 %2885
        %2887 = vrot.lane.b32.xlu0 %v2215, 112
        %v2888 = vpop.permute.xlu0 %2887
        %2889 = vrot.lane.b32.xlu0 %v2217, 112
        %v2890 = vpop.permute.xlu0 %2889
        %2891 = vrot.lane.b32.xlu0 %v2219, 112
        %v2892 = vpop.permute.xlu0 %2891
        %2893 = vrot.lane.b32.xlu0 %v2221, 112
        %v2894 = vpop.permute.xlu0 %2893
        %2895 = vrot.lane.b32.xlu0 %v2223, 112
        %v2896 = vpop.permute.xlu0 %2895
        %2897 = vrot.lane.b32.xlu0 %v2225, 112
        %v2898 = vpop.permute.xlu0 %2897
        %2899 = vrot.lane.b32.xlu0 %v2227, 112
        %v2900 = vpop.permute.xlu0 %2899
        %2901 = vrot.lane.b32.xlu0 %v2214, 112
        %v2902 = vpop.permute.xlu0 %2901
        %2903 = vrot.lane.b32.xlu0 %v2216, 112
        %v2904 = vpop.permute.xlu0 %2903
        %2905 = vrot.lane.b32.xlu0 %v2218, 112
        %v2906 = vpop.permute.xlu0 %2905
        %2907 = vrot.lane.b32.xlu0 %v2220, 112
        %v2908 = vpop.permute.xlu0 %2907
        %2909 = vrot.lane.b32.xlu0 %v2222, 112
        %v2910 = vpop.permute.xlu0 %2909
        %2911 = vrot.lane.b32.xlu0 %v2224, 112
        %v2912 = vpop.permute.xlu0 %2911
        %2913 = vrot.lane.b32.xlu0 %v2226, 112
        %v2914 = vpop.permute.xlu0 %2913
        %2915 = vrot.lane.b32.xlu0 %v2228, 112
        %v2916 = vpop.permute.xlu0 %2915
        %v2917 = vsel %vm1012, %v2886, %v2902
        %v2918 = vsel %vm1012, %v2888, %v2904
        %v2919 = vsel %vm1012, %v2890, %v2906
        %v2920 = vsel %vm1012, %v2892, %v2908
        %v2921 = vsel %vm1012, %v2894, %v2910
        %v2922 = vsel %vm1012, %v2896, %v2912
        %v2923 = vsel %vm1012, %v2898, %v2914
        %v2924 = vsel %vm1012, %v2900, %v2916
        %v2925 = vsel %vm1012, %v2902, %v2886
        %v2926 = vsel %vm1012, %v2904, %v2888
        %v2927 = vsel %vm1012, %v2906, %v2890
        %v2928 = vsel %vm1012, %v2908, %v2892
        %v2929 = vsel %vm1012, %v2910, %v2894
        %v2930 = vsel %vm1012, %v2912, %v2896
        %v2931 = vsel %vm1012, %v2914, %v2898
        %v2932 = vsel %vm1012, %v2916, %v2900
        %v2933 = vsel %vm1031, %v2213, %v2917
        %v2934 = vsel %vm1032, %v2214, %v2925
        %v2935 = vsel %vm1031, %v2215, %v2918
        %v2936 = vsel %vm1032, %v2216, %v2926
        %v2937 = vsel %vm1031, %v2217, %v2919
        %v2938 = vsel %vm1032, %v2218, %v2927
        %v2939 = vsel %vm1031, %v2219, %v2920
        %v2940 = vsel %vm1032, %v2220, %v2928
        %v2941 = vsel %vm1031, %v2221, %v2921
        %v2942 = vsel %vm1032, %v2222, %v2929
        %v2943 = vsel %vm1031, %v2223, %v2922
        %v2944 = vsel %vm1032, %v2224, %v2930
        %v2945 = vsel %vm1031, %v2225, %v2923
        %v2946 = vsel %vm1032, %v2226, %v2931
        %v2947 = vsel %vm1031, %v2227, %v2924
        %v2948 = vsel %vm1032, %v2228, %v2932
        %2949 = vrot.lane.b32.xlu0 %v2933, 1
        %v2950 = vpop.permute.xlu0 %2949
        %2951 = vrot.lane.b32.xlu0 %v2935, 1
        %v2952 = vpop.permute.xlu0 %2951
        %2953 = vrot.lane.b32.xlu0 %v2937, 1
        %v2954 = vpop.permute.xlu0 %2953
        %2955 = vrot.lane.b32.xlu0 %v2939, 1
        %v2956 = vpop.permute.xlu0 %2955
        %2957 = vrot.lane.b32.xlu0 %v2941, 1
        %v2958 = vpop.permute.xlu0 %2957
        %2959 = vrot.lane.b32.xlu0 %v2943, 1
        %v2960 = vpop.permute.xlu0 %2959
        %2961 = vrot.lane.b32.xlu0 %v2945, 1
        %v2962 = vpop.permute.xlu0 %2961
        %2963 = vrot.lane.b32.xlu0 %v2947, 1
        %v2964 = vpop.permute.xlu0 %2963
        %2965 = vrot.lane.b32.xlu0 %v2934, 1
        %v2966 = vpop.permute.xlu0 %2965
        %2967 = vrot.lane.b32.xlu0 %v2936, 1
        %v2968 = vpop.permute.xlu0 %2967
        %2969 = vrot.lane.b32.xlu0 %v2938, 1
        %v2970 = vpop.permute.xlu0 %2969
        %2971 = vrot.lane.b32.xlu0 %v2940, 1
        %v2972 = vpop.permute.xlu0 %2971
        %2973 = vrot.lane.b32.xlu0 %v2942, 1
        %v2974 = vpop.permute.xlu0 %2973
        %2975 = vrot.lane.b32.xlu0 %v2944, 1
        %v2976 = vpop.permute.xlu0 %2975
        %2977 = vrot.lane.b32.xlu0 %v2946, 1
        %v2978 = vpop.permute.xlu0 %2977
        %2979 = vrot.lane.b32.xlu0 %v2948, 1
        %v2980 = vpop.permute.xlu0 %2979
        %v2981 = vsel %vm410, %v2950, %v2966
        %v2982 = vsel %vm410, %v2952, %v2968
        %v2983 = vsel %vm410, %v2954, %v2970
        %v2984 = vsel %vm410, %v2956, %v2972
        %v2985 = vsel %vm410, %v2958, %v2974
        %v2986 = vsel %vm410, %v2960, %v2976
        %v2987 = vsel %vm410, %v2962, %v2978
        %v2988 = vsel %vm410, %v2964, %v2980
        %v2989 = vsel %vm410, %v2966, %v2950
        %v2990 = vsel %vm410, %v2968, %v2952
        %v2991 = vsel %vm410, %v2970, %v2954
        %v2992 = vsel %vm410, %v2972, %v2956
        %v2993 = vsel %vm410, %v2974, %v2958
        %v2994 = vsel %vm410, %v2976, %v2960
        %v2995 = vsel %vm410, %v2978, %v2962
        %v2996 = vsel %vm410, %v2980, %v2964
        %v2997 = vsel %vm429, %v2933, %v2989
        %v2998 = vsel %vm430, %v2934, %v2981
        %v2999 = vsel %vm429, %v2935, %v2990
        %v3000 = vsel %vm430, %v2936, %v2982
        %v3001 = vsel %vm429, %v2937, %v2991
        %v3002 = vsel %vm430, %v2938, %v2983
        %v3003 = vsel %vm429, %v2939, %v2992
        %v3004 = vsel %vm430, %v2940, %v2984
        %v3005 = vsel %vm429, %v2941, %v2993
        %v3006 = vsel %vm430, %v2942, %v2985
        %v3007 = vsel %vm429, %v2943, %v2994
        %v3008 = vsel %vm430, %v2944, %v2986
        %v3009 = vsel %vm429, %v2945, %v2995
        %v3010 = vsel %vm430, %v2946, %v2987
        %v3011 = vsel %vm429, %v2947, %v2996
        %v3012 = vsel %vm430, %v2948, %v2988
        %v3013 = vpack.c.bf16 %v2999, %v2997
        %v3014 = vpack.c.bf16 %v3000, %v2998
        %v3015 = vpack.c.bf16 %v3003, %v3001
        %v3016 = vpack.c.bf16 %v3004, %v3002
        %v3017 = vpack.c.bf16 %v3007, %v3005
        %v3018 = vpack.c.bf16 %v3008, %v3006
        %v3019 = vpack.c.bf16 %v3011, %v3009
        %v3020 = vpack.c.bf16 %v3012, %v3010
        %v3029 = vunpack.c.l.b16 %v3013
        %v3030 = vunpack.c.l.b16 %v3014
        %v3031 = vunpack.c.h.b16 %v3013
        %v3032 = vunpack.c.h.b16 %v3014
        %v3033 = vunpack.c.l.b16 %v3015
        %v3034 = vunpack.c.l.b16 %v3016
        %v3035 = vunpack.c.h.b16 %v3015
        %v3036 = vunpack.c.h.b16 %v3016
        %v3037 = vunpack.c.l.b16 %v3017
        %v3038 = vunpack.c.l.b16 %v3018
        %v3039 = vunpack.c.h.b16 %v3017
        %v3040 = vunpack.c.h.b16 %v3018
        %v3041 = vunpack.c.l.b16 %v3019
        %v3042 = vunpack.c.l.b16 %v3020
        %v3043 = vunpack.c.h.b16 %v3019
        %v3044 = vunpack.c.h.b16 %v3020
        %v3045 = vpack.c.b16 %v3030, %v3029
        %v3046 = vpack.c.b16 %v3032, %v3031
        %v3047 = vpack.c.b16 %v3034, %v3033
        %v3048 = vpack.c.b16 %v3036, %v3035
        %v3049 = vpack.c.b16 %v3038, %v3037
        %v3050 = vpack.c.b16 %v3040, %v3039
        %v3051 = vpack.c.b16 %v3042, %v3041
        %v3052 = vpack.c.b16 %v3044, %v3043
        %3061 = vst [vmem:[#allocation2 + $0x180] sm:$0xff] %v3045
        %3062 = vst [vmem:[#allocation2 + $0x188] sm:$0xff] %v3046
        %3063 = vst [vmem:[#allocation2 + $0x190] sm:$0xff] %v3047
        %3064 = vst [vmem:[#allocation2 + $0x198] sm:$0xff] %v3048
        %3065 = vst [vmem:[#allocation2 + $0x1a0] sm:$0xff] %v3049
        %3066 = vst [vmem:[#allocation2 + $0x1a8] sm:$0xff] %v3050
        %3067 = vst [vmem:[#allocation2 + $0x1b0] sm:$0xff] %v3051
        %3068 = vst [vmem:[#allocation2 + $0x1b8] sm:$0xff] %v3052
        %v3069 = vpack.c.bf16 %v2935, %v2933
        %v3070 = vpack.c.bf16 %v2936, %v2934
        %v3071 = vpack.c.bf16 %v2939, %v2937
        %v3072 = vpack.c.bf16 %v2940, %v2938
        %v3073 = vpack.c.bf16 %v2943, %v2941
        %v3074 = vpack.c.bf16 %v2944, %v2942
        %v3075 = vpack.c.bf16 %v2947, %v2945
        %v3076 = vpack.c.bf16 %v2948, %v2946
        %v3085 = vunpack.c.l.b16 %v3069
        %v3086 = vunpack.c.l.b16 %v3070
        %v3087 = vunpack.c.h.b16 %v3069
        %v3088 = vunpack.c.h.b16 %v3070
        %v3089 = vunpack.c.l.b16 %v3071
        %v3090 = vunpack.c.l.b16 %v3072
        %v3091 = vunpack.c.h.b16 %v3071
        %v3092 = vunpack.c.h.b16 %v3072
        %v3093 = vunpack.c.l.b16 %v3073
        %v3094 = vunpack.c.l.b16 %v3074
        %v3095 = vunpack.c.h.b16 %v3073
        %v3096 = vunpack.c.h.b16 %v3074
        %v3097 = vunpack.c.l.b16 %v3075
        %v3098 = vunpack.c.l.b16 %v3076
        %v3099 = vunpack.c.h.b16 %v3075
        %v3100 = vunpack.c.h.b16 %v3076
        %v3101 = vpack.c.b16 %v3086, %v3085
        %v3102 = vpack.c.b16 %v3088, %v3087
        %v3103 = vpack.c.b16 %v3090, %v3089
        %v3104 = vpack.c.b16 %v3092, %v3091
        %v3105 = vpack.c.b16 %v3094, %v3093
        %v3106 = vpack.c.b16 %v3096, %v3095
        %v3107 = vpack.c.b16 %v3098, %v3097
        %v3108 = vpack.c.b16 %v3100, %v3099
        %3117 = vst [vmem:[#allocation2 + $0x1c0] sm:$0xff] %v3101
        %3118 = vst [vmem:[#allocation2 + $0x1c8] sm:$0xff] %v3102
        %3119 = vst [vmem:[#allocation2 + $0x1d0] sm:$0xff] %v3103
        %3120 = vst [vmem:[#allocation2 + $0x1d8] sm:$0xff] %v3104
        %3121 = vst [vmem:[#allocation2 + $0x1e0] sm:$0xff] %v3105
        %3122 = vst [vmem:[#allocation2 + $0x1e8] sm:$0xff] %v3106
        %3123 = vst [vmem:[#allocation2 + $0x1f0] sm:$0xff] %v3107
        %3124 = vst [vmem:[#allocation2 + $0x1f8] sm:$0xff] %v3108
        %3125 = vrot.lane.b32.xlu0 %v2933, 127
        %v3126 = vpop.permute.xlu0 %3125
        %3127 = vrot.lane.b32.xlu0 %v2935, 127
        %v3128 = vpop.permute.xlu0 %3127
        %3129 = vrot.lane.b32.xlu0 %v2937, 127
        %v3130 = vpop.permute.xlu0 %3129
        %3131 = vrot.lane.b32.xlu0 %v2939, 127
        %v3132 = vpop.permute.xlu0 %3131
        %3133 = vrot.lane.b32.xlu0 %v2941, 127
        %v3134 = vpop.permute.xlu0 %3133
        %3135 = vrot.lane.b32.xlu0 %v2943, 127
        %v3136 = vpop.permute.xlu0 %3135
        %3137 = vrot.lane.b32.xlu0 %v2945, 127
        %v3138 = vpop.permute.xlu0 %3137
        %3139 = vrot.lane.b32.xlu0 %v2947, 127
        %v3140 = vpop.permute.xlu0 %3139
        %3141 = vrot.lane.b32.xlu0 %v2934, 127
        %v3142 = vpop.permute.xlu0 %3141
        %3143 = vrot.lane.b32.xlu0 %v2936, 127
        %v3144 = vpop.permute.xlu0 %3143
        %3145 = vrot.lane.b32.xlu0 %v2938, 127
        %v3146 = vpop.permute.xlu0 %3145
        %3147 = vrot.lane.b32.xlu0 %v2940, 127
        %v3148 = vpop.permute.xlu0 %3147
        %3149 = vrot.lane.b32.xlu0 %v2942, 127
        %v3150 = vpop.permute.xlu0 %3149
        %3151 = vrot.lane.b32.xlu0 %v2944, 127
        %v3152 = vpop.permute.xlu0 %3151
        %3153 = vrot.lane.b32.xlu0 %v2946, 127
        %v3154 = vpop.permute.xlu0 %3153
        %3155 = vrot.lane.b32.xlu0 %v2948, 127
        %v3156 = vpop.permute.xlu0 %3155
        %v3157 = vsel %vm591, %v3126, %v3142
        %v3158 = vsel %vm591, %v3128, %v3144
        %v3159 = vsel %vm591, %v3130, %v3146
        %v3160 = vsel %vm591, %v3132, %v3148
        %v3161 = vsel %vm591, %v3134, %v3150
        %v3162 = vsel %vm591, %v3136, %v3152
        %v3163 = vsel %vm591, %v3138, %v3154
        %v3164 = vsel %vm591, %v3140, %v3156
        %v3165 = vsel %vm591, %v3142, %v3126
        %v3166 = vsel %vm591, %v3144, %v3128
        %v3167 = vsel %vm591, %v3146, %v3130
        %v3168 = vsel %vm591, %v3148, %v3132
        %v3169 = vsel %vm591, %v3150, %v3134
        %v3170 = vsel %vm591, %v3152, %v3136
        %v3171 = vsel %vm591, %v3154, %v3138
        %v3172 = vsel %vm591, %v3156, %v3140
        %v3173 = vsel %vm610, %v2933, %v3157
        %v3174 = vsel %vm611, %v2934, %v3165
        %v3175 = vsel %vm610, %v2935, %v3158
        %v3176 = vsel %vm611, %v2936, %v3166
        %v3177 = vsel %vm610, %v2937, %v3159
        %v3178 = vsel %vm611, %v2938, %v3167
        %v3179 = vsel %vm610, %v2939, %v3160
        %v3180 = vsel %vm611, %v2940, %v3168
        %v3181 = vsel %vm610, %v2941, %v3161
        %v3182 = vsel %vm611, %v2942, %v3169
        %v3183 = vsel %vm610, %v2943, %v3162
        %v3184 = vsel %vm611, %v2944, %v3170
        %v3185 = vsel %vm610, %v2945, %v3163
        %v3186 = vsel %vm611, %v2946, %v3171
        %v3187 = vsel %vm610, %v2947, %v3164
        %v3188 = vsel %vm611, %v2948, %v3172
        %v3189 = vpack.c.bf16 %v3175, %v3173
        %v3190 = vpack.c.bf16 %v3176, %v3174
        %v3191 = vpack.c.bf16 %v3179, %v3177
        %v3192 = vpack.c.bf16 %v3180, %v3178
        %v3193 = vpack.c.bf16 %v3183, %v3181
        %v3194 = vpack.c.bf16 %v3184, %v3182
        %v3195 = vpack.c.bf16 %v3187, %v3185
        %v3196 = vpack.c.bf16 %v3188, %v3186
        %v3205 = vunpack.c.l.b16 %v3189
        %v3206 = vunpack.c.l.b16 %v3190
        %v3207 = vunpack.c.h.b16 %v3189
        %v3208 = vunpack.c.h.b16 %v3190
        %v3209 = vunpack.c.l.b16 %v3191
        %v3210 = vunpack.c.l.b16 %v3192
        %v3211 = vunpack.c.h.b16 %v3191
        %v3212 = vunpack.c.h.b16 %v3192
        %v3213 = vunpack.c.l.b16 %v3193
        %v3214 = vunpack.c.l.b16 %v3194
        %v3215 = vunpack.c.h.b16 %v3193
        %v3216 = vunpack.c.h.b16 %v3194
        %v3217 = vunpack.c.l.b16 %v3195
        %v3218 = vunpack.c.l.b16 %v3196
        %v3219 = vunpack.c.h.b16 %v3195
        %v3220 = vunpack.c.h.b16 %v3196
        %v3221 = vpack.c.b16 %v3206, %v3205
        %v3222 = vpack.c.b16 %v3208, %v3207
        %v3223 = vpack.c.b16 %v3210, %v3209
        %v3224 = vpack.c.b16 %v3212, %v3211
        %v3225 = vpack.c.b16 %v3214, %v3213
        %v3226 = vpack.c.b16 %v3216, %v3215
        %v3227 = vpack.c.b16 %v3218, %v3217
        %v3228 = vpack.c.b16 %v3220, %v3219
        %3237 = vst [vmem:[#allocation2 + $0x200] sm:$0xff] %v3221
        %3238 = vst [vmem:[#allocation2 + $0x208] sm:$0xff] %v3222
        %3239 = vst [vmem:[#allocation2 + $0x210] sm:$0xff] %v3223
        %3240 = vst [vmem:[#allocation2 + $0x218] sm:$0xff] %v3224
        %3241 = vst [vmem:[#allocation2 + $0x220] sm:$0xff] %v3225
        %3242 = vst [vmem:[#allocation2 + $0x228] sm:$0xff] %v3226
        %3243 = vst [vmem:[#allocation2 + $0x230] sm:$0xff] %v3227
        %3244 = vst [vmem:[#allocation2 + $0x238] sm:$0xff] %v3228
        %v3245 = vld [vmem:[%s3] sm:$0xff]
        %v3246 = vld [vmem:[%s3 + $0x8] sm:$0xff]
        %v3247 = vld [vmem:[%s3 + $0x10] sm:$0xf]
        %v3248 = vld [vmem:[%s3 + $0x14] sm:$0xff]
        %v3249 = vld [vmem:[%s3 + $0x1c] sm:$0xff]
        %v3250 = vld [vmem:[%s3 + $0x24] sm:$0xf]
        %v3251 = vld [vmem:[%s3 + $0x28] sm:$0xff]
        %v3252 = vld [vmem:[%s3 + $0x30] sm:$0xff]
        %v3253 = vld [vmem:[%s3 + $0x38] sm:$0xf]
        %v3254 = vld [vmem:[%s3 + $0x3c] sm:$0xff]
        %v3255 = vld [vmem:[%s3 + $0x44] sm:$0xff]
        %v3256 = vld [vmem:[%s3 + $0x4c] sm:$0xf]
        %v3257 = vld [vmem:[#allocation2] sm:$0xff]
        %v3258 = vld [vmem:[#allocation2 + $0x8] sm:$0xff]
        %v3259 = vld [vmem:[#allocation2 + $0x10] sm:$0xff]
        %v3260 = vld [vmem:[#allocation2 + $0x18] sm:$0xff]
        %v3261 = vld [vmem:[#allocation2 + $0x20] sm:$0xff]
        %v3262 = vld [vmem:[#allocation2 + $0x28] sm:$0xff]
        %v3263 = vld [vmem:[#allocation2 + $0x30] sm:$0xff]
        %v3264 = vld [vmem:[#allocation2 + $0x38] sm:$0xff]
        %v3265 = vld [vmem:[#allocation2 + $0x40] sm:$0xff]
        %v3266 = vld [vmem:[#allocation2 + $0x48] sm:$0xff]
        %v3267 = vld [vmem:[#allocation2 + $0x50] sm:$0xff]
        %v3268 = vld [vmem:[#allocation2 + $0x58] sm:$0xff]
        %v3269 = vld [vmem:[#allocation2 + $0x60] sm:$0xff]
        %v3270 = vld [vmem:[#allocation2 + $0x68] sm:$0xff]
        %v3271 = vld [vmem:[#allocation2 + $0x70] sm:$0xff]
        %v3272 = vld [vmem:[#allocation2 + $0x78] sm:$0xff]
        %v3273 = vld [vmem:[#allocation2 + $0x80] sm:$0xff]
        %v3274 = vld [vmem:[#allocation2 + $0x88] sm:$0xff]
        %v3275 = vld [vmem:[#allocation2 + $0x90] sm:$0xff]
        %v3276 = vld [vmem:[#allocation2 + $0x98] sm:$0xff]
        %v3277 = vld [vmem:[#allocation2 + $0xa0] sm:$0xff]
        %v3278 = vld [vmem:[#allocation2 + $0xa8] sm:$0xff]
        %v3279 = vld [vmem:[#allocation2 + $0xb0] sm:$0xff]
        %v3280 = vld [vmem:[#allocation2 + $0xb8] sm:$0xff]
        %v3281 = vld [vmem:[#allocation2 + $0xc0] sm:$0xff]
        %v3282 = vld [vmem:[#allocation2 + $0xc8] sm:$0xff]
        %v3283 = vld [vmem:[#allocation2 + $0xd0] sm:$0xff]
        %v3284 = vld [vmem:[#allocation2 + $0xd8] sm:$0xff]
        %v3285 = vld [vmem:[#allocation2 + $0xe0] sm:$0xff]
        %v3286 = vld [vmem:[#allocation2 + $0xe8] sm:$0xff]
        %v3287 = vld [vmem:[#allocation2 + $0xf0] sm:$0xff]
        %v3288 = vld [vmem:[#allocation2 + $0xf8] sm:$0xff]
        %v3289 = vld [vmem:[#allocation2 + $0x100] sm:$0xff]
        %v3290 = vld [vmem:[#allocation2 + $0x108] sm:$0xff]
        %v3291 = vld [vmem:[#allocation2 + $0x110] sm:$0xff]
        %v3292 = vld [vmem:[#allocation2 + $0x118] sm:$0xff]
        %v3293 = vld [vmem:[#allocation2 + $0x120] sm:$0xff]
        %v3294 = vld [vmem:[#allocation2 + $0x128] sm:$0xff]
        %v3295 = vld [vmem:[#allocation2 + $0x130] sm:$0xff]
        %v3296 = vld [vmem:[#allocation2 + $0x138] sm:$0xff]
        %v3297 = vld [vmem:[#allocation2 + $0x140] sm:$0xff]
        %v3298 = vld [vmem:[#allocation2 + $0x148] sm:$0xff]
        %v3299 = vld [vmem:[#allocation2 + $0x150] sm:$0xff]
        %v3300 = vld [vmem:[#allocation2 + $0x158] sm:$0xff]
        %v3301 = vld [vmem:[#allocation2 + $0x160] sm:$0xff]
        %v3302 = vld [vmem:[#allocation2 + $0x168] sm:$0xff]
        %v3303 = vld [vmem:[#allocation2 + $0x170] sm:$0xff]
        %v3304 = vld [vmem:[#allocation2 + $0x178] sm:$0xff]
        %v3305 = vld [vmem:[#allocation2 + $0x180] sm:$0xff]
        %v3306 = vld [vmem:[#allocation2 + $0x188] sm:$0xff]
        %v3307 = vld [vmem:[#allocation2 + $0x190] sm:$0xff]
        %v3308 = vld [vmem:[#allocation2 + $0x198] sm:$0xff]
        %v3309 = vld [vmem:[#allocation2 + $0x1a0] sm:$0xff]
        %v3310 = vld [vmem:[#allocation2 + $0x1a8] sm:$0xff]
        %v3311 = vld [vmem:[#allocation2 + $0x1b0] sm:$0xff]
        %v3312 = vld [vmem:[#allocation2 + $0x1b8] sm:$0xff]
        %v3313 = vld [vmem:[#allocation2 + $0x1c0] sm:$0xff]
        %v3314 = vld [vmem:[#allocation2 + $0x1c8] sm:$0xff]
        %v3315 = vld [vmem:[#allocation2 + $0x1d0] sm:$0xff]
        %v3316 = vld [vmem:[#allocation2 + $0x1d8] sm:$0xff]
        %v3317 = vld [vmem:[#allocation2 + $0x1e0] sm:$0xff]
        %v3318 = vld [vmem:[#allocation2 + $0x1e8] sm:$0xff]
        %v3319 = vld [vmem:[#allocation2 + $0x1f0] sm:$0xff]
        %v3320 = vld [vmem:[#allocation2 + $0x1f8] sm:$0xff]
        %v3321 = vld [vmem:[#allocation2 + $0x200] sm:$0xff]
        %v3322 = vld [vmem:[#allocation2 + $0x208] sm:$0xff]
        %v3323 = vld [vmem:[#allocation2 + $0x210] sm:$0xff]
        %v3324 = vld [vmem:[#allocation2 + $0x218] sm:$0xff]
        %v3325 = vld [vmem:[#allocation2 + $0x220] sm:$0xff]
        %v3326 = vld [vmem:[#allocation2 + $0x228] sm:$0xff]
        %v3327 = vld [vmem:[#allocation2 + $0x230] sm:$0xff]
        %v3328 = vld [vmem:[#allocation2 + $0x238] sm:$0xff]
        %v3329 = vld [vmem:[%s4] sm:$0xff]
        %v3330 = vld [vmem:[%s4 + $0x8] sm:$0xff]
        %v3331 = vld [vmem:[%s4 + $0x10] sm:$0xff]
        %v3332 = vld [vmem:[%s4 + $0x18] sm:$0xff]
        %3334 = vset.pattern.permute.xlu0 0
        %3335 = vperm.xlu0 %3334, %v3329
        %v3336 = vpop.permute.xlu0 %3335
        %3339 = vset.pattern.permute.xlu0 0
        %3340 = vperm.xlu0 %3339, %v3330
        %v3341 = vpop.permute.xlu0 %3340
        %3344 = vset.pattern.permute.xlu0 0
        %3345 = vperm.xlu0 %3344, %v3331
        %v3346 = vpop.permute.xlu0 %3345
        %3349 = vset.pattern.permute.xlu0 0
        %3350 = vperm.xlu0 %3349, %v3332
        %v3351 = vpop.permute.xlu0 %3350
        %v3365 = vunpack.c.l.b16 %v3245
        %v3366 = vunpack.c.h.b16 %v3245
        %v3367 = vunpack.c.l.b16 %v3246
        %v3368 = vunpack.c.h.b16 %v3246
        %v3369 = vunpack.c.l.b16 %v3247
        %v3370 = vunpack.c.l.b16 %v3248
        %v3371 = vunpack.c.h.b16 %v3248
        %v3372 = vunpack.c.l.b16 %v3249
        %v3373 = vunpack.c.h.b16 %v3249
        %v3374 = vunpack.c.l.b16 %v3250
        %v3375 = vunpack.c.l.b16 %v3251
        %v3376 = vunpack.c.h.b16 %v3251
        %v3377 = vunpack.c.l.b16 %v3252
        %v3378 = vunpack.c.h.b16 %v3252
        %v3379 = vunpack.c.l.b16 %v3253
        %v3380 = vunpack.c.l.b16 %v3254
        %v3381 = vunpack.c.h.b16 %v3254
        %v3382 = vunpack.c.l.b16 %v3255
        %v3383 = vunpack.c.h.b16 %v3255
        %v3384 = vunpack.c.l.b16 %v3256
        %v3385 = vpack.c.b16 %v3370, %v3365
        %v3386 = vpack.c.b16 %v3371, %v3366
        %v3387 = vpack.c.b16 %v3372, %v3367
        %v3388 = vpack.c.b16 %v3373, %v3368
        %v3389 = vpack.c.b16 %v3374, %v3369
        %v3390 = vpack.c.b16 %v3380, %v3375
        %v3391 = vpack.c.b16 %v3381, %v3376
        %v3392 = vpack.c.b16 %v3382, %v3377
        %v3393 = vpack.c.b16 %v3383, %v3378
        %v3394 = vpack.c.b16 %v3384, %v3379
        %v3475 = vunpack.c.l.b16 %v3257
        %v3476 = vunpack.c.h.b16 %v3257
        %v3477 = vunpack.c.l.b16 %v3258
        %v3478 = vunpack.c.h.b16 %v3258
        %v3479 = vunpack.c.l.b16 %v3259
        %v3480 = vunpack.c.h.b16 %v3259
        %v3481 = vunpack.c.l.b16 %v3260
        %v3482 = vunpack.c.h.b16 %v3260
        %v3483 = vunpack.c.l.b16 %v3261
        %v3484 = vunpack.c.h.b16 %v3261
        %v3485 = vunpack.c.l.b16 %v3262
        %v3486 = vunpack.c.h.b16 %v3262
        %v3487 = vunpack.c.l.b16 %v3263
        %v3488 = vunpack.c.h.b16 %v3263
        %v3489 = vunpack.c.l.b16 %v3264
        %v3490 = vunpack.c.h.b16 %v3264
        %v3491 = vunpack.c.l.b16 %v3265
        %v3492 = vunpack.c.h.b16 %v3265
        %v3493 = vunpack.c.l.b16 %v3266
        %v3494 = vunpack.c.h.b16 %v3266
        %v3495 = vunpack.c.l.b16 %v3267
        %v3496 = vunpack.c.h.b16 %v3267
        %v3497 = vunpack.c.l.b16 %v3268
        %v3498 = vunpack.c.h.b16 %v3268
        %v3499 = vunpack.c.l.b16 %v3269
        %v3500 = vunpack.c.h.b16 %v3269
        %v3501 = vunpack.c.l.b16 %v3270
        %v3502 = vunpack.c.h.b16 %v3270
        %v3503 = vunpack.c.l.b16 %v3271
        %v3504 = vunpack.c.h.b16 %v3271
        %v3505 = vunpack.c.l.b16 %v3272
        %v3506 = vunpack.c.h.b16 %v3272
        %v3507 = vunpack.c.l.b16 %v3273
        %v3508 = vunpack.c.h.b16 %v3273
        %v3509 = vunpack.c.l.b16 %v3274
        %v3510 = vunpack.c.h.b16 %v3274
        %v3511 = vunpack.c.l.b16 %v3275
        %v3512 = vunpack.c.h.b16 %v3275
        %v3513 = vunpack.c.l.b16 %v3276
        %v3514 = vunpack.c.h.b16 %v3276
        %v3515 = vunpack.c.l.b16 %v3277
        %v3516 = vunpack.c.h.b16 %v3277
        %v3517 = vunpack.c.l.b16 %v3278
        %v3518 = vunpack.c.h.b16 %v3278
        %v3519 = vunpack.c.l.b16 %v3279
        %v3520 = vunpack.c.h.b16 %v3279
        %v3521 = vunpack.c.l.b16 %v3280
        %v3522 = vunpack.c.h.b16 %v3280
        %v3523 = vunpack.c.l.b16 %v3281
        %v3524 = vunpack.c.h.b16 %v3281
        %v3525 = vunpack.c.l.b16 %v3282
        %v3526 = vunpack.c.h.b16 %v3282
        %v3527 = vunpack.c.l.b16 %v3283
        %v3528 = vunpack.c.h.b16 %v3283
        %v3529 = vunpack.c.l.b16 %v3284
        %v3530 = vunpack.c.h.b16 %v3284
        %v3531 = vunpack.c.l.b16 %v3285
        %v3532 = vunpack.c.h.b16 %v3285
        %v3533 = vunpack.c.l.b16 %v3286
        %v3534 = vunpack.c.h.b16 %v3286
        %v3535 = vunpack.c.l.b16 %v3287
        %v3536 = vunpack.c.h.b16 %v3287
        %v3537 = vunpack.c.l.b16 %v3288
        %v3538 = vunpack.c.h.b16 %v3288
        %v3539 = vunpack.c.l.b16 %v3289
        %v3540 = vunpack.c.h.b16 %v3289
        %v3541 = vunpack.c.l.b16 %v3290
        %v3542 = vunpack.c.h.b16 %v3290
        %v3543 = vunpack.c.l.b16 %v3291
        %v3544 = vunpack.c.h.b16 %v3291
        %v3545 = vunpack.c.l.b16 %v3292
        %v3546 = vunpack.c.h.b16 %v3292
        %v3547 = vunpack.c.l.b16 %v3293
        %v3548 = vunpack.c.h.b16 %v3293
        %v3549 = vunpack.c.l.b16 %v3294
        %v3550 = vunpack.c.h.b16 %v3294
        %v3551 = vunpack.c.l.b16 %v3295
        %v3552 = vunpack.c.h.b16 %v3295
        %v3553 = vunpack.c.l.b16 %v3296
        %v3554 = vunpack.c.h.b16 %v3296
        %v3555 = vunpack.c.l.b16 %v3297
        %v3556 = vunpack.c.h.b16 %v3297
        %v3557 = vunpack.c.l.b16 %v3298
        %v3558 = vunpack.c.h.b16 %v3298
        %v3559 = vunpack.c.l.b16 %v3299
        %v3560 = vunpack.c.h.b16 %v3299
        %v3561 = vunpack.c.l.b16 %v3300
        %v3562 = vunpack.c.h.b16 %v3300
        %v3563 = vunpack.c.l.b16 %v3301
        %v3564 = vunpack.c.h.b16 %v3301
        %v3565 = vunpack.c.l.b16 %v3302
        %v3566 = vunpack.c.h.b16 %v3302
        %v3567 = vunpack.c.l.b16 %v3303
        %v3568 = vunpack.c.h.b16 %v3303
        %v3569 = vunpack.c.l.b16 %v3304
        %v3570 = vunpack.c.h.b16 %v3304
        %v3571 = vunpack.c.l.b16 %v3305
        %v3572 = vunpack.c.h.b16 %v3305
        %v3573 = vunpack.c.l.b16 %v3306
        %v3574 = vunpack.c.h.b16 %v3306
        %v3575 = vunpack.c.l.b16 %v3307
        %v3576 = vunpack.c.h.b16 %v3307
        %v3577 = vunpack.c.l.b16 %v3308
        %v3578 = vunpack.c.h.b16 %v3308
        %v3579 = vunpack.c.l.b16 %v3309
        %v3580 = vunpack.c.h.b16 %v3309
        %v3581 = vunpack.c.l.b16 %v3310
        %v3582 = vunpack.c.h.b16 %v3310
        %v3583 = vunpack.c.l.b16 %v3311
        %v3584 = vunpack.c.h.b16 %v3311
        %v3585 = vunpack.c.l.b16 %v3312
        %v3586 = vunpack.c.h.b16 %v3312
        %v3587 = vunpack.c.l.b16 %v3313
        %v3588 = vunpack.c.h.b16 %v3313
        %v3589 = vunpack.c.l.b16 %v3314
        %v3590 = vunpack.c.h.b16 %v3314
        %v3591 = vunpack.c.l.b16 %v3315
        %v3592 = vunpack.c.h.b16 %v3315
        %v3593 = vunpack.c.l.b16 %v3316
        %v3594 = vunpack.c.h.b16 %v3316
        %v3595 = vunpack.c.l.b16 %v3317
        %v3596 = vunpack.c.h.b16 %v3317
        %v3597 = vunpack.c.l.b16 %v3318
        %v3598 = vunpack.c.h.b16 %v3318
        %v3599 = vunpack.c.l.b16 %v3319
        %v3600 = vunpack.c.h.b16 %v3319
        %v3601 = vunpack.c.l.b16 %v3320
        %v3602 = vunpack.c.h.b16 %v3320
        %v3603 = vunpack.c.l.b16 %v3321
        %v3604 = vunpack.c.h.b16 %v3321
        %v3605 = vunpack.c.l.b16 %v3322
        %v3606 = vunpack.c.h.b16 %v3322
        %v3607 = vunpack.c.l.b16 %v3323
        %v3608 = vunpack.c.h.b16 %v3323
        %v3609 = vunpack.c.l.b16 %v3324
        %v3610 = vunpack.c.h.b16 %v3324
        %v3611 = vunpack.c.l.b16 %v3325
        %v3612 = vunpack.c.h.b16 %v3325
        %v3613 = vunpack.c.l.b16 %v3326
        %v3614 = vunpack.c.h.b16 %v3326
        %v3615 = vunpack.c.l.b16 %v3327
        %v3616 = vunpack.c.h.b16 %v3327
        %v3617 = vunpack.c.l.b16 %v3328
        %v3618 = vunpack.c.h.b16 %v3328
        %v3619 = vpack.c.b16 %v3477, %v3475
        %v3620 = vpack.c.b16 %v3478, %v3476
        %v3621 = vpack.c.b16 %v3481, %v3479
        %v3622 = vpack.c.b16 %v3482, %v3480
        %v3623 = vpack.c.b16 %v3485, %v3483
        %v3624 = vpack.c.b16 %v3486, %v3484
        %v3625 = vpack.c.b16 %v3489, %v3487
        %v3626 = vpack.c.b16 %v3490, %v3488
        %v3627 = vpack.c.b16 %v3493, %v3491
        %v3628 = vpack.c.b16 %v3494, %v3492
        %v3629 = vpack.c.b16 %v3497, %v3495
        %v3630 = vpack.c.b16 %v3498, %v3496
        %v3631 = vpack.c.b16 %v3501, %v3499
        %v3632 = vpack.c.b16 %v3502, %v3500
        %v3633 = vpack.c.b16 %v3505, %v3503
        %v3634 = vpack.c.b16 %v3506, %v3504
        %v3635 = vpack.c.b16 %v3509, %v3507
        %v3636 = vpack.c.b16 %v3510, %v3508
        %v3637 = vpack.c.b16 %v3513, %v3511
        %v3638 = vpack.c.b16 %v3514, %v3512
        %v3639 = vpack.c.b16 %v3517, %v3515
        %v3640 = vpack.c.b16 %v3518, %v3516
        %v3641 = vpack.c.b16 %v3521, %v3519
        %v3642 = vpack.c.b16 %v3522, %v3520
        %v3643 = vpack.c.b16 %v3525, %v3523
        %v3644 = vpack.c.b16 %v3526, %v3524
        %v3645 = vpack.c.b16 %v3529, %v3527
        %v3646 = vpack.c.b16 %v3530, %v3528
        %v3647 = vpack.c.b16 %v3533, %v3531
        %v3648 = vpack.c.b16 %v3534, %v3532
        %v3649 = vpack.c.b16 %v3537, %v3535
        %v3650 = vpack.c.b16 %v3538, %v3536
        %v3651 = vpack.c.b16 %v3541, %v3539
        %v3652 = vpack.c.b16 %v3542, %v3540
        %v3653 = vpack.c.b16 %v3545, %v3543
        %v3654 = vpack.c.b16 %v3546, %v3544
        %v3655 = vpack.c.b16 %v3549, %v3547
        %v3656 = vpack.c.b16 %v3550, %v3548
        %v3657 = vpack.c.b16 %v3553, %v3551
        %v3658 = vpack.c.b16 %v3554, %v3552
        %v3659 = vpack.c.b16 %v3557, %v3555
        %v3660 = vpack.c.b16 %v3558, %v3556
        %v3661 = vpack.c.b16 %v3561, %v3559
        %v3662 = vpack.c.b16 %v3562, %v3560
        %v3663 = vpack.c.b16 %v3565, %v3563
        %v3664 = vpack.c.b16 %v3566, %v3564
        %v3665 = vpack.c.b16 %v3569, %v3567
        %v3666 = vpack.c.b16 %v3570, %v3568
        %v3667 = vpack.c.b16 %v3573, %v3571
        %v3668 = vpack.c.b16 %v3574, %v3572
        %v3669 = vpack.c.b16 %v3577, %v3575
        %v3670 = vpack.c.b16 %v3578, %v3576
        %v3671 = vpack.c.b16 %v3581, %v3579
        %v3672 = vpack.c.b16 %v3582, %v3580
        %v3673 = vpack.c.b16 %v3585, %v3583
        %v3674 = vpack.c.b16 %v3586, %v3584
        %v3675 = vpack.c.b16 %v3589, %v3587
        %v3676 = vpack.c.b16 %v3590, %v3588
        %v3677 = vpack.c.b16 %v3593, %v3591
        %v3678 = vpack.c.b16 %v3594, %v3592
        %v3679 = vpack.c.b16 %v3597, %v3595
        %v3680 = vpack.c.b16 %v3598, %v3596
        %v3681 = vpack.c.b16 %v3601, %v3599
        %v3682 = vpack.c.b16 %v3602, %v3600
        %v3683 = vpack.c.b16 %v3605, %v3603
        %v3684 = vpack.c.b16 %v3606, %v3604
        %v3685 = vpack.c.b16 %v3609, %v3607
        %v3686 = vpack.c.b16 %v3610, %v3608
        %v3687 = vpack.c.b16 %v3613, %v3611
        %v3688 = vpack.c.b16 %v3614, %v3612
        %v3689 = vpack.c.b16 %v3617, %v3615
        %v3690 = vpack.c.b16 %v3618, %v3616
        %v3764 = vsel %vm1949, %v3389, 0
        %v3767 = vsel %vm1949, %v3394, 0
        %3769 = vmatprep.subr.bf16.mxu0 %v3634
        %3770 = vmatpush1.bf16.msra.mxu0 %v3633
        %3771 = vmatprep.subr.bf16.mxu0 %v3632
        %3772 = vmatpush1.bf16.msra.mxu0 %v3631
        %3773 = vmatprep.subr.bf16.mxu0 %v3630
        %3774 = vmatpush1.bf16.msra.mxu0 %v3629
        %3775 = vmatprep.subr.bf16.mxu0 %v3628
        %3776 = vmatpush1.bf16.msra.mxu0 %v3627
        %3777 = vmatprep.subr.bf16.mxu0 %v3626
        %3778 = vmatpush1.bf16.msra.mxu0 %v3625
        %3779 = vmatprep.subr.bf16.mxu0 %v3624
        %3780 = vmatpush1.bf16.msra.mxu0 %v3623
        %3781 = vmatprep.subr.bf16.mxu0 %v3622
        %3782 = vmatpush1.bf16.msra.mxu0 %v3621
        %3783 = vmatprep.subr.bf16.mxu0 %v3620
        %3784 = vmatpush1.bf16.msra.mxu0 %v3619
        %3785 = vmatprep.subr.bf16.mxu0 %v3650
        %3786 = vmatpush2.bf16.msra.mxu0 %v3649
        %3787 = vmatprep.subr.bf16.mxu0 %v3648
        %3788 = vmatpush2.bf16.msra.mxu0 %v3647
        %3789 = vmatprep.subr.bf16.mxu0 %v3646
        %3790 = vmatpush2.bf16.msra.mxu0 %v3645
        %3791 = vmatprep.subr.bf16.mxu0 %v3644
        %3792 = vmatpush2.bf16.msra.mxu0 %v3643
        %3793 = vmatprep.subr.bf16.mxu0 %v3642
        %3794 = vmatpush2.bf16.msra.mxu0 %v3641
        %3795 = vmatprep.subr.bf16.mxu0 %v3640
        %3796 = vmatpush2.bf16.msra.mxu0 %v3639
        %3797 = vmatprep.subr.bf16.mxu0 %v3638
        %3798 = vmatpush2.bf16.msra.mxu0 %v3637
        %3799 = vmatprep.subr.bf16.mxu0 %v3636
        %3800 = vmatpush2.bf16.msra.mxu0 %v3635
        %3801 = vmatprep.mubr.bf16.mxu0 %v3386
        %3802 = vmatmul.mubr.bf16.gmra.mxu0 %v3385
        %v3803 = vpop.f32.mrf.mxu0
        %v3804 = vadd.f32 %v3336, %v3803
        %v3805 = vpop.f32.mrf.mxu0
        %v3806 = vadd.f32 %v3336, %v3805
        %v3807 = vpop.f32.mrf.mxu0
        %v3808 = vadd.f32 %v3341, %v3807
        %v3809 = vpop.f32.mrf.mxu0
        %v3810 = vadd.f32 %v3341, %v3809
        %3811 = vmatprep.mubr.bf16.mxu0 %v3391
        %3812 = vmatmul.mubr.bf16.gmra.mxu0 %v3390
        %v3813 = vpop.f32.mrf.mxu0
        %v3814 = vadd.f32 %v3346, %v3813
        %v3815 = vpop.f32.mrf.mxu0
        %v3816 = vadd.f32 %v3346, %v3815
        %v3817 = vpop.f32.mrf.mxu0
        %v3818 = vadd.f32 %v3351, %v3817
        %v3819 = vpop.f32.mrf.mxu0
        %v3820 = vadd.f32 %v3351, %v3819
        %3821 = vdwg.mxu0
        %3822 = vmatprep.subr.bf16.mxu0 %v3666
        %3823 = vmatpush1.bf16.msra.mxu0 %v3665
        %3824 = vmatprep.subr.bf16.mxu0 %v3664
        %3825 = vmatpush1.bf16.msra.mxu0 %v3663
        %3826 = vmatprep.subr.bf16.mxu0 %v3662
        %3827 = vmatpush1.bf16.msra.mxu0 %v3661
        %3828 = vmatprep.subr.bf16.mxu0 %v3660
        %3829 = vmatpush1.bf16.msra.mxu0 %v3659
        %3830 = vmatprep.subr.bf16.mxu0 %v3658
        %3831 = vmatpush1.bf16.msra.mxu0 %v3657
        %3832 = vmatprep.subr.bf16.mxu0 %v3656
        %3833 = vmatpush1.bf16.msra.mxu0 %v3655
        %3834 = vmatprep.subr.bf16.mxu0 %v3654
        %3835 = vmatpush1.bf16.msra.mxu0 %v3653
        %3836 = vmatprep.subr.bf16.mxu0 %v3652
        %3837 = vmatpush1.bf16.msra.mxu0 %v3651
        %3838 = vmatprep.subr.bf16.mxu0 %v3682
        %3839 = vmatpush2.bf16.msra.mxu0 %v3681
        %3840 = vmatprep.subr.bf16.mxu0 %v3680
        %3841 = vmatpush2.bf16.msra.mxu0 %v3679
        %3842 = vmatprep.subr.bf16.mxu0 %v3678
        %3843 = vmatpush2.bf16.msra.mxu0 %v3677
        %3844 = vmatprep.subr.bf16.mxu0 %v3676
        %3845 = vmatpush2.bf16.msra.mxu0 %v3675
        %3846 = vmatprep.subr.bf16.mxu0 %v3674
        %3847 = vmatpush2.bf16.msra.mxu0 %v3673
        %3848 = vmatprep.subr.bf16.mxu0 %v3672
        %3849 = vmatpush2.bf16.msra.mxu0 %v3671
        %3850 = vmatprep.subr.bf16.mxu0 %v3670
        %3851 = vmatpush2.bf16.msra.mxu0 %v3669
        %3852 = vmatprep.subr.bf16.mxu0 %v3668
        %3853 = vmatpush2.bf16.msra.mxu0 %v3667
        %3854 = vmatprep.mubr.bf16.mxu0 %v3388
        %3855 = vmatmul.mubr.bf16.gmra.mxu0 %v3387
        %v3856 = vpop.f32.mrf.mxu0
        %v3857 = vadd.f32 %v3804, %v3856
        %v3858 = vpop.f32.mrf.mxu0
        %v3859 = vadd.f32 %v3806, %v3858
        %v3860 = vpop.f32.mrf.mxu0
        %v3861 = vadd.f32 %v3808, %v3860
        %v3862 = vpop.f32.mrf.mxu0
        %v3863 = vadd.f32 %v3810, %v3862
        %3864 = vmatprep.mubr.bf16.mxu0 %v3393
        %3865 = vmatmul.mubr.bf16.gmra.mxu0 %v3392
        %v3866 = vpop.f32.mrf.mxu0
        %v3867 = vadd.f32 %v3814, %v3866
        %v3868 = vpop.f32.mrf.mxu0
        %v3869 = vadd.f32 %v3816, %v3868
        %v3870 = vpop.f32.mrf.mxu0
        %v3871 = vadd.f32 %v3818, %v3870
        %v3872 = vpop.f32.mrf.mxu0
        %v3873 = vadd.f32 %v3820, %v3872
        %3874 = vdwg.mxu0
        %3875 = vmatprep.subr.bf16.mxu0 0
        %3876 = vmatpush1.bf16.msra.mxu0 0
        %3877 = vmatprep.subr.bf16.mxu0 0
        %3878 = vmatpush1.bf16.msra.mxu0 0
        %3879 = vmatprep.subr.bf16.mxu0 0
        %3880 = vmatpush1.bf16.msra.mxu0 0
        %3881 = vmatprep.subr.bf16.mxu0 0
        %3882 = vmatpush1.bf16.msra.mxu0 0
        %3883 = vmatprep.subr.bf16.mxu0 %v3690
        %3884 = vmatpush1.bf16.msra.mxu0 %v3689
        %3885 = vmatprep.subr.bf16.mxu0 %v3688
        %3886 = vmatpush1.bf16.msra.mxu0 %v3687
        %3887 = vmatprep.subr.bf16.mxu0 %v3686
        %3888 = vmatpush1.bf16.msra.mxu0 %v3685
        %3889 = vmatprep.subr.bf16.mxu0 %v3684
        %3890 = vmatpush1.bf16.msra.mxu0 %v3683
        %3891 = vmatprep.subr.bf16.mxu0 0
        %3892 = vmatpush2.bf16.msra.mxu0 0
        %3893 = vmatprep.subr.bf16.mxu0 0
        %3894 = vmatpush2.bf16.msra.mxu0 0
        %3895 = vmatprep.subr.bf16.mxu0 0
        %3896 = vmatpush2.bf16.msra.mxu0 0
        %3897 = vmatprep.subr.bf16.mxu0 0
        %3898 = vmatpush2.bf16.msra.mxu0 0
        %3899 = vmatprep.subr.bf16.mxu0 0
        %3900 = vmatpush2.bf16.msra.mxu0 0
        %3901 = vmatprep.subr.bf16.mxu0 0
        %3902 = vmatpush2.bf16.msra.mxu0 0
        %3903 = vmatprep.subr.bf16.mxu0 0
        %3904 = vmatpush2.bf16.msra.mxu0 0
        %3905 = vmatprep.subr.bf16.mxu0 0
        %3906 = vmatpush2.bf16.msra.mxu0 0
        %3907 = vmatprep.mubr.bf16.mxu0 0
        %3908 = vmatmul.mubr.bf16.gmra.mxu0 %v3764
        %v3909 = vpop.f32.mrf.mxu0
        %v3910 = vadd.f32 %v3857, %v3909
        %v3911 = vpop.f32.mrf.mxu0
        %v3912 = vadd.f32 %v3859, %v3911
        %v3913 = vpop.f32.mrf.mxu0
        %v3914 = vadd.f32 %v3861, %v3913
        %v3915 = vpop.f32.mrf.mxu0
        %v3916 = vadd.f32 %v3863, %v3915
        %3917 = vmatprep.mubr.bf16.mxu0 0
        %3918 = vmatmul.mubr.bf16.gmra.mxu0 %v3767
        %v3919 = vpop.f32.mrf.mxu0
        %v3920 = vadd.f32 %v3867, %v3919
        %v3921 = vpop.f32.mrf.mxu0
        %v3922 = vadd.f32 %v3869, %v3921
        %v3923 = vpop.f32.mrf.mxu0
        %v3924 = vadd.f32 %v3871, %v3923
        %v3925 = vpop.f32.mrf.mxu0
        %v3926 = vadd.f32 %v3873, %v3925
        %3927 = vdwg.mxu0
        %v3928 = vmax.f32 %v3910, 0.0
        %v3929 = vmax.f32 %v3912, 0.0
        %v3930 = vmax.f32 %v3914, 0.0
        %v3931 = vmax.f32 %v3916, 0.0
        %v3932 = vmax.f32 %v3920, 0.0
        %v3933 = vmax.f32 %v3922, 0.0
        %v3934 = vmax.f32 %v3924, 0.0
        %v3935 = vmax.f32 %v3926, 0.0
        %3936 = vst [vmem:[%s257] sm:$0xff] %v3928
        %3937 = vst [vmem:[%s257 + $0x8] sm:$0xff] %v3929
        %3938 = vst [vmem:[%s257 + $0x10] sm:$0xff] %v3930
        %3939 = vst [vmem:[%s257 + $0x18] sm:$0xff] %v3931
        %3940 = vst [vmem:[%s257 + $0x20] sm:$0xff] %v3932
        %3941 = vst [vmem:[%s257 + $0x28] sm:$0xff] %v3933
        %3942 = vst [vmem:[%s257 + $0x30] sm:$0xff] %v3934
        %3943 = vst [vmem:[%s257 + $0x38] sm:$0xff] %v3935
        %s3944 = sand.u32 %s141, 1
        %s3945 = scalar_lea.sflag [#allocation6], %s3944
        %s3946 = sand.u32 %s141, 1
        %s3947 = smul.addr %s3946, 64
        %s3948 = scalar_lea.vmem [#allocation9], %s3947
        // Predicated region
        $region49: #{tpu_custom_call.1} parent=39 // pred_check
          %p3949 = pneg %p151
        $region50: #{tpu_custom_call.1} parent=39 // pred_check_branch
          %3951 = sbr.rel (%p3949) target = $region52
        $region51: #{tpu_custom_call.1} parent=39 // pred_region
          %s3953 = ssub.s32 1024, 1024
          %3954 = vsyncadd %s3945, %s3953
          %s3955 = smul.addr %s23, 8
          %s3956 = smul.addr %s3955, 128
          %s3957 = scalar_lea.hbm %s5, %s3956
          %s3958 = sshll.u32 %s3948, 4
          %s3959 = int_to_ptr.vmem [resolvable:$true] %s3958
          %3964 = dma.vmem_to_hbm [thread:$0]  %s3959, 1024, %s3957, %s3945, 256, 256, 16
        $region52: #{tpu_custom_call.1} parent=39 // pred_fallthru
          _
      $region40: #{tpu_custom_call.1} parent=5 // pred_fallthru
        _
      %p3965 = scmp.le.s32.totalorder 2, %s18
      // Predicated region
      $region53: #{tpu_custom_call.1} parent=5 // pred_check
        %p3966 = pneg %p3965
      $region54: #{tpu_custom_call.1} parent=5 // pred_check_branch
        %3968 = sbr.rel (%p3966) target = $region56
      $region55: #{tpu_custom_call.1} parent=5 // pred_region
        %s3969 = ssub.s32 %s18, 2
        // Predicated region
        $region57: #{tpu_custom_call.1} parent=55 // pred_check
          %p3970 = pneg %p157
        $region58: #{tpu_custom_call.1} parent=55 // pred_check_branch
          %3972 = sbr.rel (%p3970) target = $region60
        $region59: #{tpu_custom_call.1} parent=55 // pred_region
          %s3973 = sand.u32 %s142, 1
          %s3974 = scalar_lea.sflag [#allocation6], %s3973
          %s3975 = sand.u32 %s142, 1
          %s3976 = smul.addr %s3975, 64
          %s3977 = scalar_lea.vmem [#allocation9], %s3976
          %3978 = dma.done %s3974, 1024
        $region60: #{tpu_custom_call.1} parent=55 // pred_fallthru
          _
      $region56: #{tpu_custom_call.1} parent=5 // pred_fallthru
        _
    $region6: #{tpu_custom_call.1} parent=1 // loop_footer
      %s22 = sadd.s32 1, %s18
    $region7: #{tpu_custom_call.1} parent=1 // loop_footer_branch
      %17 = sbr.rel target = $region3
    $region8: #{tpu_custom_call.1} parent=1 // loop_exit
      _
    %3979 = vsyncpa [#allocation5], 1
    %s3980 = scalar_lea.sflag [#allocation5], 1
    %3981 = vsyncpa %s3980, 1
    %3982 = vsyncpa [#allocation8], 1
    %3983 = vsyncpa [#allocation6], 1
    %s3984 = scalar_lea.sflag [#allocation6], 1
    %3985 = vsyncpa %s3984, 1

</llo_original>
